<compile_context>
chip_gen: v7x
topology: tpu7x:2x2x1
jax: 0.10.0
libtpu: 0.0.40
codegen_flags: <defaults>
</compile_context>

<pallas_src>
import math

import numpy as np
import jax
import jax.numpy as jnp
from jax import lax
from jax.experimental import pallas as pl
from jax.experimental.pallas import tpu as pltpu

# ----------------------------- model config ---------------------------------
B, S = 2, 8                      # batch, sequence length
BS = B * S
EMB_DIM = 8                      # every encoder outputs 8 features
FUSION_DIM = 10 * EMB_DIM        # 10 encoded features concatenated -> 80
HIDDEN = 32                      # fusion / transformer hidden dim
FUSION_LAYERS = 2
TF_LAYERS = 2
NUM_HEADS = 4
HEAD_DIM = HIDDEN // NUM_HEADS   # 8
FF_DIM = HIDDEN * 4              # 128
HEAD_HIDDEN = 16                 # prediction_head hidden_dims = [32, 16]
OUT_DIM = 1
OUT_PAD = 128                    # lane-dense padded output width
LN_EPS = 1e-5
NEG_INF = -1e30
SCALE = 1.0 / math.sqrt(HEAD_DIM)

assert S & (S - 1) == 0, "in-kernel block-diag mask uses a shift; S must be 2^k"
SEQ_SHIFT = int(math.log2(S))

# feature bookkeeping (sorted-key concat order of the PyTorch forward)
SORTED_KEYS = sorted(['media_type', 'drug_name', 'carbon_source', 'nitrogen_source',
                      'temperature', 'pre_culture_time', 'pre_culture_od600',
                      'drug_culture_time', 'concentration', 'motif_features'])
SEG = {k: EMB_DIM * i for i, k in enumerate(SORTED_KEYS)}   # lane offset in fused vec

CAT_FEATS = (('media_type', 5), ('drug_name', 10),
             ('carbon_source', 6), ('nitrogen_source', 6))
CAT_OFFSETS = []
_o = 0
for _, _n in CAT_FEATS:
    CAT_OFFSETS.append(_o)
    _o += _n
CAT_TOTAL = _o                   # 27 packed embedding rows
CAT_ONEHOT = 32                  # padded one-hot width

CONT_FEATS = (('temperature', 1), ('pre_culture_time', 1), ('pre_culture_od600', 1),
              ('drug_culture_time', 1), ('concentration', 1), ('motif_features', 4))
CONT_TOTAL = sum(n for _, n in CONT_FEATS)   # 9
CONT_WIDTH = 16                              # padded kernel input width


# ---------------- single lane-dense packed-parameter layout ------------------
def _build_layout():
    """name -> (row0, nrows, col0, ncols) inside one [ROWS, 128] f32 slab."""
    L = {}
    # Block A (rows 0..127): four lane-packed 32-wide column groups
    L['fus0_w'] = (0, 128, 0, 32)      # [80,32] real, zero-padded to 128 rows
    L['tf0_wf2'] = (0, 128, 32, 32)
    L['tf1_wf2'] = (0, 128, 64, 32)
    L['head_w1'] = (0, 32, 96, 16)
    L['fus1_w'] = (32, 32, 96, 32)
    r = 128
    for l in range(TF_LAYERS):         # fused QKV(+O) blocks: wq|wk|wv|wo
        L[f'tf{l}_wqkvo'] = (r, 32, 0, 128)
        L[f'tf{l}_wq'] = (r, 32, 0, 32)
        L[f'tf{l}_wk'] = (r, 32, 32, 32)
        L[f'tf{l}_wv'] = (r, 32, 64, 32)
        L[f'tf{l}_wo'] = (r, 32, 96, 32)
        r += 32
    for l in range(TF_LAYERS):
        L[f'tf{l}_wf1'] = (r, 32, 0, 128)
        r += 32
    L['head_wout'] = (r, HEAD_HIDDEN, 0, 128)   # only column 0 is real
    r += HEAD_HIDDEN
    L['enc_wemb'] = (r, CAT_ONEHOT, 0, 128)     # packed embedding tables
    r += CAT_ONEHOT
    L['enc_wcont'] = (r, CONT_WIDTH, 0, 128)    # packed 1->8 / 4->8 linears
    r += CONT_WIDTH
    # 128-wide single-row vectors
    row128 = (['enc_b'] + [f'tf{l}_bqkvo' for l in range(TF_LAYERS)]
              + [f'tf{l}_bf1' for l in range(TF_LAYERS)] + ['head_bout'])
    for nm in row128:
        L[nm] = (r, 1, 0, 128)
        r += 1
    for l in range(TF_LAYERS):                  # read-only view of bo lanes
        L[f'tf{l}_bo'] = (L[f'tf{l}_bqkvo'][0], 1, 96, 32)
    # narrow gains/biases, four per 128-lane row
    small = []
    for l in range(FUSION_LAYERS):
        small += [(f'fus{l}_b', 32), (f'fus{l}_g', 32), (f'fus{l}_be', 32)]
    for l in range(TF_LAYERS):
        small += [(f'tf{l}_g1', 32), (f'tf{l}_be1', 32), (f'tf{l}_bf2', 32),
                  (f'tf{l}_g2', 32), (f'tf{l}_be2', 32)]
    small += [('head_b1', 16), ('head_g', 16), ('head_be', 16)]
    slot = 0
    for nm, w in small:
        L[nm] = (r, 1, 32 * slot, w)
        slot += 1
        if slot == 4:
            slot = 0
            r += 1
    if slot:
        r += 1
    rows = ((r + 7) // 8) * 8
    return L, rows


LAYOUT, ROWS = _build_layout()


# ---------------- shared math helpers ----------------------------------------
def _gelu_tanh(x):
    # TODO(synk): PyTorch nn.GELU() is erf-exact; tanh-approx used here (erf
    # has no guaranteed Mosaic lowering). Reference below uses the same approx.
    c = math.sqrt(2.0 / math.pi)
    return 0.5 * x * (1.0 + jnp.tanh(c * (x + 0.044715 * x * x * x)))


def _layernorm(x, g, b):
    # one-pass moments: var = E[x^2] - mu^2 (halves the XLU reduction chain)
    mu = jnp.mean(x, axis=-1, keepdims=True)
    ms = jnp.mean(x * x, axis=-1, keepdims=True)
    var = ms - mu * mu
    return (x - mu) * lax.rsqrt(var + LN_EPS) * g + b


# ---------------- Pallas kernel -----------------------------------------------
def yeast_kernel(idx_ref, cont_ref, w_ref, out_ref):
    def p(name):
        r0, nr, c0, nc = LAYOUT[name]
        return w_ref[r0:r0 + nr, c0:c0 + nc]

    def mm(a, b):
        return jnp.dot(a, b, preferred_element_type=jnp.float32)

    # ---- in-kernel feature encoding -----------------------------------------
    idx = idx_ref[...]                                       # [BS, 4] int32
    col = lax.broadcasted_iota(jnp.int32, (BS, CAT_ONEHOT), 1)
    oh = None
    for f in range(len(CAT_FEATS)):
        hot = (col == (idx[:, f:f + 1] + CAT_OFFSETS[f])).astype(jnp.float32)
        oh = hot if oh is None else oh + hot                 # [BS, 32] multi-hot
    fused = (mm(oh, p('enc_wemb'))                           # embedding lookups
             + mm(cont_ref[...], p('enc_wcont'))             # 1->8 / 4->8 linears
             + p('enc_b'))                                   # [BS,128], lanes 80: zero

    # ---- block-diagonal attention mask, built in-kernel ----------------------
    ri = lax.broadcasted_iota(jnp.int32, (BS, BS), 0)
    ci = lax.broadcasted_iota(jnp.int32, (BS, BS), 1)
    same_seq = jnp.right_shift(ri, SEQ_SHIFT) == jnp.right_shift(ci, SEQ_SHIFT)
    bmask = jnp.where(same_seq, jnp.float32(0.0), jnp.float32(NEG_INF))

    # ---- FeatureFusion: (Linear -> LayerNorm -> GELU -> Dropout) x 2 ---------
    h = mm(fused, p('fus0_w')) + p('fus0_b')                 # 128-contraction, zero-padded
    h = _gelu_tanh(_layernorm(h, p('fus0_g'), p('fus0_be')))
    h = mm(h, p('fus1_w')) + p('fus1_b')
    h = _gelu_tanh(_layernorm(h, p('fus1_g'), p('fus1_be')))

    # ---- TransformerEncoder (post-LN, batch_first, activation='relu') --------
    for l in range(TF_LAYERS):
        # fused projection: lanes 0:32 = q (scale pre-baked), 32:64 = k, 64:96 = v
        qkvo = mm(h, p(f'tf{l}_wqkvo')) + p(f'tf{l}_bqkvo')  # [BS, 128]
        heads = []
        for hi in range(NUM_HEADS):
            c = hi * HEAD_DIM
            qh = qkvo[:, c:c + HEAD_DIM]
            kh = qkvo[:, HIDDEN + c:HIDDEN + c + HEAD_DIM]
            vh = qkvo[:, 2 * HIDDEN + c:2 * HIDDEN + c + HEAD_DIM]
            s = lax.dot_general(qh, kh, (((1,), (1,)), ((), ())),
                                preferred_element_type=jnp.float32) + bmask
            m = jnp.max(s, axis=-1, keepdims=True)
            e = jnp.exp(s - m)
            denom = jnp.sum(e, axis=-1, keepdims=True)
            pr = e * pl.reciprocal(denom, approx=False)
            heads.append(mm(pr, vh))                          # [BS, HEAD_DIM]
        attn = jnp.concatenate(heads, axis=-1)                # [BS, HIDDEN]
        attn = mm(attn, p(f'tf{l}_wo')) + p(f'tf{l}_bo')      # single W_O matmul
        h = _layernorm(h + attn, p(f'tf{l}_g1'), p(f'tf{l}_be1'))
        ff = mm(h, p(f'tf{l}_wf1')) + p(f'tf{l}_bf1')
        ff = mm(jnp.maximum(ff, 0.0), p(f'tf{l}_wf2')) + p(f'tf{l}_bf2')
        h = _layernorm(h + ff, p(f'tf{l}_g2'), p(f'tf{l}_be2'))

    # ---- PredictionHead: Linear -> LN -> ReLU -> Dropout -> Linear -----------
    h1 = mm(h, p('head_w1')) + p('head_b1')                   # [BS, 16]
    h1 = jnp.maximum(_layernorm(h1, p('head_g'), p('head_be')), 0.0)
    # lane-dense [BS, 128] store; only column 0 is the real prediction
    out_ref[...] = mm(h1, p('head_wout')) + p('head_bout')


def yeast_forward_pallas(idx, cont, w_slab):
    vmem = pl.BlockSpec(memory_space=pltpu.MemorySpace.VMEM)
    out = pl.pallas_call(
        yeast_kernel,
        out_shape=jax.ShapeDtypeStruct((BS, OUT_PAD), jnp.float32),
        in_specs=[vmem, vmem, vmem],
        out_specs=vmem,
    )(idx, cont, w_slab)
    # TODO(synk): at realistic batch sizes, add a ("parallel",) sequence grid
    # axis and per-sequence [S,S] attention blocks (uses both v7x TensorCores,
    # respects its 64 MiB VMEM, removes the O(B) masked-score waste).
    return out[:, :OUT_DIM].reshape(B, S, OUT_DIM)


# ---------------- parameter init (deterministic, synthetic) ------------------
def init_params(key):
    ki = iter(jax.random.split(key, 80))

    def nrm(shape, scale=0.1):
        return (scale * jax.random.normal(next(ki), shape)).astype(jnp.float32)

    def emb(n, d, pad_idx):
        t = nrm((n, d))
        return t.at[pad_idx].set(0.0)     # padding_idx row zeroed

    def lin(i, o):
        return nrm((i, o)), nrm((o,), 0.05)

    enc = {
        'media_type': emb(5, EMB_DIM, 0),
        'drug_name': emb(10, EMB_DIM, 0),
        'carbon_source': emb(6, EMB_DIM, 0),
        'nitrogen_source': emb(6, EMB_DIM, 0),
        'temperature': lin(1, EMB_DIM),
        'pre_culture_time': lin(1, EMB_DIM),
        'pre_culture_od600': lin(1, EMB_DIM),
        'drug_culture_time': lin(1, EMB_DIM),
        'concentration': lin(1, EMB_DIM),
        'motif_features': lin(4, EMB_DIM),
    }

    ones = lambda n: jnp.ones((n,), jnp.float32)
    zeros = lambda n: jnp.zeros((n,), jnp.float32)

    fusion = []
    in_dim = FUSION_DIM
    for _ in range(FUSION_LAYERS):
        fusion.append(dict(w=nrm((in_dim, HIDDEN)), b=nrm((HIDDEN,), 0.05),
                           g=ones(HIDDEN), be=zeros(HIDDEN)))
        in_dim = HIDDEN

    tf = []
    for _ in range(TF_LAYERS):
        tf.append(dict(
            wq=nrm((HIDDEN, HIDDEN)), bq=nrm((HIDDEN,), 0.05),
            wk=nrm((HIDDEN, HIDDEN)), bk=nrm((HIDDEN,), 0.05),
            wv=nrm((HIDDEN, HIDDEN)), bv=nrm((HIDDEN,), 0.05),
            wo=nrm((HIDDEN, HIDDEN)), bo=nrm((HIDDEN,), 0.05),
            g1=ones(HIDDEN), be1=zeros(HIDDEN),
            wf1=nrm((HIDDEN, FF_DIM)), bf1=nrm((FF_DIM,), 0.05),
            wf2=nrm((FF_DIM, HIDDEN)), bf2=nrm((HIDDEN,), 0.05),
            g2=ones(HIDDEN), be2=zeros(HIDDEN)))

    head = dict(w1=nrm((HIDDEN, HEAD_HIDDEN)), b1=nrm((HEAD_HIDDEN,), 0.05),
                g=ones(HEAD_HIDDEN), be=zeros(HEAD_HIDDEN),
                wout=nrm((HEAD_HIDDEN, OUT_DIM)), bout=nrm((OUT_DIM,), 0.05))

    # TODO(synk): weights use [in, out] convention; a real PyTorch checkpoint
    # loader must transpose nn.Linear / in_proj_weight when packing.
    return enc, fusion, tf, head


# ---------------- pack everything into ONE [ROWS, 128] f32 slab --------------
def pack_params(enc, fusion, tf, head):
    W = np.zeros((ROWS, 128), np.float32)

    def put(name, arr):
        a = np.asarray(arr, np.float32)
        if a.ndim == 1:
            a = a[None, :]
        r0, _, c0, _ = LAYOUT[name]
        W[r0:r0 + a.shape[0], c0:c0 + a.shape[1]] = a

    # --- encoders: packed embedding tables + packed 1->8 / 4->8 linears ------
    r_emb = LAYOUT['enc_wemb'][0]
    for (name, n), off in zip(CAT_FEATS, CAT_OFFSETS):
        W[r_emb + off:r_emb + off + n, SEG[name]:SEG[name] + EMB_DIM] = \
            np.asarray(enc[name], np.float32)
    r_cont = LAYOUT['enc_wcont'][0]
    r_b = LAYOUT['enc_b'][0]
    row = 0
    for name, n in CONT_FEATS:
        w, b = enc[name]
        W[r_cont + row:r_cont + row + n, SEG[name]:SEG[name] + EMB_DIM] = \
            np.asarray(w, np.float32)
        W[r_b, SEG[name]:SEG[name] + EMB_DIM] = np.asarray(b, np.float32)
        row += n

    # --- feature fusion -------------------------------------------------------
    for l, pz in enumerate(fusion):
        put(f'fus{l}_w', pz['w'])
        put(f'fus{l}_b', pz['b'])
        put(f'fus{l}_g', pz['g'])
        put(f'fus{l}_be', pz['be'])

    # --- transformer (softmax scale baked into wq / bq) -----------------------
    for l, pz in enumerate(tf):
        put(f'tf{l}_wq', np.asarray(pz['wq'], np.float32) * SCALE)
        put(f'tf{l}_wk', pz['wk'])
        put(f'tf{l}_wv', pz['wv'])
        put(f'tf{l}_wo', pz['wo'])
        rb = LAYOUT[f'tf{l}_bqkvo'][0]
        W[rb, 0:32] = np.asarray(pz['bq'], np.float32) * SCALE
        W[rb, 32:64] = np.asarray(pz['bk'], np.float32)
        W[rb, 64:96] = np.asarray(pz['bv'], np.float32)
        W[rb, 96:128] = np.asarray(pz['bo'], np.float32)
        put(f'tf{l}_wf1', pz['wf1'])
        put(f'tf{l}_bf1', pz['bf1'])
        put(f'tf{l}_wf2', pz['wf2'])
        put(f'tf{l}_bf2', pz['bf2'])
        put(f'tf{l}_g1', pz['g1'])
        put(f'tf{l}_be1', pz['be1'])
        put(f'tf{l}_g2', pz['g2'])
        put(f'tf{l}_be2', pz['be2'])

    # --- prediction head ------------------------------------------------------
    put('head_w1', head['w1'])
    put('head_b1', head['b1'])
    put('head_g', head['g'])
    put('head_be', head['be'])
    put('head_wout', head['wout'])
    put('head_bout', head['bout'])
    return jnp.asarray(W)


# ---------------- tiny wrapper: stack raw indices / continuous scalars -------
def prepare_inputs(x):
    idx = jnp.stack([x[k].reshape(BS) for k, _ in CAT_FEATS], axis=-1).astype(jnp.int32)
    cont = jnp.concatenate([x[k].reshape(BS, n).astype(jnp.float32)
                            for k, n in CONT_FEATS], axis=-1)
    cont = jnp.pad(cont, ((0, 0), (0, CONT_WIDTH - CONT_TOTAL)))
    return idx, cont                                          # [BS,4] i32, [BS,16] f32


# ---------------- plain-JAX reference (same math) for validation -------------
def forward_reference(x, enc, fusion, tf, head):
    feats = {}
    for k, _ in CAT_FEATS:
        feats[k] = enc[k][x[k]]                               # [B,S,8]
    for k, _ in CONT_FEATS:
        w, b = enc[k]
        feats[k] = x[k] @ w + b                               # [B,S,8]
    h = jnp.concatenate([feats[k] for k in sorted(feats)], axis=-1)
    h = h.reshape(BS, FUSION_DIM).astype(jnp.float32)
    for pz in fusion:
        h = _gelu_tanh(_layernorm(h @ pz['w'] + pz['b'], pz['g'], pz['be']))
    split = lambda t: t.reshape(B, S, NUM_HEADS, HEAD_DIM).transpose(0, 2, 1, 3)
    for pz in tf:
        q = split(h @ pz['wq'] + pz['bq'])
        k = split(h @ pz['wk'] + pz['bk'])
        v = split(h @ pz['wv'] + pz['bv'])
        s = jnp.einsum('bhqd,bhkd->bhqk', q, k) * SCALE
        pr = jax.nn.softmax(s, axis=-1)
        o = jnp.einsum('bhqk,bhkd->bhqd', pr, v)
        o = o.transpose(0, 2, 1, 3).reshape(BS, HIDDEN)
        attn = o @ pz['wo'] + pz['bo']
        h = _layernorm(h + attn, pz['g1'], pz['be1'])
        ff = jax.nn.relu(h @ pz['wf1'] + pz['bf1']) @ pz['wf2'] + pz['bf2']
        h = _layernorm(h + ff, pz['g2'], pz['be2'])
    h = jax.nn.relu(_layernorm(h @ head['w1'] + head['b1'], head['g'], head['be']))
    return h @ head['wout'] + head['bout']


# ---------------- main --------------------------------------------------------
if __name__ == "__main__":
    key = jax.random.PRNGKey(0)
    kp, kd = jax.random.split(key)
    enc_params, fusion_p, tf_p, head_p = init_params(kp)
    w_slab = pack_params(enc_params, fusion_p, tf_p, head_p)

    dks = jax.random.split(kd, 10)
    x = {
        'media_type':        jax.random.randint(dks[0], (B, S), 0, 5),
        'drug_name':         jax.random.randint(dks[1], (B, S), 0, 10),
        'carbon_source':     jax.random.randint(dks[2], (B, S), 0, 6),
        'nitrogen_source':   jax.random.randint(dks[3], (B, S), 0, 6),
        'temperature':       jax.random.normal(dks[4], (B, S, 1)),
        'pre_culture_time':  jax.random.normal(dks[5], (B, S, 1)),
        'pre_culture_od600': jax.random.normal(dks[6], (B, S, 1)),
        'drug_culture_time': jax.random.normal(dks[7], (B, S, 1)),
        'concentration':     jax.random.normal(dks[8], (B, S, 1)),
        'motif_features':    jax.random.normal(dks[9], (B, S, 4)),
    }

    idx, cont = prepare_inputs(x)
    preds = yeast_forward_pallas(idx, cont, w_slab)           # [B, S, 1]
    preds = jax.block_until_ready(preds)

    ref = forward_reference(x, enc_params, fusion_p, tf_p, head_p)
    ref = ref.reshape(B, S, OUT_DIM)
    assert preds.shape == (B, S, OUT_DIM)
    if not jnp.allclose(preds, ref, atol=1e-3, rtol=1e-3):
        raise AssertionError("Pallas kernel diverged from JAX reference")
    print("KERNEL_OK")
</pallas_src>

<mosaic_0001>
module attributes {stable_mosaic.version = 11 : i64} {
  func.func @yeast_kernel(%arg0: memref<16x4xi32, #tpu.memory_space<vmem>>, %arg1: memref<16x16xf32, #tpu.memory_space<vmem>>, %arg2: memref<336x128xf32, #tpu.memory_space<vmem>>, %arg3: memref<16x128xf32, #tpu.memory_space<vmem>>) attributes {dimension_semantics = [], scalar_prefetch = 0 : i64, scratch_operands = 0 : i64, tpu.core_type = #tpu.core_type<tc>} {
    %c0 = arith.constant 0 : index
    %c0_0 = arith.constant 0 : index
    %0 = vector.load %arg0[%c0, %c0_0] : memref<16x4xi32, #tpu.memory_space<vmem>>, vector<16x4xi32>
    %1 = tpu.iota {dimensions = array<i32: 1>} : vector<16x32xi32>
    %2 = vector.extract_strided_slice %0 {offsets = [0, 0], sizes = [16, 1], strides = [1, 1]} : vector<16x4xi32> to vector<16x1xi32>
    %c0_i32 = arith.constant 0 : i32
    %3 = vector.broadcast %c0_i32 : i32 to vector<16x1xi32>
    %4 = arith.addi %2, %3 : vector<16x1xi32>
    %5 = vector.broadcast %4 : vector<16x1xi32> to vector<16x32xi32>
    %6 = arith.cmpi eq, %1, %5 : vector<16x32xi32>
    %7 = arith.extui %6 : vector<16x32xi1> to vector<16x32xi32>
    %8 = arith.sitofp %7 : vector<16x32xi32> to vector<16x32xf32>
    %9 = vector.extract_strided_slice %0 {offsets = [0, 1], sizes = [16, 1], strides = [1, 1]} : vector<16x4xi32> to vector<16x1xi32>
    %c5_i32 = arith.constant 5 : i32
    %10 = vector.broadcast %c5_i32 : i32 to vector<16x1xi32>
    %11 = arith.addi %9, %10 : vector<16x1xi32>
    %12 = vector.broadcast %11 : vector<16x1xi32> to vector<16x32xi32>
    %13 = arith.cmpi eq, %1, %12 : vector<16x32xi32>
    %14 = arith.extui %13 : vector<16x32xi1> to vector<16x32xi32>
    %15 = arith.sitofp %14 : vector<16x32xi32> to vector<16x32xf32>
    %16 = arith.addf %8, %15 : vector<16x32xf32>
    %17 = vector.extract_strided_slice %0 {offsets = [0, 2], sizes = [16, 1], strides = [1, 1]} : vector<16x4xi32> to vector<16x1xi32>
    %c15_i32 = arith.constant 15 : i32
    %18 = vector.broadcast %c15_i32 : i32 to vector<16x1xi32>
    %19 = arith.addi %17, %18 : vector<16x1xi32>
    %20 = vector.broadcast %19 : vector<16x1xi32> to vector<16x32xi32>
    %21 = arith.cmpi eq, %1, %20 : vector<16x32xi32>
    %22 = arith.extui %21 : vector<16x32xi1> to vector<16x32xi32>
    %23 = arith.sitofp %22 : vector<16x32xi32> to vector<16x32xf32>
    %24 = arith.addf %16, %23 : vector<16x32xf32>
    %25 = vector.extract_strided_slice %0 {offsets = [0, 3], sizes = [16, 1], strides = [1, 1]} : vector<16x4xi32> to vector<16x1xi32>
    %c21_i32 = arith.constant 21 : i32
    %26 = vector.broadcast %c21_i32 : i32 to vector<16x1xi32>
    %27 = arith.addi %25, %26 : vector<16x1xi32>
    %28 = vector.broadcast %27 : vector<16x1xi32> to vector<16x32xi32>
    %29 = arith.cmpi eq, %1, %28 : vector<16x32xi32>
    %30 = arith.extui %29 : vector<16x32xi1> to vector<16x32xi32>
    %31 = arith.sitofp %30 : vector<16x32xi32> to vector<16x32xf32>
    %32 = arith.addf %24, %31 : vector<16x32xf32>
    %c272 = arith.constant 272 : index
    %c0_1 = arith.constant 0 : index
    %33 = vector.load %arg2[%c272, %c0_1] : memref<336x128xf32, #tpu.memory_space<vmem>>, vector<32x128xf32>
    %cst = arith.constant dense<0.000000e+00> : vector<16x128xf32>
    %34 = tpu.matmul %32, %33, %cst {dimension_numbers = #tpu.dot_dimension_numbers<[1], [0], [0], [1], [0, 0, 1, 1], [], []>} : vector<16x32xf32>, vector<32x128xf32>, vector<16x128xf32> -> vector<16x128xf32>
    %c0_2 = arith.constant 0 : index
    %c0_3 = arith.constant 0 : index
    %35 = vector.load %arg1[%c0_2, %c0_3] : memref<16x16xf32, #tpu.memory_space<vmem>>, vector<16x16xf32>
    %c304 = arith.constant 304 : index
    %c0_4 = arith.constant 0 : index
    %36 = vector.load %arg2[%c304, %c0_4] : memref<336x128xf32, #tpu.memory_space<vmem>>, vector<16x128xf32>
    %cst_5 = arith.constant dense<0.000000e+00> : vector<16x128xf32>
    %37 = tpu.matmul %35, %36, %cst_5 {dimension_numbers = #tpu.dot_dimension_numbers<[1], [0], [0], [1], [0, 0, 1, 1], [], []>} : vector<16x16xf32>, vector<16x128xf32>, vector<16x128xf32> -> vector<16x128xf32>
    %38 = arith.addf %34, %37 : vector<16x128xf32>
    %c320 = arith.constant 320 : index
    %c0_6 = arith.constant 0 : index
    %39 = vector.load %arg2[%c320, %c0_6] : memref<336x128xf32, #tpu.memory_space<vmem>>, vector<1x128xf32>
    %40 = vector.broadcast %39 : vector<1x128xf32> to vector<16x128xf32>
    %41 = arith.addf %38, %40 : vector<16x128xf32>
    %42 = tpu.iota {dimensions = array<i32: 0>} : vector<16x16xi32>
    %43 = tpu.iota {dimensions = array<i32: 1>} : vector<16x16xi32>
    %c3_i32 = arith.constant 3 : i32
    %44 = vector.broadcast %c3_i32 : i32 to vector<16x16xi32>
    %45 = arith.shrsi %42, %44 : vector<16x16xi32>
    %c3_i32_7 = arith.constant 3 : i32
    %46 = vector.broadcast %c3_i32_7 : i32 to vector<16x16xi32>
    %47 = arith.shrsi %43, %46 : vector<16x16xi32>
    %48 = arith.cmpi eq, %45, %47 : vector<16x16xi32>
    %cst_8 = arith.constant 0.000000e+00 : f32
    %cst_9 = arith.constant -1.000000e+30 : f32
    %49 = vector.broadcast %cst_8 : f32 to vector<16x16xf32>
    %50 = vector.broadcast %cst_9 : f32 to vector<16x16xf32>
    %51 = arith.select %48, %49, %50 : vector<16x16xi1>, vector<16x16xf32>
    %c0_10 = arith.constant 0 : index
    %c0_11 = arith.constant 0 : index
    %52 = vector.load %arg2[%c0_10, %c0_11] : memref<336x128xf32, #tpu.memory_space<vmem>>, vector<128x32xf32>
    %cst_12 = arith.constant dense<0.000000e+00> : vector<16x32xf32>
    %53 = tpu.matmul %41, %52, %cst_12 {dimension_numbers = #tpu.dot_dimension_numbers<[1], [0], [0], [1], [0, 0, 1, 1], [], []>} : vector<16x128xf32>, vector<128x32xf32>, vector<16x32xf32> -> vector<16x32xf32>
    %c326 = arith.constant 326 : index
    %c0_13 = arith.constant 0 : index
    %54 = vector.load %arg2[%c326, %c0_13] : memref<336x128xf32, #tpu.memory_space<vmem>>, vector<1x32xf32>
    %55 = vector.broadcast %54 : vector<1x32xf32> to vector<16x32xf32>
    %56 = arith.addf %53, %55 : vector<16x32xf32>
    %c326_14 = arith.constant 326 : index
    %c32 = arith.constant 32 : index
    %57 = vector.load %arg2[%c326_14, %c32] : memref<336x128xf32, #tpu.memory_space<vmem>>, vector<1x32xf32>
    %c326_15 = arith.constant 326 : index
    %c64 = arith.constant 64 : index
    %58 = vector.load %arg2[%c326_15, %c64] : memref<336x128xf32, #tpu.memory_space<vmem>>, vector<1x32xf32>
    %cst_16 = arith.constant dense<0.000000e+00> : vector<16xf32>
    %59 = vector.multi_reduction <add>, %56, %cst_16 [1] : vector<16x32xf32> to vector<16xf32>
    %60 = vector.shape_cast %59 : vector<16xf32> to vector<16x1xf32>
    %cst_17 = arith.constant 3.200000e+01 : f32
    %61 = vector.broadcast %cst_17 : f32 to vector<16x1xf32>
    %62 = arith.divf %60, %61 : vector<16x1xf32>
    %63 = arith.mulf %56, %56 : vector<16x32xf32>
    %cst_18 = arith.constant dense<0.000000e+00> : vector<16xf32>
    %64 = vector.multi_reduction <add>, %63, %cst_18 [1] : vector<16x32xf32> to vector<16xf32>
    %65 = vector.shape_cast %64 : vector<16xf32> to vector<16x1xf32>
    %cst_19 = arith.constant 3.200000e+01 : f32
    %66 = vector.broadcast %cst_19 : f32 to vector<16x1xf32>
    %67 = arith.divf %65, %66 : vector<16x1xf32>
    %68 = arith.mulf %62, %62 : vector<16x1xf32>
    %69 = arith.subf %67, %68 : vector<16x1xf32>
    %70 = vector.broadcast %62 : vector<16x1xf32> to vector<16x32xf32>
    %71 = arith.subf %56, %70 : vector<16x32xf32>
    %cst_20 = arith.constant 9.99999974E-6 : f32
    %72 = vector.broadcast %cst_20 : f32 to vector<16x1xf32>
    %73 = arith.addf %69, %72 : vector<16x1xf32>
    %74 = math.rsqrt %73 : vector<16x1xf32>
    %75 = vector.broadcast %74 : vector<16x1xf32> to vector<16x32xf32>
    %76 = arith.mulf %71, %75 : vector<16x32xf32>
    %77 = vector.broadcast %57 : vector<1x32xf32> to vector<16x32xf32>
    %78 = arith.mulf %76, %77 : vector<16x32xf32>
    %79 = vector.broadcast %58 : vector<1x32xf32> to vector<16x32xf32>
    %80 = arith.addf %78, %79 : vector<16x32xf32>
    %cst_21 = arith.constant 5.000000e-01 : f32
    %81 = vector.broadcast %cst_21 : f32 to vector<16x32xf32>
    %82 = arith.mulf %81, %80 : vector<16x32xf32>
    %cst_22 = arith.constant 4.471500e-02 : f32
    %83 = vector.broadcast %cst_22 : f32 to vector<16x32xf32>
    %84 = arith.mulf %83, %80 : vector<16x32xf32>
    %85 = arith.mulf %84, %80 : vector<16x32xf32>
    %86 = arith.mulf %85, %80 : vector<16x32xf32>
    %87 = arith.addf %80, %86 : vector<16x32xf32>
    %cst_23 = arith.constant 0.797884583 : f32
    %88 = vector.broadcast %cst_23 : f32 to vector<16x32xf32>
    %89 = arith.mulf %88, %87 : vector<16x32xf32>
    %90 = math.tanh %89 : vector<16x32xf32>
    %cst_24 = arith.constant 1.000000e+00 : f32
    %91 = vector.broadcast %cst_24 : f32 to vector<16x32xf32>
    %92 = arith.addf %91, %90 : vector<16x32xf32>
    %93 = arith.mulf %82, %92 : vector<16x32xf32>
    %c32_25 = arith.constant 32 : index
    %c96 = arith.constant 96 : index
    %94 = vector.load %arg2[%c32_25, %c96] : memref<336x128xf32, #tpu.memory_space<vmem>>, vector<32x32xf32>
    %cst_26 = arith.constant dense<0.000000e+00> : vector<16x32xf32>
    %95 = tpu.matmul %93, %94, %cst_26 {dimension_numbers = #tpu.dot_dimension_numbers<[1], [0], [0], [1], [0, 0, 1, 1], [], []>} : vector<16x32xf32>, vector<32x32xf32>, vector<16x32xf32> -> vector<16x32xf32>
    %c326_27 = arith.constant 326 : index
    %c96_28 = arith.constant 96 : index
    %96 = vector.load %arg2[%c326_27, %c96_28] : memref<336x128xf32, #tpu.memory_space<vmem>>, vector<1x32xf32>
    %97 = vector.broadcast %96 : vector<1x32xf32> to vector<16x32xf32>
    %98 = arith.addf %95, %97 : vector<16x32xf32>
    %c327 = arith.constant 327 : index
    %c0_29 = arith.constant 0 : index
    %99 = vector.load %arg2[%c327, %c0_29] : memref<336x128xf32, #tpu.memory_space<vmem>>, vector<1x32xf32>
    %c327_30 = arith.constant 327 : index
    %c32_31 = arith.constant 32 : index
    %100 = vector.load %arg2[%c327_30, %c32_31] : memref<336x128xf32, #tpu.memory_space<vmem>>, vector<1x32xf32>
    %cst_32 = arith.constant dense<0.000000e+00> : vector<16xf32>
    %101 = vector.multi_reduction <add>, %98, %cst_32 [1] : vector<16x32xf32> to vector<16xf32>
    %102 = vector.shape_cast %101 : vector<16xf32> to vector<16x1xf32>
    %cst_33 = arith.constant 3.200000e+01 : f32
    %103 = vector.broadcast %cst_33 : f32 to vector<16x1xf32>
    %104 = arith.divf %102, %103 : vector<16x1xf32>
    %105 = arith.mulf %98, %98 : vector<16x32xf32>
    %cst_34 = arith.constant dense<0.000000e+00> : vector<16xf32>
    %106 = vector.multi_reduction <add>, %105, %cst_34 [1] : vector<16x32xf32> to vector<16xf32>
    %107 = vector.shape_cast %106 : vector<16xf32> to vector<16x1xf32>
    %cst_35 = arith.constant 3.200000e+01 : f32
    %108 = vector.broadcast %cst_35 : f32 to vector<16x1xf32>
    %109 = arith.divf %107, %108 : vector<16x1xf32>
    %110 = arith.mulf %104, %104 : vector<16x1xf32>
    %111 = arith.subf %109, %110 : vector<16x1xf32>
    %112 = vector.broadcast %104 : vector<16x1xf32> to vector<16x32xf32>
    %113 = arith.subf %98, %112 : vector<16x32xf32>
    %cst_36 = arith.constant 9.99999974E-6 : f32
    %114 = vector.broadcast %cst_36 : f32 to vector<16x1xf32>
    %115 = arith.addf %111, %114 : vector<16x1xf32>
    %116 = math.rsqrt %115 : vector<16x1xf32>
    %117 = vector.broadcast %116 : vector<16x1xf32> to vector<16x32xf32>
    %118 = arith.mulf %113, %117 : vector<16x32xf32>
    %119 = vector.broadcast %99 : vector<1x32xf32> to vector<16x32xf32>
    %120 = arith.mulf %118, %119 : vector<16x32xf32>
    %121 = vector.broadcast %100 : vector<1x32xf32> to vector<16x32xf32>
    %122 = arith.addf %120, %121 : vector<16x32xf32>
    %cst_37 = arith.constant 5.000000e-01 : f32
    %123 = vector.broadcast %cst_37 : f32 to vector<16x32xf32>
    %124 = arith.mulf %123, %122 : vector<16x32xf32>
    %cst_38 = arith.constant 4.471500e-02 : f32
    %125 = vector.broadcast %cst_38 : f32 to vector<16x32xf32>
    %126 = arith.mulf %125, %122 : vector<16x32xf32>
    %127 = arith.mulf %126, %122 : vector<16x32xf32>
    %128 = arith.mulf %127, %122 : vector<16x32xf32>
    %129 = arith.addf %122, %128 : vector<16x32xf32>
    %cst_39 = arith.constant 0.797884583 : f32
    %130 = vector.broadcast %cst_39 : f32 to vector<16x32xf32>
    %131 = arith.mulf %130, %129 : vector<16x32xf32>
    %132 = math.tanh %131 : vector<16x32xf32>
    %cst_40 = arith.constant 1.000000e+00 : f32
    %133 = vector.broadcast %cst_40 : f32 to vector<16x32xf32>
    %134 = arith.addf %133, %132 : vector<16x32xf32>
    %135 = arith.mulf %124, %134 : vector<16x32xf32>
    %c128 = arith.constant 128 : index
    %c0_41 = arith.constant 0 : index
    %136 = vector.load %arg2[%c128, %c0_41] : memref<336x128xf32, #tpu.memory_space<vmem>>, vector<32x128xf32>
    %cst_42 = arith.constant dense<0.000000e+00> : vector<16x128xf32>
    %137 = tpu.matmul %135, %136, %cst_42 {dimension_numbers = #tpu.dot_dimension_numbers<[1], [0], [0], [1], [0, 0, 1, 1], [], []>} : vector<16x32xf32>, vector<32x128xf32>, vector<16x128xf32> -> vector<16x128xf32>
    %c321 = arith.constant 321 : index
    %c0_43 = arith.constant 0 : index
    %138 = vector.load %arg2[%c321, %c0_43] : memref<336x128xf32, #tpu.memory_space<vmem>>, vector<1x128xf32>
    %139 = vector.broadcast %138 : vector<1x128xf32> to vector<16x128xf32>
    %140 = arith.addf %137, %139 : vector<16x128xf32>
    %141 = vector.extract_strided_slice %140 {offsets = [0, 0], sizes = [16, 8], strides = [1, 1]} : vector<16x128xf32> to vector<16x8xf32>
    %142 = vector.extract_strided_slice %140 {offsets = [0, 32], sizes = [16, 8], strides = [1, 1]} : vector<16x128xf32> to vector<16x8xf32>
    %143 = vector.extract_strided_slice %140 {offsets = [0, 64], sizes = [16, 8], strides = [1, 1]} : vector<16x128xf32> to vector<16x8xf32>
    %cst_44 = arith.constant dense<0.000000e+00> : vector<16x16xf32>
    %144 = tpu.matmul %141, %142, %cst_44 {dimension_numbers = #tpu.dot_dimension_numbers<[1], [1], [0], [0], [0, 0, 1, 0], [], []>} : vector<16x8xf32>, vector<16x8xf32>, vector<16x16xf32> -> vector<16x16xf32>
    %145 = arith.addf %144, %51 : vector<16x16xf32>
    %cst_45 = arith.constant dense<0xFF800000> : vector<16xf32>
    %146 = vector.multi_reduction <maximumf>, %145, %cst_45 [1] : vector<16x16xf32> to vector<16xf32>
    %147 = vector.shape_cast %146 : vector<16xf32> to vector<16x1xf32>
    %148 = vector.broadcast %147 : vector<16x1xf32> to vector<16x16xf32>
    %149 = arith.subf %145, %148 : vector<16x16xf32>
    %150 = math.exp %149 : vector<16x16xf32>
    %cst_46 = arith.constant dense<0.000000e+00> : vector<16xf32>
    %151 = vector.multi_reduction <add>, %150, %cst_46 [1] : vector<16x16xf32> to vector<16xf32>
    %152 = vector.shape_cast %151 : vector<16xf32> to vector<16x1xf32>
    %153 = tpu.reciprocal %152 : vector<16x1xf32> -> vector<16x1xf32>
    %154 = vector.broadcast %153 : vector<16x1xf32> to vector<16x16xf32>
    %155 = arith.mulf %150, %154 : vector<16x16xf32>
    %cst_47 = arith.constant dense<0.000000e+00> : vector<16x8xf32>
    %156 = tpu.matmul %155, %143, %cst_47 {dimension_numbers = #tpu.dot_dimension_numbers<[1], [0], [0], [1], [0, 0, 1, 1], [], []>} : vector<16x16xf32>, vector<16x8xf32>, vector<16x8xf32> -> vector<16x8xf32>
    %157 = vector.extract_strided_slice %140 {offsets = [0, 8], sizes = [16, 8], strides = [1, 1]} : vector<16x128xf32> to vector<16x8xf32>
    %158 = vector.extract_strided_slice %140 {offsets = [0, 40], sizes = [16, 8], strides = [1, 1]} : vector<16x128xf32> to vector<16x8xf32>
    %159 = vector.extract_strided_slice %140 {offsets = [0, 72], sizes = [16, 8], strides = [1, 1]} : vector<16x128xf32> to vector<16x8xf32>
    %cst_48 = arith.constant dense<0.000000e+00> : vector<16x16xf32>
    %160 = tpu.matmul %157, %158, %cst_48 {dimension_numbers = #tpu.dot_dimension_numbers<[1], [1], [0], [0], [0, 0, 1, 0], [], []>} : vector<16x8xf32>, vector<16x8xf32>, vector<16x16xf32> -> vector<16x16xf32>
    %161 = arith.addf %160, %51 : vector<16x16xf32>
    %cst_49 = arith.constant dense<0xFF800000> : vector<16xf32>
    %162 = vector.multi_reduction <maximumf>, %161, %cst_49 [1] : vector<16x16xf32> to vector<16xf32>
    %163 = vector.shape_cast %162 : vector<16xf32> to vector<16x1xf32>
    %164 = vector.broadcast %163 : vector<16x1xf32> to vector<16x16xf32>
    %165 = arith.subf %161, %164 : vector<16x16xf32>
    %166 = math.exp %165 : vector<16x16xf32>
    %cst_50 = arith.constant dense<0.000000e+00> : vector<16xf32>
    %167 = vector.multi_reduction <add>, %166, %cst_50 [1] : vector<16x16xf32> to vector<16xf32>
    %168 = vector.shape_cast %167 : vector<16xf32> to vector<16x1xf32>
    %169 = tpu.reciprocal %168 : vector<16x1xf32> -> vector<16x1xf32>
    %170 = vector.broadcast %169 : vector<16x1xf32> to vector<16x16xf32>
    %171 = arith.mulf %166, %170 : vector<16x16xf32>
    %cst_51 = arith.constant dense<0.000000e+00> : vector<16x8xf32>
    %172 = tpu.matmul %171, %159, %cst_51 {dimension_numbers = #tpu.dot_dimension_numbers<[1], [0], [0], [1], [0, 0, 1, 1], [], []>} : vector<16x16xf32>, vector<16x8xf32>, vector<16x8xf32> -> vector<16x8xf32>
    %173 = vector.extract_strided_slice %140 {offsets = [0, 16], sizes = [16, 8], strides = [1, 1]} : vector<16x128xf32> to vector<16x8xf32>
    %174 = vector.extract_strided_slice %140 {offsets = [0, 48], sizes = [16, 8], strides = [1, 1]} : vector<16x128xf32> to vector<16x8xf32>
    %175 = vector.extract_strided_slice %140 {offsets = [0, 80], sizes = [16, 8], strides = [1, 1]} : vector<16x128xf32> to vector<16x8xf32>
    %cst_52 = arith.constant dense<0.000000e+00> : vector<16x16xf32>
    %176 = tpu.matmul %173, %174, %cst_52 {dimension_numbers = #tpu.dot_dimension_numbers<[1], [1], [0], [0], [0, 0, 1, 0], [], []>} : vector<16x8xf32>, vector<16x8xf32>, vector<16x16xf32> -> vector<16x16xf32>
    %177 = arith.addf %176, %51 : vector<16x16xf32>
    %cst_53 = arith.constant dense<0xFF800000> : vector<16xf32>
    %178 = vector.multi_reduction <maximumf>, %177, %cst_53 [1] : vector<16x16xf32> to vector<16xf32>
    %179 = vector.shape_cast %178 : vector<16xf32> to vector<16x1xf32>
    %180 = vector.broadcast %179 : vector<16x1xf32> to vector<16x16xf32>
    %181 = arith.subf %177, %180 : vector<16x16xf32>
    %182 = math.exp %181 : vector<16x16xf32>
    %cst_54 = arith.constant dense<0.000000e+00> : vector<16xf32>
    %183 = vector.multi_reduction <add>, %182, %cst_54 [1] : vector<16x16xf32> to vector<16xf32>
    %184 = vector.shape_cast %183 : vector<16xf32> to vector<16x1xf32>
    %185 = tpu.reciprocal %184 : vector<16x1xf32> -> vector<16x1xf32>
    %186 = vector.broadcast %185 : vector<16x1xf32> to vector<16x16xf32>
    %187 = arith.mulf %182, %186 : vector<16x16xf32>
    %cst_55 = arith.constant dense<0.000000e+00> : vector<16x8xf32>
    %188 = tpu.matmul %187, %175, %cst_55 {dimension_numbers = #tpu.dot_dimension_numbers<[1], [0], [0], [1], [0, 0, 1, 1], [], []>} : vector<16x16xf32>, vector<16x8xf32>, vector<16x8xf32> -> vector<16x8xf32>
    %189 = vector.extract_strided_slice %140 {offsets = [0, 24], sizes = [16, 8], strides = [1, 1]} : vector<16x128xf32> to vector<16x8xf32>
    %190 = vector.extract_strided_slice %140 {offsets = [0, 56], sizes = [16, 8], strides = [1, 1]} : vector<16x128xf32> to vector<16x8xf32>
    %191 = vector.extract_strided_slice %140 {offsets = [0, 88], sizes = [16, 8], strides = [1, 1]} : vector<16x128xf32> to vector<16x8xf32>
    %cst_56 = arith.constant dense<0.000000e+00> : vector<16x16xf32>
    %192 = tpu.matmul %189, %190, %cst_56 {dimension_numbers = #tpu.dot_dimension_numbers<[1], [1], [0], [0], [0, 0, 1, 0], [], []>} : vector<16x8xf32>, vector<16x8xf32>, vector<16x16xf32> -> vector<16x16xf32>
    %193 = arith.addf %192, %51 : vector<16x16xf32>
    %cst_57 = arith.constant dense<0xFF800000> : vector<16xf32>
    %194 = vector.multi_reduction <maximumf>, %193, %cst_57 [1] : vector<16x16xf32> to vector<16xf32>
    %195 = vector.shape_cast %194 : vector<16xf32> to vector<16x1xf32>
    %196 = vector.broadcast %195 : vector<16x1xf32> to vector<16x16xf32>
    %197 = arith.subf %193, %196 : vector<16x16xf32>
    %198 = math.exp %197 : vector<16x16xf32>
    %cst_58 = arith.constant dense<0.000000e+00> : vector<16xf32>
    %199 = vector.multi_reduction <add>, %198, %cst_58 [1] : vector<16x16xf32> to vector<16xf32>
    %200 = vector.shape_cast %199 : vector<16xf32> to vector<16x1xf32>
    %201 = tpu.reciprocal %200 : vector<16x1xf32> -> vector<16x1xf32>
    %202 = vector.broadcast %201 : vector<16x1xf32> to vector<16x16xf32>
    %203 = arith.mulf %198, %202 : vector<16x16xf32>
    %cst_59 = arith.constant dense<0.000000e+00> : vector<16x8xf32>
    %204 = tpu.matmul %203, %191, %cst_59 {dimension_numbers = #tpu.dot_dimension_numbers<[1], [0], [0], [1], [0, 0, 1, 1], [], []>} : vector<16x16xf32>, vector<16x8xf32>, vector<16x8xf32> -> vector<16x8xf32>
    %205 = tpu.concatenate %156, %172, %188, %204 in 1 : vector<16x8xf32>, vector<16x8xf32>, vector<16x8xf32>, vector<16x8xf32> -> vector<16x32xf32>
    %c128_60 = arith.constant 128 : index
    %c96_61 = arith.constant 96 : index
    %206 = vector.load %arg2[%c128_60, %c96_61] : memref<336x128xf32, #tpu.memory_space<vmem>>, vector<32x32xf32>
    %cst_62 = arith.constant dense<0.000000e+00> : vector<16x32xf32>
    %207 = tpu.matmul %205, %206, %cst_62 {dimension_numbers = #tpu.dot_dimension_numbers<[1], [0], [0], [1], [0, 0, 1, 1], [], []>} : vector<16x32xf32>, vector<32x32xf32>, vector<16x32xf32> -> vector<16x32xf32>
    %c321_63 = arith.constant 321 : index
    %c96_64 = arith.constant 96 : index
    %208 = vector.load %arg2[%c321_63, %c96_64] : memref<336x128xf32, #tpu.memory_space<vmem>>, vector<1x32xf32>
    %209 = vector.broadcast %208 : vector<1x32xf32> to vector<16x32xf32>
    %210 = arith.addf %207, %209 : vector<16x32xf32>
    %211 = arith.addf %135, %210 : vector<16x32xf32>
    %c327_65 = arith.constant 327 : index
    %c64_66 = arith.constant 64 : index
    %212 = vector.load %arg2[%c327_65, %c64_66] : memref<336x128xf32, #tpu.memory_space<vmem>>, vector<1x32xf32>
    %c327_67 = arith.constant 327 : index
    %c96_68 = arith.constant 96 : index
    %213 = vector.load %arg2[%c327_67, %c96_68] : memref<336x128xf32, #tpu.memory_space<vmem>>, vector<1x32xf32>
    %cst_69 = arith.constant dense<0.000000e+00> : vector<16xf32>
    %214 = vector.multi_reduction <add>, %211, %cst_69 [1] : vector<16x32xf32> to vector<16xf32>
    %215 = vector.shape_cast %214 : vector<16xf32> to vector<16x1xf32>
    %cst_70 = arith.constant 3.200000e+01 : f32
    %216 = vector.broadcast %cst_70 : f32 to vector<16x1xf32>
    %217 = arith.divf %215, %216 : vector<16x1xf32>
    %218 = arith.mulf %211, %211 : vector<16x32xf32>
    %cst_71 = arith.constant dense<0.000000e+00> : vector<16xf32>
    %219 = vector.multi_reduction <add>, %218, %cst_71 [1] : vector<16x32xf32> to vector<16xf32>
    %220 = vector.shape_cast %219 : vector<16xf32> to vector<16x1xf32>
    %cst_72 = arith.constant 3.200000e+01 : f32
    %221 = vector.broadcast %cst_72 : f32 to vector<16x1xf32>
    %222 = arith.divf %220, %221 : vector<16x1xf32>
    %223 = arith.mulf %217, %217 : vector<16x1xf32>
    %224 = arith.subf %222, %223 : vector<16x1xf32>
    %225 = vector.broadcast %217 : vector<16x1xf32> to vector<16x32xf32>
    %226 = arith.subf %211, %225 : vector<16x32xf32>
    %cst_73 = arith.constant 9.99999974E-6 : f32
    %227 = vector.broadcast %cst_73 : f32 to vector<16x1xf32>
    %228 = arith.addf %224, %227 : vector<16x1xf32>
    %229 = math.rsqrt %228 : vector<16x1xf32>
    %230 = vector.broadcast %229 : vector<16x1xf32> to vector<16x32xf32>
    %231 = arith.mulf %226, %230 : vector<16x32xf32>
    %232 = vector.broadcast %212 : vector<1x32xf32> to vector<16x32xf32>
    %233 = arith.mulf %231, %232 : vector<16x32xf32>
    %234 = vector.broadcast %213 : vector<1x32xf32> to vector<16x32xf32>
    %235 = arith.addf %233, %234 : vector<16x32xf32>
    %c192 = arith.constant 192 : index
    %c0_74 = arith.constant 0 : index
    %236 = vector.load %arg2[%c192, %c0_74] : memref<336x128xf32, #tpu.memory_space<vmem>>, vector<32x128xf32>
    %cst_75 = arith.constant dense<0.000000e+00> : vector<16x128xf32>
    %237 = tpu.matmul %235, %236, %cst_75 {dimension_numbers = #tpu.dot_dimension_numbers<[1], [0], [0], [1], [0, 0, 1, 1], [], []>} : vector<16x32xf32>, vector<32x128xf32>, vector<16x128xf32> -> vector<16x128xf32>
    %c323 = arith.constant 323 : index
    %c0_76 = arith.constant 0 : index
    %238 = vector.load %arg2[%c323, %c0_76] : memref<336x128xf32, #tpu.memory_space<vmem>>, vector<1x128xf32>
    %239 = vector.broadcast %238 : vector<1x128xf32> to vector<16x128xf32>
    %240 = arith.addf %237, %239 : vector<16x128xf32>
    %cst_77 = arith.constant 0.000000e+00 : f32
    %241 = vector.broadcast %cst_77 : f32 to vector<16x128xf32>
    %242 = arith.maximumf %240, %241 : vector<16x128xf32>
    %c0_78 = arith.constant 0 : index
    %c32_79 = arith.constant 32 : index
    %243 = vector.load %arg2[%c0_78, %c32_79] : memref<336x128xf32, #tpu.memory_space<vmem>>, vector<128x32xf32>
    %cst_80 = arith.constant dense<0.000000e+00> : vector<16x32xf32>
    %244 = tpu.matmul %242, %243, %cst_80 {dimension_numbers = #tpu.dot_dimension_numbers<[1], [0], [0], [1], [0, 0, 1, 1], [], []>} : vector<16x128xf32>, vector<128x32xf32>, vector<16x32xf32> -> vector<16x32xf32>
    %c328 = arith.constant 328 : index
    %c0_81 = arith.constant 0 : index
    %245 = vector.load %arg2[%c328, %c0_81] : memref<336x128xf32, #tpu.memory_space<vmem>>, vector<1x32xf32>
    %246 = vector.broadcast %245 : vector<1x32xf32> to vector<16x32xf32>
    %247 = arith.addf %244, %246 : vector<16x32xf32>
    %248 = arith.addf %235, %247 : vector<16x32xf32>
    %c328_82 = arith.constant 328 : index
    %c32_83 = arith.constant 32 : index
    %249 = vector.load %arg2[%c328_82, %c32_83] : memref<336x128xf32, #tpu.memory_space<vmem>>, vector<1x32xf32>
    %c328_84 = arith.constant 328 : index
    %c64_85 = arith.constant 64 : index
    %250 = vector.load %arg2[%c328_84, %c64_85] : memref<336x128xf32, #tpu.memory_space<vmem>>, vector<1x32xf32>
    %cst_86 = arith.constant dense<0.000000e+00> : vector<16xf32>
    %251 = vector.multi_reduction <add>, %248, %cst_86 [1] : vector<16x32xf32> to vector<16xf32>
    %252 = vector.shape_cast %251 : vector<16xf32> to vector<16x1xf32>
    %cst_87 = arith.constant 3.200000e+01 : f32
    %253 = vector.broadcast %cst_87 : f32 to vector<16x1xf32>
    %254 = arith.divf %252, %253 : vector<16x1xf32>
    %255 = arith.mulf %248, %248 : vector<16x32xf32>
    %cst_88 = arith.constant dense<0.000000e+00> : vector<16xf32>
    %256 = vector.multi_reduction <add>, %255, %cst_88 [1] : vector<16x32xf32> to vector<16xf32>
    %257 = vector.shape_cast %256 : vector<16xf32> to vector<16x1xf32>
    %cst_89 = arith.constant 3.200000e+01 : f32
    %258 = vector.broadcast %cst_89 : f32 to vector<16x1xf32>
    %259 = arith.divf %257, %258 : vector<16x1xf32>
    %260 = arith.mulf %254, %254 : vector<16x1xf32>
    %261 = arith.subf %259, %260 : vector<16x1xf32>
    %262 = vector.broadcast %254 : vector<16x1xf32> to vector<16x32xf32>
    %263 = arith.subf %248, %262 : vector<16x32xf32>
    %cst_90 = arith.constant 9.99999974E-6 : f32
    %264 = vector.broadcast %cst_90 : f32 to vector<16x1xf32>
    %265 = arith.addf %261, %264 : vector<16x1xf32>
    %266 = math.rsqrt %265 : vector<16x1xf32>
    %267 = vector.broadcast %266 : vector<16x1xf32> to vector<16x32xf32>
    %268 = arith.mulf %263, %267 : vector<16x32xf32>
    %269 = vector.broadcast %249 : vector<1x32xf32> to vector<16x32xf32>
    %270 = arith.mulf %268, %269 : vector<16x32xf32>
    %271 = vector.broadcast %250 : vector<1x32xf32> to vector<16x32xf32>
    %272 = arith.addf %270, %271 : vector<16x32xf32>
    %c160 = arith.constant 160 : index
    %c0_91 = arith.constant 0 : index
    %273 = vector.load %arg2[%c160, %c0_91] : memref<336x128xf32, #tpu.memory_space<vmem>>, vector<32x128xf32>
    %cst_92 = arith.constant dense<0.000000e+00> : vector<16x128xf32>
    %274 = tpu.matmul %272, %273, %cst_92 {dimension_numbers = #tpu.dot_dimension_numbers<[1], [0], [0], [1], [0, 0, 1, 1], [], []>} : vector<16x32xf32>, vector<32x128xf32>, vector<16x128xf32> -> vector<16x128xf32>
    %c322 = arith.constant 322 : index
    %c0_93 = arith.constant 0 : index
    %275 = vector.load %arg2[%c322, %c0_93] : memref<336x128xf32, #tpu.memory_space<vmem>>, vector<1x128xf32>
    %276 = vector.broadcast %275 : vector<1x128xf32> to vector<16x128xf32>
    %277 = arith.addf %274, %276 : vector<16x128xf32>
    %278 = vector.extract_strided_slice %277 {offsets = [0, 0], sizes = [16, 8], strides = [1, 1]} : vector<16x128xf32> to vector<16x8xf32>
    %279 = vector.extract_strided_slice %277 {offsets = [0, 32], sizes = [16, 8], strides = [1, 1]} : vector<16x128xf32> to vector<16x8xf32>
    %280 = vector.extract_strided_slice %277 {offsets = [0, 64], sizes = [16, 8], strides = [1, 1]} : vector<16x128xf32> to vector<16x8xf32>
    %cst_94 = arith.constant dense<0.000000e+00> : vector<16x16xf32>
    %281 = tpu.matmul %278, %279, %cst_94 {dimension_numbers = #tpu.dot_dimension_numbers<[1], [1], [0], [0], [0, 0, 1, 0], [], []>} : vector<16x8xf32>, vector<16x8xf32>, vector<16x16xf32> -> vector<16x16xf32>
    %282 = arith.addf %281, %51 : vector<16x16xf32>
    %cst_95 = arith.constant dense<0xFF800000> : vector<16xf32>
    %283 = vector.multi_reduction <maximumf>, %282, %cst_95 [1] : vector<16x16xf32> to vector<16xf32>
    %284 = vector.shape_cast %283 : vector<16xf32> to vector<16x1xf32>
    %285 = vector.broadcast %284 : vector<16x1xf32> to vector<16x16xf32>
    %286 = arith.subf %282, %285 : vector<16x16xf32>
    %287 = math.exp %286 : vector<16x16xf32>
    %cst_96 = arith.constant dense<0.000000e+00> : vector<16xf32>
    %288 = vector.multi_reduction <add>, %287, %cst_96 [1] : vector<16x16xf32> to vector<16xf32>
    %289 = vector.shape_cast %288 : vector<16xf32> to vector<16x1xf32>
    %290 = tpu.reciprocal %289 : vector<16x1xf32> -> vector<16x1xf32>
    %291 = vector.broadcast %290 : vector<16x1xf32> to vector<16x16xf32>
    %292 = arith.mulf %287, %291 : vector<16x16xf32>
    %cst_97 = arith.constant dense<0.000000e+00> : vector<16x8xf32>
    %293 = tpu.matmul %292, %280, %cst_97 {dimension_numbers = #tpu.dot_dimension_numbers<[1], [0], [0], [1], [0, 0, 1, 1], [], []>} : vector<16x16xf32>, vector<16x8xf32>, vector<16x8xf32> -> vector<16x8xf32>
    %294 = vector.extract_strided_slice %277 {offsets = [0, 8], sizes = [16, 8], strides = [1, 1]} : vector<16x128xf32> to vector<16x8xf32>
    %295 = vector.extract_strided_slice %277 {offsets = [0, 40], sizes = [16, 8], strides = [1, 1]} : vector<16x128xf32> to vector<16x8xf32>
    %296 = vector.extract_strided_slice %277 {offsets = [0, 72], sizes = [16, 8], strides = [1, 1]} : vector<16x128xf32> to vector<16x8xf32>
    %cst_98 = arith.constant dense<0.000000e+00> : vector<16x16xf32>
    %297 = tpu.matmul %294, %295, %cst_98 {dimension_numbers = #tpu.dot_dimension_numbers<[1], [1], [0], [0], [0, 0, 1, 0], [], []>} : vector<16x8xf32>, vector<16x8xf32>, vector<16x16xf32> -> vector<16x16xf32>
    %298 = arith.addf %297, %51 : vector<16x16xf32>
    %cst_99 = arith.constant dense<0xFF800000> : vector<16xf32>
    %299 = vector.multi_reduction <maximumf>, %298, %cst_99 [1] : vector<16x16xf32> to vector<16xf32>
    %300 = vector.shape_cast %299 : vector<16xf32> to vector<16x1xf32>
    %301 = vector.broadcast %300 : vector<16x1xf32> to vector<16x16xf32>
    %302 = arith.subf %298, %301 : vector<16x16xf32>
    %303 = math.exp %302 : vector<16x16xf32>
    %cst_100 = arith.constant dense<0.000000e+00> : vector<16xf32>
    %304 = vector.multi_reduction <add>, %303, %cst_100 [1] : vector<16x16xf32> to vector<16xf32>
    %305 = vector.shape_cast %304 : vector<16xf32> to vector<16x1xf32>
    %306 = tpu.reciprocal %305 : vector<16x1xf32> -> vector<16x1xf32>
    %307 = vector.broadcast %306 : vector<16x1xf32> to vector<16x16xf32>
    %308 = arith.mulf %303, %307 : vector<16x16xf32>
    %cst_101 = arith.constant dense<0.000000e+00> : vector<16x8xf32>
    %309 = tpu.matmul %308, %296, %cst_101 {dimension_numbers = #tpu.dot_dimension_numbers<[1], [0], [0], [1], [0, 0, 1, 1], [], []>} : vector<16x16xf32>, vector<16x8xf32>, vector<16x8xf32> -> vector<16x8xf32>
    %310 = vector.extract_strided_slice %277 {offsets = [0, 16], sizes = [16, 8], strides = [1, 1]} : vector<16x128xf32> to vector<16x8xf32>
    %311 = vector.extract_strided_slice %277 {offsets = [0, 48], sizes = [16, 8], strides = [1, 1]} : vector<16x128xf32> to vector<16x8xf32>
    %312 = vector.extract_strided_slice %277 {offsets = [0, 80], sizes = [16, 8], strides = [1, 1]} : vector<16x128xf32> to vector<16x8xf32>
    %cst_102 = arith.constant dense<0.000000e+00> : vector<16x16xf32>
    %313 = tpu.matmul %310, %311, %cst_102 {dimension_numbers = #tpu.dot_dimension_numbers<[1], [1], [0], [0], [0, 0, 1, 0], [], []>} : vector<16x8xf32>, vector<16x8xf32>, vector<16x16xf32> -> vector<16x16xf32>
    %314 = arith.addf %313, %51 : vector<16x16xf32>
    %cst_103 = arith.constant dense<0xFF800000> : vector<16xf32>
    %315 = vector.multi_reduction <maximumf>, %314, %cst_103 [1] : vector<16x16xf32> to vector<16xf32>
    %316 = vector.shape_cast %315 : vector<16xf32> to vector<16x1xf32>
    %317 = vector.broadcast %316 : vector<16x1xf32> to vector<16x16xf32>
    %318 = arith.subf %314, %317 : vector<16x16xf32>
    %319 = math.exp %318 : vector<16x16xf32>
    %cst_104 = arith.constant dense<0.000000e+00> : vector<16xf32>
    %320 = vector.multi_reduction <add>, %319, %cst_104 [1] : vector<16x16xf32> to vector<16xf32>
    %321 = vector.shape_cast %320 : vector<16xf32> to vector<16x1xf32>
    %322 = tpu.reciprocal %321 : vector<16x1xf32> -> vector<16x1xf32>
    %323 = vector.broadcast %322 : vector<16x1xf32> to vector<16x16xf32>
    %324 = arith.mulf %319, %323 : vector<16x16xf32>
    %cst_105 = arith.constant dense<0.000000e+00> : vector<16x8xf32>
    %325 = tpu.matmul %324, %312, %cst_105 {dimension_numbers = #tpu.dot_dimension_numbers<[1], [0], [0], [1], [0, 0, 1, 1], [], []>} : vector<16x16xf32>, vector<16x8xf32>, vector<16x8xf32> -> vector<16x8xf32>
    %326 = vector.extract_strided_slice %277 {offsets = [0, 24], sizes = [16, 8], strides = [1, 1]} : vector<16x128xf32> to vector<16x8xf32>
    %327 = vector.extract_strided_slice %277 {offsets = [0, 56], sizes = [16, 8], strides = [1, 1]} : vector<16x128xf32> to vector<16x8xf32>
    %328 = vector.extract_strided_slice %277 {offsets = [0, 88], sizes = [16, 8], strides = [1, 1]} : vector<16x128xf32> to vector<16x8xf32>
    %cst_106 = arith.constant dense<0.000000e+00> : vector<16x16xf32>
    %329 = tpu.matmul %326, %327, %cst_106 {dimension_numbers = #tpu.dot_dimension_numbers<[1], [1], [0], [0], [0, 0, 1, 0], [], []>} : vector<16x8xf32>, vector<16x8xf32>, vector<16x16xf32> -> vector<16x16xf32>
    %330 = arith.addf %329, %51 : vector<16x16xf32>
    %cst_107 = arith.constant dense<0xFF800000> : vector<16xf32>
    %331 = vector.multi_reduction <maximumf>, %330, %cst_107 [1] : vector<16x16xf32> to vector<16xf32>
    %332 = vector.shape_cast %331 : vector<16xf32> to vector<16x1xf32>
    %333 = vector.broadcast %332 : vector<16x1xf32> to vector<16x16xf32>
    %334 = arith.subf %330, %333 : vector<16x16xf32>
    %335 = math.exp %334 : vector<16x16xf32>
    %cst_108 = arith.constant dense<0.000000e+00> : vector<16xf32>
    %336 = vector.multi_reduction <add>, %335, %cst_108 [1] : vector<16x16xf32> to vector<16xf32>
    %337 = vector.shape_cast %336 : vector<16xf32> to vector<16x1xf32>
    %338 = tpu.reciprocal %337 : vector<16x1xf32> -> vector<16x1xf32>
    %339 = vector.broadcast %338 : vector<16x1xf32> to vector<16x16xf32>
    %340 = arith.mulf %335, %339 : vector<16x16xf32>
    %cst_109 = arith.constant dense<0.000000e+00> : vector<16x8xf32>
    %341 = tpu.matmul %340, %328, %cst_109 {dimension_numbers = #tpu.dot_dimension_numbers<[1], [0], [0], [1], [0, 0, 1, 1], [], []>} : vector<16x16xf32>, vector<16x8xf32>, vector<16x8xf32> -> vector<16x8xf32>
    %342 = tpu.concatenate %293, %309, %325, %341 in 1 : vector<16x8xf32>, vector<16x8xf32>, vector<16x8xf32>, vector<16x8xf32> -> vector<16x32xf32>
    %c160_110 = arith.constant 160 : index
    %c96_111 = arith.constant 96 : index
    %343 = vector.load %arg2[%c160_110, %c96_111] : memref<336x128xf32, #tpu.memory_space<vmem>>, vector<32x32xf32>
    %cst_112 = arith.constant dense<0.000000e+00> : vector<16x32xf32>
    %344 = tpu.matmul %342, %343, %cst_112 {dimension_numbers = #tpu.dot_dimension_numbers<[1], [0], [0], [1], [0, 0, 1, 1], [], []>} : vector<16x32xf32>, vector<32x32xf32>, vector<16x32xf32> -> vector<16x32xf32>
    %c322_113 = arith.constant 322 : index
    %c96_114 = arith.constant 96 : index
    %345 = vector.load %arg2[%c322_113, %c96_114] : memref<336x128xf32, #tpu.memory_space<vmem>>, vector<1x32xf32>
    %346 = vector.broadcast %345 : vector<1x32xf32> to vector<16x32xf32>
    %347 = arith.addf %344, %346 : vector<16x32xf32>
    %348 = arith.addf %272, %347 : vector<16x32xf32>
    %c328_115 = arith.constant 328 : index
    %c96_116 = arith.constant 96 : index
    %349 = vector.load %arg2[%c328_115, %c96_116] : memref<336x128xf32, #tpu.memory_space<vmem>>, vector<1x32xf32>
    %c329 = arith.constant 329 : index
    %c0_117 = arith.constant 0 : index
    %350 = vector.load %arg2[%c329, %c0_117] : memref<336x128xf32, #tpu.memory_space<vmem>>, vector<1x32xf32>
    %cst_118 = arith.constant dense<0.000000e+00> : vector<16xf32>
    %351 = vector.multi_reduction <add>, %348, %cst_118 [1] : vector<16x32xf32> to vector<16xf32>
    %352 = vector.shape_cast %351 : vector<16xf32> to vector<16x1xf32>
    %cst_119 = arith.constant 3.200000e+01 : f32
    %353 = vector.broadcast %cst_119 : f32 to vector<16x1xf32>
    %354 = arith.divf %352, %353 : vector<16x1xf32>
    %355 = arith.mulf %348, %348 : vector<16x32xf32>
    %cst_120 = arith.constant dense<0.000000e+00> : vector<16xf32>
    %356 = vector.multi_reduction <add>, %355, %cst_120 [1] : vector<16x32xf32> to vector<16xf32>
    %357 = vector.shape_cast %356 : vector<16xf32> to vector<16x1xf32>
    %cst_121 = arith.constant 3.200000e+01 : f32
    %358 = vector.broadcast %cst_121 : f32 to vector<16x1xf32>
    %359 = arith.divf %357, %358 : vector<16x1xf32>
    %360 = arith.mulf %354, %354 : vector<16x1xf32>
    %361 = arith.subf %359, %360 : vector<16x1xf32>
    %362 = vector.broadcast %354 : vector<16x1xf32> to vector<16x32xf32>
    %363 = arith.subf %348, %362 : vector<16x32xf32>
    %cst_122 = arith.constant 9.99999974E-6 : f32
    %364 = vector.broadcast %cst_122 : f32 to vector<16x1xf32>
    %365 = arith.addf %361, %364 : vector<16x1xf32>
    %366 = math.rsqrt %365 : vector<16x1xf32>
    %367 = vector.broadcast %366 : vector<16x1xf32> to vector<16x32xf32>
    %368 = arith.mulf %363, %367 : vector<16x32xf32>
    %369 = vector.broadcast %349 : vector<1x32xf32> to vector<16x32xf32>
    %370 = arith.mulf %368, %369 : vector<16x32xf32>
    %371 = vector.broadcast %350 : vector<1x32xf32> to vector<16x32xf32>
    %372 = arith.addf %370, %371 : vector<16x32xf32>
    %c224 = arith.constant 224 : index
    %c0_123 = arith.constant 0 : index
    %373 = vector.load %arg2[%c224, %c0_123] : memref<336x128xf32, #tpu.memory_space<vmem>>, vector<32x128xf32>
    %cst_124 = arith.constant dense<0.000000e+00> : vector<16x128xf32>
    %374 = tpu.matmul %372, %373, %cst_124 {dimension_numbers = #tpu.dot_dimension_numbers<[1], [0], [0], [1], [0, 0, 1, 1], [], []>} : vector<16x32xf32>, vector<32x128xf32>, vector<16x128xf32> -> vector<16x128xf32>
    %c324 = arith.constant 324 : index
    %c0_125 = arith.constant 0 : index
    %375 = vector.load %arg2[%c324, %c0_125] : memref<336x128xf32, #tpu.memory_space<vmem>>, vector<1x128xf32>
    %376 = vector.broadcast %375 : vector<1x128xf32> to vector<16x128xf32>
    %377 = arith.addf %374, %376 : vector<16x128xf32>
    %cst_126 = arith.constant 0.000000e+00 : f32
    %378 = vector.broadcast %cst_126 : f32 to vector<16x128xf32>
    %379 = arith.maximumf %377, %378 : vector<16x128xf32>
    %c0_127 = arith.constant 0 : index
    %c64_128 = arith.constant 64 : index
    %380 = vector.load %arg2[%c0_127, %c64_128] : memref<336x128xf32, #tpu.memory_space<vmem>>, vector<128x32xf32>
    %cst_129 = arith.constant dense<0.000000e+00> : vector<16x32xf32>
    %381 = tpu.matmul %379, %380, %cst_129 {dimension_numbers = #tpu.dot_dimension_numbers<[1], [0], [0], [1], [0, 0, 1, 1], [], []>} : vector<16x128xf32>, vector<128x32xf32>, vector<16x32xf32> -> vector<16x32xf32>
    %c329_130 = arith.constant 329 : index
    %c32_131 = arith.constant 32 : index
    %382 = vector.load %arg2[%c329_130, %c32_131] : memref<336x128xf32, #tpu.memory_space<vmem>>, vector<1x32xf32>
    %383 = vector.broadcast %382 : vector<1x32xf32> to vector<16x32xf32>
    %384 = arith.addf %381, %383 : vector<16x32xf32>
    %385 = arith.addf %372, %384 : vector<16x32xf32>
    %c329_132 = arith.constant 329 : index
    %c64_133 = arith.constant 64 : index
    %386 = vector.load %arg2[%c329_132, %c64_133] : memref<336x128xf32, #tpu.memory_space<vmem>>, vector<1x32xf32>
    %c329_134 = arith.constant 329 : index
    %c96_135 = arith.constant 96 : index
    %387 = vector.load %arg2[%c329_134, %c96_135] : memref<336x128xf32, #tpu.memory_space<vmem>>, vector<1x32xf32>
    %cst_136 = arith.constant dense<0.000000e+00> : vector<16xf32>
    %388 = vector.multi_reduction <add>, %385, %cst_136 [1] : vector<16x32xf32> to vector<16xf32>
    %389 = vector.shape_cast %388 : vector<16xf32> to vector<16x1xf32>
    %cst_137 = arith.constant 3.200000e+01 : f32
    %390 = vector.broadcast %cst_137 : f32 to vector<16x1xf32>
    %391 = arith.divf %389, %390 : vector<16x1xf32>
    %392 = arith.mulf %385, %385 : vector<16x32xf32>
    %cst_138 = arith.constant dense<0.000000e+00> : vector<16xf32>
    %393 = vector.multi_reduction <add>, %392, %cst_138 [1] : vector<16x32xf32> to vector<16xf32>
    %394 = vector.shape_cast %393 : vector<16xf32> to vector<16x1xf32>
    %cst_139 = arith.constant 3.200000e+01 : f32
    %395 = vector.broadcast %cst_139 : f32 to vector<16x1xf32>
    %396 = arith.divf %394, %395 : vector<16x1xf32>
    %397 = arith.mulf %391, %391 : vector<16x1xf32>
    %398 = arith.subf %396, %397 : vector<16x1xf32>
    %399 = vector.broadcast %391 : vector<16x1xf32> to vector<16x32xf32>
    %400 = arith.subf %385, %399 : vector<16x32xf32>
    %cst_140 = arith.constant 9.99999974E-6 : f32
    %401 = vector.broadcast %cst_140 : f32 to vector<16x1xf32>
    %402 = arith.addf %398, %401 : vector<16x1xf32>
    %403 = math.rsqrt %402 : vector<16x1xf32>
    %404 = vector.broadcast %403 : vector<16x1xf32> to vector<16x32xf32>
    %405 = arith.mulf %400, %404 : vector<16x32xf32>
    %406 = vector.broadcast %386 : vector<1x32xf32> to vector<16x32xf32>
    %407 = arith.mulf %405, %406 : vector<16x32xf32>
    %408 = vector.broadcast %387 : vector<1x32xf32> to vector<16x32xf32>
    %409 = arith.addf %407, %408 : vector<16x32xf32>
    %c0_141 = arith.constant 0 : index
    %c96_142 = arith.constant 96 : index
    %410 = vector.load %arg2[%c0_141, %c96_142] : memref<336x128xf32, #tpu.memory_space<vmem>>, vector<32x16xf32>
    %cst_143 = arith.constant dense<0.000000e+00> : vector<16x16xf32>
    %411 = tpu.matmul %409, %410, %cst_143 {dimension_numbers = #tpu.dot_dimension_numbers<[1], [0], [0], [1], [0, 0, 1, 1], [], []>} : vector<16x32xf32>, vector<32x16xf32>, vector<16x16xf32> -> vector<16x16xf32>
    %c330 = arith.constant 330 : index
    %c0_144 = arith.constant 0 : index
    %412 = vector.load %arg2[%c330, %c0_144] : memref<336x128xf32, #tpu.memory_space<vmem>>, vector<1x16xf32>
    %413 = vector.broadcast %412 : vector<1x16xf32> to vector<16x16xf32>
    %414 = arith.addf %411, %413 : vector<16x16xf32>
    %c330_145 = arith.constant 330 : index
    %c32_146 = arith.constant 32 : index
    %415 = vector.load %arg2[%c330_145, %c32_146] : memref<336x128xf32, #tpu.memory_space<vmem>>, vector<1x16xf32>
    %c330_147 = arith.constant 330 : index
    %c64_148 = arith.constant 64 : index
    %416 = vector.load %arg2[%c330_147, %c64_148] : memref<336x128xf32, #tpu.memory_space<vmem>>, vector<1x16xf32>
    %cst_149 = arith.constant dense<0.000000e+00> : vector<16xf32>
    %417 = vector.multi_reduction <add>, %414, %cst_149 [1] : vector<16x16xf32> to vector<16xf32>
    %418 = vector.shape_cast %417 : vector<16xf32> to vector<16x1xf32>
    %cst_150 = arith.constant 1.600000e+01 : f32
    %419 = vector.broadcast %cst_150 : f32 to vector<16x1xf32>
    %420 = arith.divf %418, %419 : vector<16x1xf32>
    %421 = arith.mulf %414, %414 : vector<16x16xf32>
    %cst_151 = arith.constant dense<0.000000e+00> : vector<16xf32>
    %422 = vector.multi_reduction <add>, %421, %cst_151 [1] : vector<16x16xf32> to vector<16xf32>
    %423 = vector.shape_cast %422 : vector<16xf32> to vector<16x1xf32>
    %cst_152 = arith.constant 1.600000e+01 : f32
    %424 = vector.broadcast %cst_152 : f32 to vector<16x1xf32>
    %425 = arith.divf %423, %424 : vector<16x1xf32>
    %426 = arith.mulf %420, %420 : vector<16x1xf32>
    %427 = arith.subf %425, %426 : vector<16x1xf32>
    %428 = vector.broadcast %420 : vector<16x1xf32> to vector<16x16xf32>
    %429 = arith.subf %414, %428 : vector<16x16xf32>
    %cst_153 = arith.constant 9.99999974E-6 : f32
    %430 = vector.broadcast %cst_153 : f32 to vector<16x1xf32>
    %431 = arith.addf %427, %430 : vector<16x1xf32>
    %432 = math.rsqrt %431 : vector<16x1xf32>
    %433 = vector.broadcast %432 : vector<16x1xf32> to vector<16x16xf32>
    %434 = arith.mulf %429, %433 : vector<16x16xf32>
    %435 = vector.broadcast %415 : vector<1x16xf32> to vector<16x16xf32>
    %436 = arith.mulf %434, %435 : vector<16x16xf32>
    %437 = vector.broadcast %416 : vector<1x16xf32> to vector<16x16xf32>
    %438 = arith.addf %436, %437 : vector<16x16xf32>
    %cst_154 = arith.constant 0.000000e+00 : f32
    %439 = vector.broadcast %cst_154 : f32 to vector<16x16xf32>
    %440 = arith.maximumf %438, %439 : vector<16x16xf32>
    %c256 = arith.constant 256 : index
    %c0_155 = arith.constant 0 : index
    %441 = vector.load %arg2[%c256, %c0_155] : memref<336x128xf32, #tpu.memory_space<vmem>>, vector<16x128xf32>
    %cst_156 = arith.constant dense<0.000000e+00> : vector<16x128xf32>
    %442 = tpu.matmul %440, %441, %cst_156 {dimension_numbers = #tpu.dot_dimension_numbers<[1], [0], [0], [1], [0, 0, 1, 1], [], []>} : vector<16x16xf32>, vector<16x128xf32>, vector<16x128xf32> -> vector<16x128xf32>
    %c325 = arith.constant 325 : index
    %c0_157 = arith.constant 0 : index
    %443 = vector.load %arg2[%c325, %c0_157] : memref<336x128xf32, #tpu.memory_space<vmem>>, vector<1x128xf32>
    %444 = vector.broadcast %443 : vector<1x128xf32> to vector<16x128xf32>
    %445 = arith.addf %442, %444 : vector<16x128xf32>
    %c0_158 = arith.constant 0 : index
    %c0_159 = arith.constant 0 : index
    %446 = vector.load %arg3[%c0_158, %c0_159] : memref<16x128xf32, #tpu.memory_space<vmem>>, vector<16x128xf32>
    tpu.vector_store %arg3[%c0_158, %c0_159], %445 {strides = array<i32>} : memref<16x128xf32, #tpu.memory_space<vmem>>, vector<16x128xf32>,
    return
  }
}

</mosaic_0001>

<llo_original>
// kernel: tpu_custom_call.1
$region0: #{tpu_custom_call.1}
  #allocation0 [shape = 'u32[]', space=smem, size = 0x4, offset = 0x4, fixed_abs, tag = 'smem constant byte address 0x4 - core index']
  #allocation1 [shape = 'u32[144,128]{1,0:T(1,128)}', space=vmem, size = 0x12000, scoped, tag = 'internal scratch']
  %s0 = inlined_call_operand.vmem [shape: s32[16,4], index: 0, kind: input, shape index: {}]
  %s1 = inlined_call_operand.vmem [shape: f32[16,16], index: 1, kind: input, shape index: {}]
  %s2 = inlined_call_operand.hbm [shape: f32[336,128], index: 2, kind: input, shape index: {}]
  %s3 = inlined_call_operand.hbm [shape: f32[16,128], index: 3, kind: output, shape index: {}]
  %s4 = sld [smem:[#allocation0]]
  $region26: #{tpu_custom_call.1} parent=0
    _
  %s6 = ssub.s32 1, %s4
  %s7 = scalar_select 0, %s6, %s4
  $region1: #{tpu_custom_call.1} parent=0
    #allocation2 [shape = 'u8[172032]{0}', space=vmem, size = 0x2a000, scoped, tag = 'input window, operand 2, single buffered']
    #allocation3 [shape = 's32[1]{0}', space=sflag, size = 0x4, scoped, tag = 'scoped memory for tpu_custom_call.1']
    #allocation4 [shape = 's32[1]{0}', space=sflag, size = 0x4, scoped, tag = 'scoped memory for tpu_custom_call.1']
    #allocation5 [shape = 'u8[8192]{0}', space=vmem, size = 0x2000, scoped, tag = 'output window, operand 0, single buffered']
    %8 = vsyncpa [#allocation3], 0
    %9 = vsyncpa [#allocation4], 0
    // Predicated region
    $region2: #{tpu_custom_call.1} parent=1 // pred_check
      _
    $region3: #{tpu_custom_call.1} parent=1 // pred_check_branch
      %11 = sbr.rel (0) target = $region5
    $region4: #{tpu_custom_call.1} parent=1 // pred_region
      _
    $region5: #{tpu_custom_call.1} parent=1 // pred_fallthru
      _
    // Predicated region
    $region6: #{tpu_custom_call.1} parent=1 // pred_check
      _
    $region7: #{tpu_custom_call.1} parent=1 // pred_check_branch
      %13 = sbr.rel (0) target = $region9
    $region8: #{tpu_custom_call.1} parent=1 // pred_region
      _
    $region9: #{tpu_custom_call.1} parent=1 // pred_fallthru
      _
    // Predicated region
    $region10: #{tpu_custom_call.1} parent=1 // pred_check
      _
    $region11: #{tpu_custom_call.1} parent=1 // pred_check_branch
      %15 = sbr.rel (0) target = $region13
    $region12: #{tpu_custom_call.1} parent=1 // pred_region
      %s17 = ssub.s32 5376, 5376
      %18 = vsyncadd [#allocation3], %s17
      %s19 = sshll.u32 [#allocation2], 4
      %s20 = int_to_ptr.vmem [resolvable:$true] %s19
      %25 = dma.hbm_to_vmem [thread:$0]  %s2, 5376, %s20, [#allocation3], 128, 128, 8
    $region13: #{tpu_custom_call.1} parent=1 // pred_fallthru
      _
    // Predicated region
    $region14: #{tpu_custom_call.1} parent=1 // pred_check
      _
    $region15: #{tpu_custom_call.1} parent=1 // pred_check_branch
      %27 = sbr.rel (0) target = $region17
    $region16: #{tpu_custom_call.1} parent=1 // pred_region
      %28 = dma.done [#allocation3], 5376
    $region17: #{tpu_custom_call.1} parent=1 // pred_fallthru
      _
    %v29 = vld [vmem:[%s0] sm:$0xff]
    %v30 = vld [vmem:[%s0 + $0x8] sm:$0xff]
    %v31 = vlaneseq
    %v32 = vand.u32 %v31, 127
    %33 = vset.pattern.permute.xlu0 0
    %34 = vperm.xlu0 %33, %v29
    %v35 = vpop.permute.xlu0 %34
    %36 = vset.pattern.permute.xlu0 0
    %37 = vperm.xlu0 %36, %v30
    %v38 = vpop.permute.xlu0 %37
    %vm39 = vcmp.eq.s32.totalorder %v32, %v35
    %vm40 = vcmp.eq.s32.totalorder %v32, %v38
    %v41 = vsel %vm39, 1, 0
    %v42 = vsel %vm40, 1, 0
    %v43 = vcvt.s32.f32 %v41
    %v44 = vcvt.s32.f32 %v42
    %v45 = vadd.s32 %v29, 5
    %v46 = vadd.s32 %v30, 5
    %47 = vset.pattern.permute.xlu0 1
    %48 = vperm.xlu0 %47, %v45
    %v49 = vpop.permute.xlu0 %48
    %50 = vset.pattern.permute.xlu0 1
    %51 = vperm.xlu0 %50, %v46
    %v52 = vpop.permute.xlu0 %51
    %vm53 = vcmp.eq.s32.totalorder %v32, %v49
    %vm54 = vcmp.eq.s32.totalorder %v32, %v52
    %v55 = vsel %vm53, 1, 0
    %v56 = vsel %vm54, 1, 0
    %v57 = vcvt.s32.f32 %v55
    %v58 = vcvt.s32.f32 %v56
    %v59 = vadd.f32 %v43, %v57
    %v60 = vadd.f32 %v44, %v58
    %v61 = vadd.s32 %v29, 15
    %v62 = vadd.s32 %v30, 15
    %63 = vset.pattern.permute.xlu0 2
    %64 = vperm.xlu0 %63, %v61
    %v65 = vpop.permute.xlu0 %64
    %66 = vset.pattern.permute.xlu0 2
    %67 = vperm.xlu0 %66, %v62
    %v68 = vpop.permute.xlu0 %67
    %vm69 = vcmp.eq.s32.totalorder %v32, %v65
    %vm70 = vcmp.eq.s32.totalorder %v32, %v68
    %v71 = vsel %vm69, 1, 0
    %v72 = vsel %vm70, 1, 0
    %v73 = vcvt.s32.f32 %v71
    %v74 = vcvt.s32.f32 %v72
    %v75 = vadd.f32 %v59, %v73
    %v76 = vadd.f32 %v60, %v74
    %v77 = vadd.s32 %v29, 21
    %v78 = vadd.s32 %v30, 21
    %79 = vset.pattern.permute.xlu0 3
    %80 = vperm.xlu0 %79, %v77
    %v81 = vpop.permute.xlu0 %80
    %82 = vset.pattern.permute.xlu0 3
    %83 = vperm.xlu0 %82, %v78
    %v84 = vpop.permute.xlu0 %83
    %vm85 = vcmp.eq.s32.totalorder %v32, %v81
    %vm86 = vcmp.eq.s32.totalorder %v32, %v84
    %v87 = vsel %vm85, 1, 0
    %v88 = vsel %vm86, 1, 0
    %v89 = vcvt.s32.f32 %v87
    %v90 = vcvt.s32.f32 %v88
    %v91 = vadd.f32 %v75, %v89
    %v92 = vadd.f32 %v76, %v90
    %v93 = vld [vmem:[#allocation2 + $0x110] sm:$0xff]
    %v94 = vld [vmem:[#allocation2 + $0x118] sm:$0xff]
    %v95 = vld [vmem:[#allocation2 + $0x120] sm:$0xff]
    %v96 = vld [vmem:[#allocation2 + $0x128] sm:$0xff]
    %v97 = vld [vmem:[%s1] sm:$0xff]
    %v98 = vld [vmem:[%s1 + $0x8] sm:$0xff]
    %v99 = vld [vmem:[#allocation2 + $0x130] sm:$0xff]
    %v100 = vld [vmem:[#allocation2 + $0x138] sm:$0xff]
    %vm101 = vcmask 130048
    %v103 = vsel %vm101, %v97, 0
    %v106 = vsel %vm101, %v98, 0
    %108 = vmatprep.subr.mxu0 0.0
    %109 = vmatpush1.msra.mxu0 %v99
    %110 = vmatprep.subr.mxu0 0.0
    %111 = vmatpush1.msra.mxu0 %v100
    %112 = vmatprep.subr.mxu0 0.0
    %113 = vmatpush1.msra.mxu0 0.0
    %114 = vmatprep.subr.mxu0 0.0
    %115 = vmatpush1.msra.mxu0 0.0
    %116 = vmatprep.subr.mxu0 0.0
    %117 = vmatpush1.msra.mxu0 0.0
    %118 = vmatprep.subr.mxu0 0.0
    %119 = vmatpush1.msra.mxu0 0.0
    %120 = vmatprep.subr.mxu0 0.0
    %121 = vmatpush1.msra.mxu0 0.0
    %122 = vmatprep.subr.mxu0 0.0
    %123 = vmatpush1.msra.mxu0 0.0
    %124 = vmatprep.subr.mxu0 0.0
    %125 = vmatpush1.msra.mxu0 0.0
    %126 = vmatprep.subr.mxu0 0.0
    %127 = vmatpush1.msra.mxu0 0.0
    %128 = vmatprep.subr.mxu0 0.0
    %129 = vmatpush1.msra.mxu0 0.0
    %130 = vmatprep.subr.mxu0 0.0
    %131 = vmatpush1.msra.mxu0 0.0
    %132 = vmatprep.subr.mxu0 0.0
    %133 = vmatpush1.msra.mxu0 0.0
    %134 = vmatprep.subr.mxu0 0.0
    %135 = vmatpush1.msra.mxu0 0.0
    %136 = vmatprep.subr.mxu0 0.0
    %137 = vmatpush1.msra.mxu0 0.0
    %138 = vmatprep.subr.mxu0 0.0
    %139 = vmatpush1.msra.mxu0 0.0
    %140 = vmatprep.subr.mxu0 0.0
    %141 = vmatpush1.msra.mxu0 0.0
    %142 = vmatprep.subr.mxu0 0.0
    %143 = vmatpush1.msra.mxu0 0.0
    %144 = vmatprep.subr.mxu0 0.0
    %145 = vmatpush1.msra.mxu0 0.0
    %146 = vmatprep.subr.mxu0 0.0
    %147 = vmatpush1.msra.mxu0 0.0
    %148 = vmatprep.subr.mxu0 0.0
    %149 = vmatpush1.msra.mxu0 0.0
    %150 = vmatprep.subr.mxu0 0.0
    %151 = vmatpush1.msra.mxu0 0.0
    %152 = vmatprep.subr.mxu0 0.0
    %153 = vmatpush1.msra.mxu0 0.0
    %154 = vmatprep.subr.mxu0 0.0
    %155 = vmatpush1.msra.mxu0 0.0
    %156 = vmatprep.subr.mxu0 0.0
    %157 = vmatpush1.msra.mxu0 0.0
    %158 = vmatprep.subr.mxu0 0.0
    %159 = vmatpush1.msra.mxu0 0.0
    %160 = vmatprep.subr.mxu0 0.0
    %161 = vmatpush1.msra.mxu0 0.0
    %162 = vmatprep.subr.mxu0 0.0
    %163 = vmatpush1.msra.mxu0 0.0
    %164 = vmatprep.subr.mxu0 0.0
    %165 = vmatpush1.msra.mxu0 0.0
    %166 = vmatprep.subr.mxu0 0.0
    %167 = vmatpush1.msra.mxu0 0.0
    %168 = vmatprep.subr.mxu0 0.0
    %169 = vmatpush1.msra.mxu0 0.0
    %170 = vmatprep.subr.mxu0 0.0
    %171 = vmatpush1.msra.mxu0 0.0
    %172 = vmatprep.mubr.f32.mxu0 0.0
    %173 = vmatmul.mubr.f32.gmra.mrb[0].mxu0 %v103
    %v174 = vpop.f32.mrb[0].mxu0
    %v175 = vadd.f32 0.0, %v174
    %v176 = vpop.f32.mrb[0].mxu0
    %177 = vmatprep.mubr.f32.mxu0 0.0
    %178 = vmatmul.mubr.f32.gmra.mrb[0].mxu0 %v106
    %v179 = vpop.f32.mrb[0].mxu0
    %v180 = vadd.f32 0.0, %v179
    %v181 = vpop.f32.mrb[0].mxu0
    %182 = vdwg.mxu0
    %vm183 = vcmask 261120
    %v185 = vsel %vm183, %v91, 0
    %v188 = vsel %vm183, %v92, 0
    %190 = vmatprep.subr.mxu0 0.0
    %191 = vmatpush1.msra.mxu0 %v93
    %192 = vmatprep.subr.mxu0 0.0
    %193 = vmatpush1.msra.mxu0 %v94
    %194 = vmatprep.subr.mxu0 0.0
    %195 = vmatpush1.msra.mxu0 %v95
    %196 = vmatprep.subr.mxu0 0.0
    %197 = vmatpush1.msra.mxu0 %v96
    %198 = vmatprep.subr.mxu0 0.0
    %199 = vmatpush1.msra.mxu0 0.0
    %200 = vmatprep.subr.mxu0 0.0
    %201 = vmatpush1.msra.mxu0 0.0
    %202 = vmatprep.subr.mxu0 0.0
    %203 = vmatpush1.msra.mxu0 0.0
    %204 = vmatprep.subr.mxu0 0.0
    %205 = vmatpush1.msra.mxu0 0.0
    %206 = vmatprep.subr.mxu0 0.0
    %207 = vmatpush1.msra.mxu0 0.0
    %208 = vmatprep.subr.mxu0 0.0
    %209 = vmatpush1.msra.mxu0 0.0
    %210 = vmatprep.subr.mxu0 0.0
    %211 = vmatpush1.msra.mxu0 0.0
    %212 = vmatprep.subr.mxu0 0.0
    %213 = vmatpush1.msra.mxu0 0.0
    %214 = vmatprep.subr.mxu0 0.0
    %215 = vmatpush1.msra.mxu0 0.0
    %216 = vmatprep.subr.mxu0 0.0
    %217 = vmatpush1.msra.mxu0 0.0
    %218 = vmatprep.subr.mxu0 0.0
    %219 = vmatpush1.msra.mxu0 0.0
    %220 = vmatprep.subr.mxu0 0.0
    %221 = vmatpush1.msra.mxu0 0.0
    %222 = vmatprep.subr.mxu0 0.0
    %223 = vmatpush1.msra.mxu0 0.0
    %224 = vmatprep.subr.mxu0 0.0
    %225 = vmatpush1.msra.mxu0 0.0
    %226 = vmatprep.subr.mxu0 0.0
    %227 = vmatpush1.msra.mxu0 0.0
    %228 = vmatprep.subr.mxu0 0.0
    %229 = vmatpush1.msra.mxu0 0.0
    %230 = vmatprep.subr.mxu0 0.0
    %231 = vmatpush1.msra.mxu0 0.0
    %232 = vmatprep.subr.mxu0 0.0
    %233 = vmatpush1.msra.mxu0 0.0
    %234 = vmatprep.subr.mxu0 0.0
    %235 = vmatpush1.msra.mxu0 0.0
    %236 = vmatprep.subr.mxu0 0.0
    %237 = vmatpush1.msra.mxu0 0.0
    %238 = vmatprep.subr.mxu0 0.0
    %239 = vmatpush1.msra.mxu0 0.0
    %240 = vmatprep.subr.mxu0 0.0
    %241 = vmatpush1.msra.mxu0 0.0
    %242 = vmatprep.subr.mxu0 0.0
    %243 = vmatpush1.msra.mxu0 0.0
    %244 = vmatprep.subr.mxu0 0.0
    %245 = vmatpush1.msra.mxu0 0.0
    %246 = vmatprep.subr.mxu0 0.0
    %247 = vmatpush1.msra.mxu0 0.0
    %248 = vmatprep.subr.mxu0 0.0
    %249 = vmatpush1.msra.mxu0 0.0
    %250 = vmatprep.subr.mxu0 0.0
    %251 = vmatpush1.msra.mxu0 0.0
    %252 = vmatprep.subr.mxu0 0.0
    %253 = vmatpush1.msra.mxu0 0.0
    %254 = vmatprep.mubr.f32.mxu0 0.0
    %255 = vmatmul.mubr.f32.gmra.mrb[0].mxu0 %v185
    %v256 = vpop.f32.mrb[0].mxu0
    %v257 = vadd.f32 %v175, %v256
    %v258 = vpop.f32.mrb[0].mxu0
    %259 = vmatprep.mubr.f32.mxu0 0.0
    %260 = vmatmul.mubr.f32.gmra.mrb[0].mxu0 %v188
    %v261 = vpop.f32.mrb[0].mxu0
    %v262 = vadd.f32 %v180, %v261
    %v263 = vpop.f32.mrb[0].mxu0
    %264 = vdwg.mxu0
    %v265 = vld [vmem:[#allocation2 + $0x140] sm:$0x1]
    %v266 = vlaneseq
    %v267 = vshrl.u32 %v266, 7
    %v268 = vsub.s32 0, %v267
    %v269 = vrot.slane %v265, %v268
    %v270 = vadd.f32 %v257, %v269
    %v271 = vadd.f32 %v262, %v269
    %v272 = vlaneseq
    %v273 = vshrl.u32 %v272, 7
    %v274 = vadd.s32 %v273, 8
    %v275 = vshra.s32 %v273, 3
    %v276 = vshra.s32 %v274, 3
    %v277 = vshra.s32 %v32, 3
    %vm278 = vcmp.eq.s32.totalorder %v275, %v277
    %vm279 = vcmp.eq.s32.totalorder %v276, %v277
    %v280 = vsel %vm278, 0.0, -1e+30
    %v281 = vsel %vm279, 0.0, -1e+30
    %v282 = vld [vmem:[#allocation2] sm:$0xff]
    %v283 = vld [vmem:[#allocation2 + $0x8] sm:$0xff]
    %v284 = vld [vmem:[#allocation2 + $0x10] sm:$0xff]
    %v285 = vld [vmem:[#allocation2 + $0x18] sm:$0xff]
    %v286 = vld [vmem:[#allocation2 + $0x20] sm:$0xff]
    %v287 = vld [vmem:[#allocation2 + $0x28] sm:$0xff]
    %v288 = vld [vmem:[#allocation2 + $0x30] sm:$0xff]
    %v289 = vld [vmem:[#allocation2 + $0x38] sm:$0xff]
    %v290 = vld [vmem:[#allocation2 + $0x40] sm:$0xff]
    %v291 = vld [vmem:[#allocation2 + $0x48] sm:$0xff]
    %v292 = vld [vmem:[#allocation2 + $0x50] sm:$0xff]
    %v293 = vld [vmem:[#allocation2 + $0x58] sm:$0xff]
    %v294 = vld [vmem:[#allocation2 + $0x60] sm:$0xff]
    %v295 = vld [vmem:[#allocation2 + $0x68] sm:$0xff]
    %v296 = vld [vmem:[#allocation2 + $0x70] sm:$0xff]
    %v297 = vld [vmem:[#allocation2 + $0x78] sm:$0xff]
    %v298 = vld [vmem:[#allocation2 + $0x146] sm:$0x1]
    %v299 = vlaneseq
    %v300 = vshrl.u32 %v299, 7
    %v301 = vsub.s32 0, %v300
    %v302 = vrot.slane %v298, %v301
    %303 = vmatprep.subr.mxu0 0.0
    %304 = vmatpush1.msra.mxu0 %v282
    %305 = vmatprep.subr.mxu0 0.0
    %306 = vmatpush1.msra.mxu0 %v283
    %307 = vmatprep.subr.mxu0 0.0
    %308 = vmatpush1.msra.mxu0 %v284
    %309 = vmatprep.subr.mxu0 0.0
    %310 = vmatpush1.msra.mxu0 %v285
    %311 = vmatprep.subr.mxu0 0.0
    %312 = vmatpush1.msra.mxu0 %v286
    %313 = vmatprep.subr.mxu0 0.0
    %314 = vmatpush1.msra.mxu0 %v287
    %315 = vmatprep.subr.mxu0 0.0
    %316 = vmatpush1.msra.mxu0 %v288
    %317 = vmatprep.subr.mxu0 0.0
    %318 = vmatpush1.msra.mxu0 %v289
    %319 = vmatprep.subr.mxu0 0.0
    %320 = vmatpush1.msra.mxu0 %v290
    %321 = vmatprep.subr.mxu0 0.0
    %322 = vmatpush1.msra.mxu0 %v291
    %323 = vmatprep.subr.mxu0 0.0
    %324 = vmatpush1.msra.mxu0 %v292
    %325 = vmatprep.subr.mxu0 0.0
    %326 = vmatpush1.msra.mxu0 %v293
    %327 = vmatprep.subr.mxu0 0.0
    %328 = vmatpush1.msra.mxu0 %v294
    %329 = vmatprep.subr.mxu0 0.0
    %330 = vmatpush1.msra.mxu0 %v295
    %331 = vmatprep.subr.mxu0 0.0
    %332 = vmatpush1.msra.mxu0 %v296
    %333 = vmatprep.subr.mxu0 0.0
    %334 = vmatpush1.msra.mxu0 %v297
    %335 = vmatprep.subr.mxu0 0.0
    %336 = vmatpush1.msra.mxu0 0.0
    %337 = vmatprep.subr.mxu0 0.0
    %338 = vmatpush1.msra.mxu0 0.0
    %339 = vmatprep.subr.mxu0 0.0
    %340 = vmatpush1.msra.mxu0 0.0
    %341 = vmatprep.subr.mxu0 0.0
    %342 = vmatpush1.msra.mxu0 0.0
    %343 = vmatprep.subr.mxu0 0.0
    %344 = vmatpush1.msra.mxu0 0.0
    %345 = vmatprep.subr.mxu0 0.0
    %346 = vmatpush1.msra.mxu0 0.0
    %347 = vmatprep.subr.mxu0 0.0
    %348 = vmatpush1.msra.mxu0 0.0
    %349 = vmatprep.subr.mxu0 0.0
    %350 = vmatpush1.msra.mxu0 0.0
    %351 = vmatprep.subr.mxu0 0.0
    %352 = vmatpush1.msra.mxu0 0.0
    %353 = vmatprep.subr.mxu0 0.0
    %354 = vmatpush1.msra.mxu0 0.0
    %355 = vmatprep.subr.mxu0 0.0
    %356 = vmatpush1.msra.mxu0 0.0
    %357 = vmatprep.subr.mxu0 0.0
    %358 = vmatpush1.msra.mxu0 0.0
    %359 = vmatprep.subr.mxu0 0.0
    %360 = vmatpush1.msra.mxu0 0.0
    %361 = vmatprep.subr.mxu0 0.0
    %362 = vmatpush1.msra.mxu0 0.0
    %363 = vmatprep.subr.mxu0 0.0
    %364 = vmatpush1.msra.mxu0 0.0
    %365 = vmatprep.subr.mxu0 0.0
    %366 = vmatpush1.msra.mxu0 0.0
    %367 = vmatprep.mubr.f32.mxu0 0.0
    %368 = vmatmul.mubr.f32.gmra.mrb[0].mxu0 %v270
    %v369 = vpop.f32.mrb[0].mxu0
    %v370 = vadd.f32 %v302, %v369
    %v371 = vpop.f32.mrb[0].mxu0
    %372 = vmatprep.mubr.f32.mxu0 0.0
    %373 = vmatmul.mubr.f32.gmra.mrb[0].mxu0 %v271
    %v374 = vpop.f32.mrb[0].mxu0
    %v375 = vadd.f32 %v302, %v374
    %v376 = vpop.f32.mrb[0].mxu0
    %377 = vdwg.mxu0
    %v378 = vsel %vm183, %v370, 0.0
    %379 = vadd.xlane.f32.xlu0 %v378
    %v380 = vpop.xlane.xlu0 %379
    %v381 = vsel %vm183, %v375, 0.0
    %382 = vadd.xlane.f32.xlu0 %v381
    %v383 = vpop.xlane.xlu0 %382
    %v384 = vrcp.pop 32.0
    %v385 = vmul.f32 %v380, %v384
    %v386 = vmul.f32 %v383, %v384
    %v387 = vmul.f32 %v370, %v370
    %v388 = vmul.f32 %v375, %v375
    %v389 = vsel %vm183, %v387, 0.0
    %390 = vadd.xlane.f32.xlu0 %v389
    %v391 = vpop.xlane.xlu0 %390
    %v392 = vsel %vm183, %v388, 0.0
    %393 = vadd.xlane.f32.xlu0 %v392
    %v394 = vpop.xlane.xlu0 %393
    %v395 = vmul.f32 %v391, %v384
    %v396 = vmul.f32 %v394, %v384
    %v397 = vmul.f32 %v385, %v385
    %v398 = vmul.f32 %v386, %v386
    %v399 = vsub.f32 %v395, %v397
    %v400 = vsub.f32 %v396, %v398
    %v401 = vsub.f32 %v370, %v385
    %v402 = vsub.f32 %v375, %v386
    %v403 = vadd.f32 %v399, 1e-05
    %v404 = vadd.f32 %v400, 1e-05
    %v405 = vrsqrt.pop %v403
    %v406 = vrsqrt.pop %v404
    %v407 = vmul.f32 %v401, %v405
    %v408 = vmul.f32 %v402, %v406
    %410 = vrot.lane.b32.xlu0 %v302, 96
    %v411 = vpop.permute.xlu0 %410
    %v413 = vmul.f32 %v407, %v411
    %v414 = vmul.f32 %v408, %v411
    %415 = vrot.lane.b32.xlu0 %v302, 64
    %v416 = vpop.permute.xlu0 %415
    %v418 = vadd.f32 %v413, %v416
    %v419 = vadd.f32 %v414, %v416
    %v420 = vmul.f32 %v418, 0.5
    %v421 = vmul.f32 %v419, 0.5
    %v422 = vmul.f32 %v418, 0.044715
    %v423 = vmul.f32 %v419, 0.044715
    %v424 = vmul.f32 %v422, %v418
    %v425 = vmul.f32 %v423, %v419
    %v426 = vmul.f32 %v424, %v418
    %v427 = vmul.f32 %v425, %v419
    %v428 = vadd.f32 %v418, %v426
    %v429 = vadd.f32 %v419, %v427
    %v430 = vmul.f32 %v428, 0.7978846
    %v431 = vmul.f32 %v429, 0.7978846
    %v432 = vtanh.pop %v430
    %v433 = vtanh.pop %v431
    %v434 = vadd.f32 %v432, 1.0
    %v435 = vadd.f32 %v433, 1.0
    %v436 = vmul.f32 %v420, %v434
    %v437 = vmul.f32 %v421, %v435
    %v438 = vld [vmem:[#allocation2 + $0x20] sm:$0xff]
    %v439 = vld [vmem:[#allocation2 + $0x28] sm:$0xff]
    %v440 = vld [vmem:[#allocation2 + $0x30] sm:$0xff]
    %v441 = vld [vmem:[#allocation2 + $0x38] sm:$0xff]
    %446 = vrot.lane.b32.xlu0 %v438, 32
    %v447 = vpop.permute.xlu0 %446
    %448 = vrot.lane.b32.xlu0 %v439, 32
    %v449 = vpop.permute.xlu0 %448
    %450 = vrot.lane.b32.xlu0 %v440, 32
    %v451 = vpop.permute.xlu0 %450
    %452 = vrot.lane.b32.xlu0 %v441, 32
    %v453 = vpop.permute.xlu0 %452
    %458 = vrot.lane.b32.xlu0 %v302, 32
    %v459 = vpop.permute.xlu0 %458
    %v462 = vsel %vm183, %v436, 0
    %v465 = vsel %vm183, %v437, 0
    %467 = vmatprep.subr.mxu0 0.0
    %468 = vmatpush1.msra.mxu0 %v447
    %469 = vmatprep.subr.mxu0 0.0
    %470 = vmatpush1.msra.mxu0 %v449
    %471 = vmatprep.subr.mxu0 0.0
    %472 = vmatpush1.msra.mxu0 %v451
    %473 = vmatprep.subr.mxu0 0.0
    %474 = vmatpush1.msra.mxu0 %v453
    %475 = vmatprep.subr.mxu0 0.0
    %476 = vmatpush1.msra.mxu0 0.0
    %477 = vmatprep.subr.mxu0 0.0
    %478 = vmatpush1.msra.mxu0 0.0
    %479 = vmatprep.subr.mxu0 0.0
    %480 = vmatpush1.msra.mxu0 0.0
    %481 = vmatprep.subr.mxu0 0.0
    %482 = vmatpush1.msra.mxu0 0.0
    %483 = vmatprep.subr.mxu0 0.0
    %484 = vmatpush1.msra.mxu0 0.0
    %485 = vmatprep.subr.mxu0 0.0
    %486 = vmatpush1.msra.mxu0 0.0
    %487 = vmatprep.subr.mxu0 0.0
    %488 = vmatpush1.msra.mxu0 0.0
    %489 = vmatprep.subr.mxu0 0.0
    %490 = vmatpush1.msra.mxu0 0.0
    %491 = vmatprep.subr.mxu0 0.0
    %492 = vmatpush1.msra.mxu0 0.0
    %493 = vmatprep.subr.mxu0 0.0
    %494 = vmatpush1.msra.mxu0 0.0
    %495 = vmatprep.subr.mxu0 0.0
    %496 = vmatpush1.msra.mxu0 0.0
    %497 = vmatprep.subr.mxu0 0.0
    %498 = vmatpush1.msra.mxu0 0.0
    %499 = vmatprep.subr.mxu0 0.0
    %500 = vmatpush1.msra.mxu0 0.0
    %501 = vmatprep.subr.mxu0 0.0
    %502 = vmatpush1.msra.mxu0 0.0
    %503 = vmatprep.subr.mxu0 0.0
    %504 = vmatpush1.msra.mxu0 0.0
    %505 = vmatprep.subr.mxu0 0.0
    %506 = vmatpush1.msra.mxu0 0.0
    %507 = vmatprep.subr.mxu0 0.0
    %508 = vmatpush1.msra.mxu0 0.0
    %509 = vmatprep.subr.mxu0 0.0
    %510 = vmatpush1.msra.mxu0 0.0
    %511 = vmatprep.subr.mxu0 0.0
    %512 = vmatpush1.msra.mxu0 0.0
    %513 = vmatprep.subr.mxu0 0.0
    %514 = vmatpush1.msra.mxu0 0.0
    %515 = vmatprep.subr.mxu0 0.0
    %516 = vmatpush1.msra.mxu0 0.0
    %517 = vmatprep.subr.mxu0 0.0
    %518 = vmatpush1.msra.mxu0 0.0
    %519 = vmatprep.subr.mxu0 0.0
    %520 = vmatpush1.msra.mxu0 0.0
    %521 = vmatprep.subr.mxu0 0.0
    %522 = vmatpush1.msra.mxu0 0.0
    %523 = vmatprep.subr.mxu0 0.0
    %524 = vmatpush1.msra.mxu0 0.0
    %525 = vmatprep.subr.mxu0 0.0
    %526 = vmatpush1.msra.mxu0 0.0
    %527 = vmatprep.subr.mxu0 0.0
    %528 = vmatpush1.msra.mxu0 0.0
    %529 = vmatprep.subr.mxu0 0.0
    %530 = vmatpush1.msra.mxu0 0.0
    %531 = vmatprep.mubr.f32.mxu0 0.0
    %532 = vmatmul.mubr.f32.gmra.mrb[0].mxu0 %v462
    %v533 = vpop.f32.mrb[0].mxu0
    %v534 = vadd.f32 %v459, %v533
    %v535 = vpop.f32.mrb[0].mxu0
    %536 = vmatprep.mubr.f32.mxu0 0.0
    %537 = vmatmul.mubr.f32.gmra.mrb[0].mxu0 %v465
    %v538 = vpop.f32.mrb[0].mxu0
    %v539 = vadd.f32 %v459, %v538
    %v540 = vpop.f32.mrb[0].mxu0
    %541 = vdwg.mxu0
    %v542 = vld [vmem:[#allocation2 + $0x147] sm:$0x1]
    %v543 = vsel %vm183, %v534, 0.0
    %544 = vadd.xlane.f32.xlu0 %v543
    %v545 = vpop.xlane.xlu0 %544
    %v546 = vsel %vm183, %v539, 0.0
    %547 = vadd.xlane.f32.xlu0 %v546
    %v548 = vpop.xlane.xlu0 %547
    %v549 = vmul.f32 %v545, %v384
    %v550 = vmul.f32 %v548, %v384
    %v551 = vmul.f32 %v534, %v534
    %v552 = vmul.f32 %v539, %v539
    %v553 = vsel %vm183, %v551, 0.0
    %554 = vadd.xlane.f32.xlu0 %v553
    %v555 = vpop.xlane.xlu0 %554
    %v556 = vsel %vm183, %v552, 0.0
    %557 = vadd.xlane.f32.xlu0 %v556
    %v558 = vpop.xlane.xlu0 %557
    %v559 = vmul.f32 %v555, %v384
    %v560 = vmul.f32 %v558, %v384
    %v561 = vmul.f32 %v549, %v549
    %v562 = vmul.f32 %v550, %v550
    %v563 = vsub.f32 %v559, %v561
    %v564 = vsub.f32 %v560, %v562
    %v565 = vsub.f32 %v534, %v549
    %v566 = vsub.f32 %v539, %v550
    %v567 = vadd.f32 %v563, 1e-05
    %v568 = vadd.f32 %v564, 1e-05
    %v569 = vrsqrt.pop %v567
    %v570 = vrsqrt.pop %v568
    %v571 = vmul.f32 %v565, %v569
    %v572 = vmul.f32 %v566, %v570
    %v573 = vlaneseq
    %v574 = vshrl.u32 %v573, 7
    %v575 = vsub.s32 0, %v574
    %v576 = vrot.slane %v542, %v575
    %v577 = vmul.f32 %v571, %v576
    %v578 = vmul.f32 %v572, %v576
    %580 = vrot.lane.b32.xlu0 %v576, 96
    %v581 = vpop.permute.xlu0 %580
    %v583 = vadd.f32 %v577, %v581
    %v584 = vadd.f32 %v578, %v581
    %v585 = vmul.f32 %v583, 0.5
    %v586 = vmul.f32 %v584, 0.5
    %v587 = vmul.f32 %v583, 0.044715
    %v588 = vmul.f32 %v584, 0.044715
    %v589 = vmul.f32 %v587, %v583
    %v590 = vmul.f32 %v588, %v584
    %v591 = vmul.f32 %v589, %v583
    %v592 = vmul.f32 %v590, %v584
    %v593 = vadd.f32 %v583, %v591
    %v594 = vadd.f32 %v584, %v592
    %v595 = vmul.f32 %v593, 0.7978846
    %v596 = vmul.f32 %v594, 0.7978846
    %v597 = vtanh.pop %v595
    %v598 = vtanh.pop %v596
    %v599 = vadd.f32 %v597, 1.0
    %v600 = vadd.f32 %v598, 1.0
    %v601 = vmul.f32 %v585, %v599
    %v602 = vmul.f32 %v586, %v600
    %v603 = vld [vmem:[#allocation2 + $0x80] sm:$0xff]
    %v604 = vld [vmem:[#allocation2 + $0x88] sm:$0xff]
    %v605 = vld [vmem:[#allocation2 + $0x90] sm:$0xff]
    %v606 = vld [vmem:[#allocation2 + $0x98] sm:$0xff]
    %v607 = vld [vmem:[#allocation2 + $0x141] sm:$0x1]
    %v608 = vlaneseq
    %v609 = vshrl.u32 %v608, 7
    %v610 = vsub.s32 0, %v609
    %v611 = vrot.slane %v607, %v610
    %v613 = vsel %vm183, %v601, 0
    %v616 = vsel %vm183, %v602, 0
    %618 = vmatprep.subr.mxu0 0.0
    %619 = vmatpush1.msra.mxu0 %v603
    %620 = vmatprep.subr.mxu0 0.0
    %621 = vmatpush1.msra.mxu0 %v604
    %622 = vmatprep.subr.mxu0 0.0
    %623 = vmatpush1.msra.mxu0 %v605
    %624 = vmatprep.subr.mxu0 0.0
    %625 = vmatpush1.msra.mxu0 %v606
    %626 = vmatprep.subr.mxu0 0.0
    %627 = vmatpush1.msra.mxu0 0.0
    %628 = vmatprep.subr.mxu0 0.0
    %629 = vmatpush1.msra.mxu0 0.0
    %630 = vmatprep.subr.mxu0 0.0
    %631 = vmatpush1.msra.mxu0 0.0
    %632 = vmatprep.subr.mxu0 0.0
    %633 = vmatpush1.msra.mxu0 0.0
    %634 = vmatprep.subr.mxu0 0.0
    %635 = vmatpush1.msra.mxu0 0.0
    %636 = vmatprep.subr.mxu0 0.0
    %637 = vmatpush1.msra.mxu0 0.0
    %638 = vmatprep.subr.mxu0 0.0
    %639 = vmatpush1.msra.mxu0 0.0
    %640 = vmatprep.subr.mxu0 0.0
    %641 = vmatpush1.msra.mxu0 0.0
    %642 = vmatprep.subr.mxu0 0.0
    %643 = vmatpush1.msra.mxu0 0.0
    %644 = vmatprep.subr.mxu0 0.0
    %645 = vmatpush1.msra.mxu0 0.0
    %646 = vmatprep.subr.mxu0 0.0
    %647 = vmatpush1.msra.mxu0 0.0
    %648 = vmatprep.subr.mxu0 0.0
    %649 = vmatpush1.msra.mxu0 0.0
    %650 = vmatprep.subr.mxu0 0.0
    %651 = vmatpush1.msra.mxu0 0.0
    %652 = vmatprep.subr.mxu0 0.0
    %653 = vmatpush1.msra.mxu0 0.0
    %654 = vmatprep.subr.mxu0 0.0
    %655 = vmatpush1.msra.mxu0 0.0
    %656 = vmatprep.subr.mxu0 0.0
    %657 = vmatpush1.msra.mxu0 0.0
    %658 = vmatprep.subr.mxu0 0.0
    %659 = vmatpush1.msra.mxu0 0.0
    %660 = vmatprep.subr.mxu0 0.0
    %661 = vmatpush1.msra.mxu0 0.0
    %662 = vmatprep.subr.mxu0 0.0
    %663 = vmatpush1.msra.mxu0 0.0
    %664 = vmatprep.subr.mxu0 0.0
    %665 = vmatpush1.msra.mxu0 0.0
    %666 = vmatprep.subr.mxu0 0.0
    %667 = vmatpush1.msra.mxu0 0.0
    %668 = vmatprep.subr.mxu0 0.0
    %669 = vmatpush1.msra.mxu0 0.0
    %670 = vmatprep.subr.mxu0 0.0
    %671 = vmatpush1.msra.mxu0 0.0
    %672 = vmatprep.subr.mxu0 0.0
    %673 = vmatpush1.msra.mxu0 0.0
    %674 = vmatprep.subr.mxu0 0.0
    %675 = vmatpush1.msra.mxu0 0.0
    %676 = vmatprep.subr.mxu0 0.0
    %677 = vmatpush1.msra.mxu0 0.0
    %678 = vmatprep.subr.mxu0 0.0
    %679 = vmatpush1.msra.mxu0 0.0
    %680 = vmatprep.subr.mxu0 0.0
    %681 = vmatpush1.msra.mxu0 0.0
    %682 = vmatprep.mubr.f32.mxu0 0.0
    %683 = vmatmul.mubr.f32.gmra.mrb[0].mxu0 %v613
    %v684 = vpop.f32.mrb[0].mxu0
    %v685 = vadd.f32 %v611, %v684
    %v686 = vpop.f32.mrb[0].mxu0
    %687 = vmatprep.mubr.f32.mxu0 0.0
    %688 = vmatmul.mubr.f32.gmra.mrb[0].mxu0 %v616
    %v689 = vpop.f32.mrb[0].mxu0
    %v690 = vadd.f32 %v611, %v689
    %v691 = vpop.f32.mrb[0].mxu0
    %692 = vdwg.mxu0
    %695 = vrot.lane.b32.xlu0 %v685, 96
    %v696 = vpop.permute.xlu0 %695
    %697 = vrot.lane.b32.xlu0 %v690, 96
    %v698 = vpop.permute.xlu0 %697
    %vm699 = vcmask 64512
    %v700 = vsel %vm699, %v685, 0
    %v702 = vsel %vm699, %v690, 0
    %v704 = vsel %vm699, %v696, 0
    %v706 = vsel %vm699, %v698, 0
    %708 = vmatprep.subr.mxu0 0.0
    %709 = vmatpush1.xpose.msra.mxu0 %v704
    %710 = vmatprep.subr.mxu0 0.0
    %711 = vmatpush1.xpose.msra.mxu0 %v706
    %712 = vmatprep.subr.mxu0 0.0
    %713 = vmatpush1.xpose.msra.mxu0 0.0
    %714 = vmatprep.subr.mxu0 0.0
    %715 = vmatpush1.xpose.msra.mxu0 0.0
    %716 = vmatprep.subr.mxu0 0.0
    %717 = vmatpush1.xpose.msra.mxu0 0.0
    %718 = vmatprep.subr.mxu0 0.0
    %719 = vmatpush1.xpose.msra.mxu0 0.0
    %720 = vmatprep.subr.mxu0 0.0
    %721 = vmatpush1.xpose.msra.mxu0 0.0
    %722 = vmatprep.subr.mxu0 0.0
    %723 = vmatpush1.xpose.msra.mxu0 0.0
    %724 = vmatprep.subr.mxu0 0.0
    %725 = vmatpush1.xpose.msra.mxu0 0.0
    %726 = vmatprep.subr.mxu0 0.0
    %727 = vmatpush1.xpose.msra.mxu0 0.0
    %728 = vmatprep.subr.mxu0 0.0
    %729 = vmatpush1.xpose.msra.mxu0 0.0
    %730 = vmatprep.subr.mxu0 0.0
    %731 = vmatpush1.xpose.msra.mxu0 0.0
    %732 = vmatprep.subr.mxu0 0.0
    %733 = vmatpush1.xpose.msra.mxu0 0.0
    %734 = vmatprep.subr.mxu0 0.0
    %735 = vmatpush1.xpose.msra.mxu0 0.0
    %736 = vmatprep.subr.mxu0 0.0
    %737 = vmatpush1.xpose.msra.mxu0 0.0
    %738 = vmatprep.subr.mxu0 0.0
    %739 = vmatpush1.xpose.msra.mxu0 0.0
    %740 = vmatprep.subr.mxu0 0.0
    %741 = vmatpush1.xpose.msra.mxu0 0.0
    %742 = vmatprep.subr.mxu0 0.0
    %743 = vmatpush1.xpose.msra.mxu0 0.0
    %744 = vmatprep.subr.mxu0 0.0
    %745 = vmatpush1.xpose.msra.mxu0 0.0
    %746 = vmatprep.subr.mxu0 0.0
    %747 = vmatpush1.xpose.msra.mxu0 0.0
    %748 = vmatprep.subr.mxu0 0.0
    %749 = vmatpush1.xpose.msra.mxu0 0.0
    %750 = vmatprep.subr.mxu0 0.0
    %751 = vmatpush1.xpose.msra.mxu0 0.0
    %752 = vmatprep.subr.mxu0 0.0
    %753 = vmatpush1.xpose.msra.mxu0 0.0
    %754 = vmatprep.subr.mxu0 0.0
    %755 = vmatpush1.xpose.msra.mxu0 0.0
    %756 = vmatprep.subr.mxu0 0.0
    %757 = vmatpush1.xpose.msra.mxu0 0.0
    %758 = vmatprep.subr.mxu0 0.0
    %759 = vmatpush1.xpose.msra.mxu0 0.0
    %760 = vmatprep.subr.mxu0 0.0
    %761 = vmatpush1.xpose.msra.mxu0 0.0
    %762 = vmatprep.subr.mxu0 0.0
    %763 = vmatpush1.xpose.msra.mxu0 0.0
    %764 = vmatprep.subr.mxu0 0.0
    %765 = vmatpush1.xpose.msra.mxu0 0.0
    %766 = vmatprep.subr.mxu0 0.0
    %767 = vmatpush1.xpose.msra.mxu0 0.0
    %768 = vmatprep.subr.mxu0 0.0
    %769 = vmatpush1.xpose.msra.mxu0 0.0
    %770 = vmatprep.subr.mxu0 0.0
    %771 = vmatpush1.xpose.msra.mxu0 0.0
    %772 = vmatprep.mubr.f32.mxu0 0.0
    %773 = vmatmul.mubr.f32.gmra.mrb[0].mxu0 %v700
    %v774 = vpop.f32.mrb[0].mxu0
    %v775 = vadd.f32 %v280, %v774
    %v776 = vpop.f32.mrb[0].mxu0
    %777 = vmatprep.mubr.f32.mxu0 0.0
    %778 = vmatmul.mubr.f32.gmra.mrb[0].mxu0 %v702
    %v779 = vpop.f32.mrb[0].mxu0
    %v780 = vadd.f32 %v281, %v779
    %v781 = vpop.f32.mrb[0].mxu0
    %782 = vdwg.mxu0
    %v783 = vsel %vm101, %v775, -inf
    %784 = vmax.xlane.f32.xlu0 %v783
    %v785 = vpop.xlane.xlu0 %784
    %v786 = vsel %vm101, %v780, -inf
    %787 = vmax.xlane.f32.xlu0 %v786
    %v788 = vpop.xlane.xlu0 %787
    %v789 = vsub.f32 %v775, %v785
    %v790 = vsub.f32 %v780, %v788
    %v791 = vmul.f32 %v789, 1.442695
    %v792 = vpow.pop %v791
    %v793 = vmul.f32 %v790, 1.442695
    %v794 = vpow.pop %v793
    %v795 = vsel %vm101, %v792, 0.0
    %796 = vadd.xlane.f32.xlu0 %v795
    %v797 = vpop.xlane.xlu0 %796
    %v798 = vsel %vm101, %v794, 0.0
    %799 = vadd.xlane.f32.xlu0 %v798
    %v800 = vpop.xlane.xlu0 %799
    %v801 = vrcp.pop %v797
    %v802 = vrcp.pop %v800
    %v803 = vmul.f32 %v792, %v801
    %v804 = vmul.f32 %v794, %v802
    %805 = vrot.lane.b32.xlu0 %v685, 64
    %v806 = vpop.permute.xlu0 %805
    %807 = vrot.lane.b32.xlu0 %v690, 64
    %v808 = vpop.permute.xlu0 %807
    %v812 = vsel %vm101, %v803, 0
    %v815 = vsel %vm101, %v804, 0
    %817 = vmatprep.subr.mxu0 0.0
    %818 = vmatpush1.msra.mxu0 %v806
    %819 = vmatprep.subr.mxu0 0.0
    %820 = vmatpush1.msra.mxu0 %v808
    %821 = vmatprep.subr.mxu0 0.0
    %822 = vmatpush1.msra.mxu0 0.0
    %823 = vmatprep.subr.mxu0 0.0
    %824 = vmatpush1.msra.mxu0 0.0
    %825 = vmatprep.subr.mxu0 0.0
    %826 = vmatpush1.msra.mxu0 0.0
    %827 = vmatprep.subr.mxu0 0.0
    %828 = vmatpush1.msra.mxu0 0.0
    %829 = vmatprep.subr.mxu0 0.0
    %830 = vmatpush1.msra.mxu0 0.0
    %831 = vmatprep.subr.mxu0 0.0
    %832 = vmatpush1.msra.mxu0 0.0
    %833 = vmatprep.subr.mxu0 0.0
    %834 = vmatpush1.msra.mxu0 0.0
    %835 = vmatprep.subr.mxu0 0.0
    %836 = vmatpush1.msra.mxu0 0.0
    %837 = vmatprep.subr.mxu0 0.0
    %838 = vmatpush1.msra.mxu0 0.0
    %839 = vmatprep.subr.mxu0 0.0
    %840 = vmatpush1.msra.mxu0 0.0
    %841 = vmatprep.subr.mxu0 0.0
    %842 = vmatpush1.msra.mxu0 0.0
    %843 = vmatprep.subr.mxu0 0.0
    %844 = vmatpush1.msra.mxu0 0.0
    %845 = vmatprep.subr.mxu0 0.0
    %846 = vmatpush1.msra.mxu0 0.0
    %847 = vmatprep.subr.mxu0 0.0
    %848 = vmatpush1.msra.mxu0 0.0
    %849 = vmatprep.subr.mxu0 0.0
    %850 = vmatpush1.msra.mxu0 0.0
    %851 = vmatprep.subr.mxu0 0.0
    %852 = vmatpush1.msra.mxu0 0.0
    %853 = vmatprep.subr.mxu0 0.0
    %854 = vmatpush1.msra.mxu0 0.0
    %855 = vmatprep.subr.mxu0 0.0
    %856 = vmatpush1.msra.mxu0 0.0
    %857 = vmatprep.subr.mxu0 0.0
    %858 = vmatpush1.msra.mxu0 0.0
    %859 = vmatprep.subr.mxu0 0.0
    %860 = vmatpush1.msra.mxu0 0.0
    %861 = vmatprep.subr.mxu0 0.0
    %862 = vmatpush1.msra.mxu0 0.0
    %863 = vmatprep.subr.mxu0 0.0
    %864 = vmatpush1.msra.mxu0 0.0
    %865 = vmatprep.subr.mxu0 0.0
    %866 = vmatpush1.msra.mxu0 0.0
    %867 = vmatprep.subr.mxu0 0.0
    %868 = vmatpush1.msra.mxu0 0.0
    %869 = vmatprep.subr.mxu0 0.0
    %870 = vmatpush1.msra.mxu0 0.0
    %871 = vmatprep.subr.mxu0 0.0
    %872 = vmatpush1.msra.mxu0 0.0
    %873 = vmatprep.subr.mxu0 0.0
    %874 = vmatpush1.msra.mxu0 0.0
    %875 = vmatprep.subr.mxu0 0.0
    %876 = vmatpush1.msra.mxu0 0.0
    %877 = vmatprep.subr.mxu0 0.0
    %878 = vmatpush1.msra.mxu0 0.0
    %879 = vmatprep.subr.mxu0 0.0
    %880 = vmatpush1.msra.mxu0 0.0
    %881 = vmatprep.mubr.f32.mxu0 0.0
    %882 = vmatmul.mubr.f32.gmra.mrb[0].mxu0 %v812
    %v883 = vpop.f32.mrb[0].mxu0
    %v884 = vadd.f32 0.0, %v883
    %v885 = vpop.f32.mrb[0].mxu0
    %886 = vmatprep.mubr.f32.mxu0 0.0
    %887 = vmatmul.mubr.f32.gmra.mrb[0].mxu0 %v815
    %v888 = vpop.f32.mrb[0].mxu0
    %v889 = vadd.f32 0.0, %v888
    %v890 = vpop.f32.mrb[0].mxu0
    %891 = vdwg.mxu0
    %892 = vrot.lane.b32.xlu0 %v685, 120
    %v893 = vpop.permute.xlu0 %892
    %894 = vrot.lane.b32.xlu0 %v690, 120
    %v895 = vpop.permute.xlu0 %894
    %896 = vrot.lane.b32.xlu0 %v685, 88
    %v897 = vpop.permute.xlu0 %896
    %898 = vrot.lane.b32.xlu0 %v690, 88
    %v899 = vpop.permute.xlu0 %898
    %v900 = vsel %vm699, %v893, 0
    %v902 = vsel %vm699, %v895, 0
    %v904 = vsel %vm699, %v897, 0
    %v906 = vsel %vm699, %v899, 0
    %908 = vmatprep.subr.mxu0 0.0
    %909 = vmatpush1.xpose.msra.mxu0 %v904
    %910 = vmatprep.subr.mxu0 0.0
    %911 = vmatpush1.xpose.msra.mxu0 %v906
    %912 = vmatprep.subr.mxu0 0.0
    %913 = vmatpush1.xpose.msra.mxu0 0.0
    %914 = vmatprep.subr.mxu0 0.0
    %915 = vmatpush1.xpose.msra.mxu0 0.0
    %916 = vmatprep.subr.mxu0 0.0
    %917 = vmatpush1.xpose.msra.mxu0 0.0
    %918 = vmatprep.subr.mxu0 0.0
    %919 = vmatpush1.xpose.msra.mxu0 0.0
    %920 = vmatprep.subr.mxu0 0.0
    %921 = vmatpush1.xpose.msra.mxu0 0.0
    %922 = vmatprep.subr.mxu0 0.0
    %923 = vmatpush1.xpose.msra.mxu0 0.0
    %924 = vmatprep.subr.mxu0 0.0
    %925 = vmatpush1.xpose.msra.mxu0 0.0
    %926 = vmatprep.subr.mxu0 0.0
    %927 = vmatpush1.xpose.msra.mxu0 0.0
    %928 = vmatprep.subr.mxu0 0.0
    %929 = vmatpush1.xpose.msra.mxu0 0.0
    %930 = vmatprep.subr.mxu0 0.0
    %931 = vmatpush1.xpose.msra.mxu0 0.0
    %932 = vmatprep.subr.mxu0 0.0
    %933 = vmatpush1.xpose.msra.mxu0 0.0
    %934 = vmatprep.subr.mxu0 0.0
    %935 = vmatpush1.xpose.msra.mxu0 0.0
    %936 = vmatprep.subr.mxu0 0.0
    %937 = vmatpush1.xpose.msra.mxu0 0.0
    %938 = vmatprep.subr.mxu0 0.0
    %939 = vmatpush1.xpose.msra.mxu0 0.0
    %940 = vmatprep.subr.mxu0 0.0
    %941 = vmatpush1.xpose.msra.mxu0 0.0
    %942 = vmatprep.subr.mxu0 0.0
    %943 = vmatpush1.xpose.msra.mxu0 0.0
    %944 = vmatprep.subr.mxu0 0.0
    %945 = vmatpush1.xpose.msra.mxu0 0.0
    %946 = vmatprep.subr.mxu0 0.0
    %947 = vmatpush1.xpose.msra.mxu0 0.0
    %948 = vmatprep.subr.mxu0 0.0
    %949 = vmatpush1.xpose.msra.mxu0 0.0
    %950 = vmatprep.subr.mxu0 0.0
    %951 = vmatpush1.xpose.msra.mxu0 0.0
    %952 = vmatprep.subr.mxu0 0.0
    %953 = vmatpush1.xpose.msra.mxu0 0.0
    %954 = vmatprep.subr.mxu0 0.0
    %955 = vmatpush1.xpose.msra.mxu0 0.0
    %956 = vmatprep.subr.mxu0 0.0
    %957 = vmatpush1.xpose.msra.mxu0 0.0
    %958 = vmatprep.subr.mxu0 0.0
    %959 = vmatpush1.xpose.msra.mxu0 0.0
    %960 = vmatprep.subr.mxu0 0.0
    %961 = vmatpush1.xpose.msra.mxu0 0.0
    %962 = vmatprep.subr.mxu0 0.0
    %963 = vmatpush1.xpose.msra.mxu0 0.0
    %964 = vmatprep.subr.mxu0 0.0
    %965 = vmatpush1.xpose.msra.mxu0 0.0
    %966 = vmatprep.subr.mxu0 0.0
    %967 = vmatpush1.xpose.msra.mxu0 0.0
    %968 = vmatprep.subr.mxu0 0.0
    %969 = vmatpush1.xpose.msra.mxu0 0.0
    %970 = vmatprep.subr.mxu0 0.0
    %971 = vmatpush1.xpose.msra.mxu0 0.0
    %972 = vmatprep.mubr.f32.mxu0 0.0
    %973 = vmatmul.mubr.f32.gmra.mrb[0].mxu0 %v900
    %v974 = vpop.f32.mrb[0].mxu0
    %v975 = vadd.f32 %v280, %v974
    %v976 = vpop.f32.mrb[0].mxu0
    %977 = vmatprep.mubr.f32.mxu0 0.0
    %978 = vmatmul.mubr.f32.gmra.mrb[0].mxu0 %v902
    %v979 = vpop.f32.mrb[0].mxu0
    %v980 = vadd.f32 %v281, %v979
    %v981 = vpop.f32.mrb[0].mxu0
    %982 = vdwg.mxu0
    %v983 = vsel %vm101, %v975, -inf
    %984 = vmax.xlane.f32.xlu0 %v983
    %v985 = vpop.xlane.xlu0 %984
    %v986 = vsel %vm101, %v980, -inf
    %987 = vmax.xlane.f32.xlu0 %v986
    %v988 = vpop.xlane.xlu0 %987
    %v989 = vsub.f32 %v975, %v985
    %v990 = vsub.f32 %v980, %v988
    %v991 = vmul.f32 %v989, 1.442695
    %v992 = vpow.pop %v991
    %v993 = vmul.f32 %v990, 1.442695
    %v994 = vpow.pop %v993
    %v995 = vsel %vm101, %v992, 0.0
    %996 = vadd.xlane.f32.xlu0 %v995
    %v997 = vpop.xlane.xlu0 %996
    %v998 = vsel %vm101, %v994, 0.0
    %999 = vadd.xlane.f32.xlu0 %v998
    %v1000 = vpop.xlane.xlu0 %999
    %v1001 = vrcp.pop %v997
    %v1002 = vrcp.pop %v1000
    %v1003 = vmul.f32 %v992, %v1001
    %v1004 = vmul.f32 %v994, %v1002
    %1005 = vrot.lane.b32.xlu0 %v685, 56
    %v1006 = vpop.permute.xlu0 %1005
    %1007 = vrot.lane.b32.xlu0 %v690, 56
    %v1008 = vpop.permute.xlu0 %1007
    %v1012 = vsel %vm101, %v1003, 0
    %v1015 = vsel %vm101, %v1004, 0
    %1017 = vmatprep.subr.mxu0 0.0
    %1018 = vmatpush1.msra.mxu0 %v1006
    %1019 = vmatprep.subr.mxu0 0.0
    %1020 = vmatpush1.msra.mxu0 %v1008
    %1021 = vmatprep.subr.mxu0 0.0
    %1022 = vmatpush1.msra.mxu0 0.0
    %1023 = vmatprep.subr.mxu0 0.0
    %1024 = vmatpush1.msra.mxu0 0.0
    %1025 = vmatprep.subr.mxu0 0.0
    %1026 = vmatpush1.msra.mxu0 0.0
    %1027 = vmatprep.subr.mxu0 0.0
    %1028 = vmatpush1.msra.mxu0 0.0
    %1029 = vmatprep.subr.mxu0 0.0
    %1030 = vmatpush1.msra.mxu0 0.0
    %1031 = vmatprep.subr.mxu0 0.0
    %1032 = vmatpush1.msra.mxu0 0.0
    %1033 = vmatprep.subr.mxu0 0.0
    %1034 = vmatpush1.msra.mxu0 0.0
    %1035 = vmatprep.subr.mxu0 0.0
    %1036 = vmatpush1.msra.mxu0 0.0
    %1037 = vmatprep.subr.mxu0 0.0
    %1038 = vmatpush1.msra.mxu0 0.0
    %1039 = vmatprep.subr.mxu0 0.0
    %1040 = vmatpush1.msra.mxu0 0.0
    %1041 = vmatprep.subr.mxu0 0.0
    %1042 = vmatpush1.msra.mxu0 0.0
    %1043 = vmatprep.subr.mxu0 0.0
    %1044 = vmatpush1.msra.mxu0 0.0
    %1045 = vmatprep.subr.mxu0 0.0
    %1046 = vmatpush1.msra.mxu0 0.0
    %1047 = vmatprep.subr.mxu0 0.0
    %1048 = vmatpush1.msra.mxu0 0.0
    %1049 = vmatprep.subr.mxu0 0.0
    %1050 = vmatpush1.msra.mxu0 0.0
    %1051 = vmatprep.subr.mxu0 0.0
    %1052 = vmatpush1.msra.mxu0 0.0
    %1053 = vmatprep.subr.mxu0 0.0
    %1054 = vmatpush1.msra.mxu0 0.0
    %1055 = vmatprep.subr.mxu0 0.0
    %1056 = vmatpush1.msra.mxu0 0.0
    %1057 = vmatprep.subr.mxu0 0.0
    %1058 = vmatpush1.msra.mxu0 0.0
    %1059 = vmatprep.subr.mxu0 0.0
    %1060 = vmatpush1.msra.mxu0 0.0
    %1061 = vmatprep.subr.mxu0 0.0
    %1062 = vmatpush1.msra.mxu0 0.0
    %1063 = vmatprep.subr.mxu0 0.0
    %1064 = vmatpush1.msra.mxu0 0.0
    %1065 = vmatprep.subr.mxu0 0.0
    %1066 = vmatpush1.msra.mxu0 0.0
    %1067 = vmatprep.subr.mxu0 0.0
    %1068 = vmatpush1.msra.mxu0 0.0
    %1069 = vmatprep.subr.mxu0 0.0
    %1070 = vmatpush1.msra.mxu0 0.0
    %1071 = vmatprep.subr.mxu0 0.0
    %1072 = vmatpush1.msra.mxu0 0.0
    %1073 = vmatprep.subr.mxu0 0.0
    %1074 = vmatpush1.msra.mxu0 0.0
    %1075 = vmatprep.subr.mxu0 0.0
    %1076 = vmatpush1.msra.mxu0 0.0
    %1077 = vmatprep.subr.mxu0 0.0
    %1078 = vmatpush1.msra.mxu0 0.0
    %1079 = vmatprep.subr.mxu0 0.0
    %1080 = vmatpush1.msra.mxu0 0.0
    %1081 = vmatprep.mubr.f32.mxu0 0.0
    %1082 = vmatmul.mubr.f32.gmra.mrb[0].mxu0 %v1012
    %v1083 = vpop.f32.mrb[0].mxu0
    %v1084 = vadd.f32 0.0, %v1083
    %v1085 = vpop.f32.mrb[0].mxu0
    %1086 = vmatprep.mubr.f32.mxu0 0.0
    %1087 = vmatmul.mubr.f32.gmra.mrb[0].mxu0 %v1015
    %v1088 = vpop.f32.mrb[0].mxu0
    %v1089 = vadd.f32 0.0, %v1088
    %v1090 = vpop.f32.mrb[0].mxu0
    %1091 = vdwg.mxu0
    %1092 = vrot.lane.b32.xlu0 %v685, 112
    %v1093 = vpop.permute.xlu0 %1092
    %1094 = vrot.lane.b32.xlu0 %v690, 112
    %v1095 = vpop.permute.xlu0 %1094
    %1096 = vrot.lane.b32.xlu0 %v685, 80
    %v1097 = vpop.permute.xlu0 %1096
    %1098 = vrot.lane.b32.xlu0 %v690, 80
    %v1099 = vpop.permute.xlu0 %1098
    %v1100 = vsel %vm699, %v1093, 0
    %v1102 = vsel %vm699, %v1095, 0
    %v1104 = vsel %vm699, %v1097, 0
    %v1106 = vsel %vm699, %v1099, 0
    %1108 = vmatprep.subr.mxu0 0.0
    %1109 = vmatpush1.xpose.msra.mxu0 %v1104
    %1110 = vmatprep.subr.mxu0 0.0
    %1111 = vmatpush1.xpose.msra.mxu0 %v1106
    %1112 = vmatprep.subr.mxu0 0.0
    %1113 = vmatpush1.xpose.msra.mxu0 0.0
    %1114 = vmatprep.subr.mxu0 0.0
    %1115 = vmatpush1.xpose.msra.mxu0 0.0
    %1116 = vmatprep.subr.mxu0 0.0
    %1117 = vmatpush1.xpose.msra.mxu0 0.0
    %1118 = vmatprep.subr.mxu0 0.0
    %1119 = vmatpush1.xpose.msra.mxu0 0.0
    %1120 = vmatprep.subr.mxu0 0.0
    %1121 = vmatpush1.xpose.msra.mxu0 0.0
    %1122 = vmatprep.subr.mxu0 0.0
    %1123 = vmatpush1.xpose.msra.mxu0 0.0
    %1124 = vmatprep.subr.mxu0 0.0
    %1125 = vmatpush1.xpose.msra.mxu0 0.0
    %1126 = vmatprep.subr.mxu0 0.0
    %1127 = vmatpush1.xpose.msra.mxu0 0.0
    %1128 = vmatprep.subr.mxu0 0.0
    %1129 = vmatpush1.xpose.msra.mxu0 0.0
    %1130 = vmatprep.subr.mxu0 0.0
    %1131 = vmatpush1.xpose.msra.mxu0 0.0
    %1132 = vmatprep.subr.mxu0 0.0
    %1133 = vmatpush1.xpose.msra.mxu0 0.0
    %1134 = vmatprep.subr.mxu0 0.0
    %1135 = vmatpush1.xpose.msra.mxu0 0.0
    %1136 = vmatprep.subr.mxu0 0.0
    %1137 = vmatpush1.xpose.msra.mxu0 0.0
    %1138 = vmatprep.subr.mxu0 0.0
    %1139 = vmatpush1.xpose.msra.mxu0 0.0
    %1140 = vmatprep.subr.mxu0 0.0
    %1141 = vmatpush1.xpose.msra.mxu0 0.0
    %1142 = vmatprep.subr.mxu0 0.0
    %1143 = vmatpush1.xpose.msra.mxu0 0.0
    %1144 = vmatprep.subr.mxu0 0.0
    %1145 = vmatpush1.xpose.msra.mxu0 0.0
    %1146 = vmatprep.subr.mxu0 0.0
    %1147 = vmatpush1.xpose.msra.mxu0 0.0
    %1148 = vmatprep.subr.mxu0 0.0
    %1149 = vmatpush1.xpose.msra.mxu0 0.0
    %1150 = vmatprep.subr.mxu0 0.0
    %1151 = vmatpush1.xpose.msra.mxu0 0.0
    %1152 = vmatprep.subr.mxu0 0.0
    %1153 = vmatpush1.xpose.msra.mxu0 0.0
    %1154 = vmatprep.subr.mxu0 0.0
    %1155 = vmatpush1.xpose.msra.mxu0 0.0
    %1156 = vmatprep.subr.mxu0 0.0
    %1157 = vmatpush1.xpose.msra.mxu0 0.0
    %1158 = vmatprep.subr.mxu0 0.0
    %1159 = vmatpush1.xpose.msra.mxu0 0.0
    %1160 = vmatprep.subr.mxu0 0.0
    %1161 = vmatpush1.xpose.msra.mxu0 0.0
    %1162 = vmatprep.subr.mxu0 0.0
    %1163 = vmatpush1.xpose.msra.mxu0 0.0
    %1164 = vmatprep.subr.mxu0 0.0
    %1165 = vmatpush1.xpose.msra.mxu0 0.0
    %1166 = vmatprep.subr.mxu0 0.0
    %1167 = vmatpush1.xpose.msra.mxu0 0.0
    %1168 = vmatprep.subr.mxu0 0.0
    %1169 = vmatpush1.xpose.msra.mxu0 0.0
    %1170 = vmatprep.subr.mxu0 0.0
    %1171 = vmatpush1.xpose.msra.mxu0 0.0
    %1172 = vmatprep.mubr.f32.mxu0 0.0
    %1173 = vmatmul.mubr.f32.gmra.mrb[0].mxu0 %v1100
    %v1174 = vpop.f32.mrb[0].mxu0
    %v1175 = vadd.f32 %v280, %v1174
    %v1176 = vpop.f32.mrb[0].mxu0
    %1177 = vmatprep.mubr.f32.mxu0 0.0
    %1178 = vmatmul.mubr.f32.gmra.mrb[0].mxu0 %v1102
    %v1179 = vpop.f32.mrb[0].mxu0
    %v1180 = vadd.f32 %v281, %v1179
    %v1181 = vpop.f32.mrb[0].mxu0
    %1182 = vdwg.mxu0
    %v1183 = vsel %vm101, %v1175, -inf
    %1184 = vmax.xlane.f32.xlu0 %v1183
    %v1185 = vpop.xlane.xlu0 %1184
    %v1186 = vsel %vm101, %v1180, -inf
    %1187 = vmax.xlane.f32.xlu0 %v1186
    %v1188 = vpop.xlane.xlu0 %1187
    %v1189 = vsub.f32 %v1175, %v1185
    %v1190 = vsub.f32 %v1180, %v1188
    %v1191 = vmul.f32 %v1189, 1.442695
    %v1192 = vpow.pop %v1191
    %v1193 = vmul.f32 %v1190, 1.442695
    %v1194 = vpow.pop %v1193
    %v1195 = vsel %vm101, %v1192, 0.0
    %1196 = vadd.xlane.f32.xlu0 %v1195
    %v1197 = vpop.xlane.xlu0 %1196
    %v1198 = vsel %vm101, %v1194, 0.0
    %1199 = vadd.xlane.f32.xlu0 %v1198
    %v1200 = vpop.xlane.xlu0 %1199
    %v1201 = vrcp.pop %v1197
    %v1202 = vrcp.pop %v1200
    %v1203 = vmul.f32 %v1192, %v1201
    %v1204 = vmul.f32 %v1194, %v1202
    %1205 = vrot.lane.b32.xlu0 %v685, 48
    %v1206 = vpop.permute.xlu0 %1205
    %1207 = vrot.lane.b32.xlu0 %v690, 48
    %v1208 = vpop.permute.xlu0 %1207
    %v1212 = vsel %vm101, %v1203, 0
    %v1215 = vsel %vm101, %v1204, 0
    %1217 = vmatprep.subr.mxu0 0.0
    %1218 = vmatpush1.msra.mxu0 %v1206
    %1219 = vmatprep.subr.mxu0 0.0
    %1220 = vmatpush1.msra.mxu0 %v1208
    %1221 = vmatprep.subr.mxu0 0.0
    %1222 = vmatpush1.msra.mxu0 0.0
    %1223 = vmatprep.subr.mxu0 0.0
    %1224 = vmatpush1.msra.mxu0 0.0
    %1225 = vmatprep.subr.mxu0 0.0
    %1226 = vmatpush1.msra.mxu0 0.0
    %1227 = vmatprep.subr.mxu0 0.0
    %1228 = vmatpush1.msra.mxu0 0.0
    %1229 = vmatprep.subr.mxu0 0.0
    %1230 = vmatpush1.msra.mxu0 0.0
    %1231 = vmatprep.subr.mxu0 0.0
    %1232 = vmatpush1.msra.mxu0 0.0
    %1233 = vmatprep.subr.mxu0 0.0
    %1234 = vmatpush1.msra.mxu0 0.0
    %1235 = vmatprep.subr.mxu0 0.0
    %1236 = vmatpush1.msra.mxu0 0.0
    %1237 = vmatprep.subr.mxu0 0.0
    %1238 = vmatpush1.msra.mxu0 0.0
    %1239 = vmatprep.subr.mxu0 0.0
    %1240 = vmatpush1.msra.mxu0 0.0
    %1241 = vmatprep.subr.mxu0 0.0
    %1242 = vmatpush1.msra.mxu0 0.0
    %1243 = vmatprep.subr.mxu0 0.0
    %1244 = vmatpush1.msra.mxu0 0.0
    %1245 = vmatprep.subr.mxu0 0.0
    %1246 = vmatpush1.msra.mxu0 0.0
    %1247 = vmatprep.subr.mxu0 0.0
    %1248 = vmatpush1.msra.mxu0 0.0
    %1249 = vmatprep.subr.mxu0 0.0
    %1250 = vmatpush1.msra.mxu0 0.0
    %1251 = vmatprep.subr.mxu0 0.0
    %1252 = vmatpush1.msra.mxu0 0.0
    %1253 = vmatprep.subr.mxu0 0.0
    %1254 = vmatpush1.msra.mxu0 0.0
    %1255 = vmatprep.subr.mxu0 0.0
    %1256 = vmatpush1.msra.mxu0 0.0
    %1257 = vmatprep.subr.mxu0 0.0
    %1258 = vmatpush1.msra.mxu0 0.0
    %1259 = vmatprep.subr.mxu0 0.0
    %1260 = vmatpush1.msra.mxu0 0.0
    %1261 = vmatprep.subr.mxu0 0.0
    %1262 = vmatpush1.msra.mxu0 0.0
    %1263 = vmatprep.subr.mxu0 0.0
    %1264 = vmatpush1.msra.mxu0 0.0
    %1265 = vmatprep.subr.mxu0 0.0
    %1266 = vmatpush1.msra.mxu0 0.0
    %1267 = vmatprep.subr.mxu0 0.0
    %1268 = vmatpush1.msra.mxu0 0.0
    %1269 = vmatprep.subr.mxu0 0.0
    %1270 = vmatpush1.msra.mxu0 0.0
    %1271 = vmatprep.subr.mxu0 0.0
    %1272 = vmatpush1.msra.mxu0 0.0
    %1273 = vmatprep.subr.mxu0 0.0
    %1274 = vmatpush1.msra.mxu0 0.0
    %1275 = vmatprep.subr.mxu0 0.0
    %1276 = vmatpush1.msra.mxu0 0.0
    %1277 = vmatprep.subr.mxu0 0.0
    %1278 = vmatpush1.msra.mxu0 0.0
    %1279 = vmatprep.subr.mxu0 0.0
    %1280 = vmatpush1.msra.mxu0 0.0
    %1281 = vmatprep.mubr.f32.mxu0 0.0
    %1282 = vmatmul.mubr.f32.gmra.mrb[0].mxu0 %v1212
    %v1283 = vpop.f32.mrb[0].mxu0
    %v1284 = vadd.f32 0.0, %v1283
    %v1285 = vpop.f32.mrb[0].mxu0
    %1286 = vmatprep.mubr.f32.mxu0 0.0
    %1287 = vmatmul.mubr.f32.gmra.mrb[0].mxu0 %v1215
    %v1288 = vpop.f32.mrb[0].mxu0
    %v1289 = vadd.f32 0.0, %v1288
    %v1290 = vpop.f32.mrb[0].mxu0
    %1291 = vdwg.mxu0
    %1292 = vrot.lane.b32.xlu0 %v685, 104
    %v1293 = vpop.permute.xlu0 %1292
    %1294 = vrot.lane.b32.xlu0 %v690, 104
    %v1295 = vpop.permute.xlu0 %1294
    %1296 = vrot.lane.b32.xlu0 %v685, 72
    %v1297 = vpop.permute.xlu0 %1296
    %1298 = vrot.lane.b32.xlu0 %v690, 72
    %v1299 = vpop.permute.xlu0 %1298
    %v1300 = vsel %vm699, %v1293, 0
    %v1302 = vsel %vm699, %v1295, 0
    %v1304 = vsel %vm699, %v1297, 0
    %v1306 = vsel %vm699, %v1299, 0
    %1308 = vmatprep.subr.mxu0 0.0
    %1309 = vmatpush1.xpose.msra.mxu0 %v1304
    %1310 = vmatprep.subr.mxu0 0.0
    %1311 = vmatpush1.xpose.msra.mxu0 %v1306
    %1312 = vmatprep.subr.mxu0 0.0
    %1313 = vmatpush1.xpose.msra.mxu0 0.0
    %1314 = vmatprep.subr.mxu0 0.0
    %1315 = vmatpush1.xpose.msra.mxu0 0.0
    %1316 = vmatprep.subr.mxu0 0.0
    %1317 = vmatpush1.xpose.msra.mxu0 0.0
    %1318 = vmatprep.subr.mxu0 0.0
    %1319 = vmatpush1.xpose.msra.mxu0 0.0
    %1320 = vmatprep.subr.mxu0 0.0
    %1321 = vmatpush1.xpose.msra.mxu0 0.0
    %1322 = vmatprep.subr.mxu0 0.0
    %1323 = vmatpush1.xpose.msra.mxu0 0.0
    %1324 = vmatprep.subr.mxu0 0.0
    %1325 = vmatpush1.xpose.msra.mxu0 0.0
    %1326 = vmatprep.subr.mxu0 0.0
    %1327 = vmatpush1.xpose.msra.mxu0 0.0
    %1328 = vmatprep.subr.mxu0 0.0
    %1329 = vmatpush1.xpose.msra.mxu0 0.0
    %1330 = vmatprep.subr.mxu0 0.0
    %1331 = vmatpush1.xpose.msra.mxu0 0.0
    %1332 = vmatprep.subr.mxu0 0.0
    %1333 = vmatpush1.xpose.msra.mxu0 0.0
    %1334 = vmatprep.subr.mxu0 0.0
    %1335 = vmatpush1.xpose.msra.mxu0 0.0
    %1336 = vmatprep.subr.mxu0 0.0
    %1337 = vmatpush1.xpose.msra.mxu0 0.0
    %1338 = vmatprep.subr.mxu0 0.0
    %1339 = vmatpush1.xpose.msra.mxu0 0.0
    %1340 = vmatprep.subr.mxu0 0.0
    %1341 = vmatpush1.xpose.msra.mxu0 0.0
    %1342 = vmatprep.subr.mxu0 0.0
    %1343 = vmatpush1.xpose.msra.mxu0 0.0
    %1344 = vmatprep.subr.mxu0 0.0
    %1345 = vmatpush1.xpose.msra.mxu0 0.0
    %1346 = vmatprep.subr.mxu0 0.0
    %1347 = vmatpush1.xpose.msra.mxu0 0.0
    %1348 = vmatprep.subr.mxu0 0.0
    %1349 = vmatpush1.xpose.msra.mxu0 0.0
    %1350 = vmatprep.subr.mxu0 0.0
    %1351 = vmatpush1.xpose.msra.mxu0 0.0
    %1352 = vmatprep.subr.mxu0 0.0
    %1353 = vmatpush1.xpose.msra.mxu0 0.0
    %1354 = vmatprep.subr.mxu0 0.0
    %1355 = vmatpush1.xpose.msra.mxu0 0.0
    %1356 = vmatprep.subr.mxu0 0.0
    %1357 = vmatpush1.xpose.msra.mxu0 0.0
    %1358 = vmatprep.subr.mxu0 0.0
    %1359 = vmatpush1.xpose.msra.mxu0 0.0
    %1360 = vmatprep.subr.mxu0 0.0
    %1361 = vmatpush1.xpose.msra.mxu0 0.0
    %1362 = vmatprep.subr.mxu0 0.0
    %1363 = vmatpush1.xpose.msra.mxu0 0.0
    %1364 = vmatprep.subr.mxu0 0.0
    %1365 = vmatpush1.xpose.msra.mxu0 0.0
    %1366 = vmatprep.subr.mxu0 0.0
    %1367 = vmatpush1.xpose.msra.mxu0 0.0
    %1368 = vmatprep.subr.mxu0 0.0
    %1369 = vmatpush1.xpose.msra.mxu0 0.0
    %1370 = vmatprep.subr.mxu0 0.0
    %1371 = vmatpush1.xpose.msra.mxu0 0.0
    %1372 = vmatprep.mubr.f32.mxu0 0.0
    %1373 = vmatmul.mubr.f32.gmra.mrb[0].mxu0 %v1300
    %v1374 = vpop.f32.mrb[0].mxu0
    %v1375 = vadd.f32 %v280, %v1374
    %v1376 = vpop.f32.mrb[0].mxu0
    %1377 = vmatprep.mubr.f32.mxu0 0.0
    %1378 = vmatmul.mubr.f32.gmra.mrb[0].mxu0 %v1302
    %v1379 = vpop.f32.mrb[0].mxu0
    %v1380 = vadd.f32 %v281, %v1379
    %v1381 = vpop.f32.mrb[0].mxu0
    %1382 = vdwg.mxu0
    %v1383 = vsel %vm101, %v1375, -inf
    %1384 = vmax.xlane.f32.xlu0 %v1383
    %v1385 = vpop.xlane.xlu0 %1384
    %v1386 = vsel %vm101, %v1380, -inf
    %1387 = vmax.xlane.f32.xlu0 %v1386
    %v1388 = vpop.xlane.xlu0 %1387
    %v1389 = vsub.f32 %v1375, %v1385
    %v1390 = vsub.f32 %v1380, %v1388
    %v1391 = vmul.f32 %v1389, 1.442695
    %v1392 = vpow.pop %v1391
    %v1393 = vmul.f32 %v1390, 1.442695
    %v1394 = vpow.pop %v1393
    %v1395 = vsel %vm101, %v1392, 0.0
    %1396 = vadd.xlane.f32.xlu0 %v1395
    %v1397 = vpop.xlane.xlu0 %1396
    %v1398 = vsel %vm101, %v1394, 0.0
    %1399 = vadd.xlane.f32.xlu0 %v1398
    %v1400 = vpop.xlane.xlu0 %1399
    %v1401 = vrcp.pop %v1397
    %v1402 = vrcp.pop %v1400
    %v1403 = vmul.f32 %v1392, %v1401
    %v1404 = vmul.f32 %v1394, %v1402
    %1405 = vrot.lane.b32.xlu0 %v685, 40
    %v1406 = vpop.permute.xlu0 %1405
    %1407 = vrot.lane.b32.xlu0 %v690, 40
    %v1408 = vpop.permute.xlu0 %1407
    %v1412 = vsel %vm101, %v1403, 0
    %v1415 = vsel %vm101, %v1404, 0
    %1417 = vmatprep.subr.mxu0 0.0
    %1418 = vmatpush1.msra.mxu0 %v1406
    %1419 = vmatprep.subr.mxu0 0.0
    %1420 = vmatpush1.msra.mxu0 %v1408
    %1421 = vmatprep.subr.mxu0 0.0
    %1422 = vmatpush1.msra.mxu0 0.0
    %1423 = vmatprep.subr.mxu0 0.0
    %1424 = vmatpush1.msra.mxu0 0.0
    %1425 = vmatprep.subr.mxu0 0.0
    %1426 = vmatpush1.msra.mxu0 0.0
    %1427 = vmatprep.subr.mxu0 0.0
    %1428 = vmatpush1.msra.mxu0 0.0
    %1429 = vmatprep.subr.mxu0 0.0
    %1430 = vmatpush1.msra.mxu0 0.0
    %1431 = vmatprep.subr.mxu0 0.0
    %1432 = vmatpush1.msra.mxu0 0.0
    %1433 = vmatprep.subr.mxu0 0.0
    %1434 = vmatpush1.msra.mxu0 0.0
    %1435 = vmatprep.subr.mxu0 0.0
    %1436 = vmatpush1.msra.mxu0 0.0
    %1437 = vmatprep.subr.mxu0 0.0
    %1438 = vmatpush1.msra.mxu0 0.0
    %1439 = vmatprep.subr.mxu0 0.0
    %1440 = vmatpush1.msra.mxu0 0.0
    %1441 = vmatprep.subr.mxu0 0.0
    %1442 = vmatpush1.msra.mxu0 0.0
    %1443 = vmatprep.subr.mxu0 0.0
    %1444 = vmatpush1.msra.mxu0 0.0
    %1445 = vmatprep.subr.mxu0 0.0
    %1446 = vmatpush1.msra.mxu0 0.0
    %1447 = vmatprep.subr.mxu0 0.0
    %1448 = vmatpush1.msra.mxu0 0.0
    %1449 = vmatprep.subr.mxu0 0.0
    %1450 = vmatpush1.msra.mxu0 0.0
    %1451 = vmatprep.subr.mxu0 0.0
    %1452 = vmatpush1.msra.mxu0 0.0
    %1453 = vmatprep.subr.mxu0 0.0
    %1454 = vmatpush1.msra.mxu0 0.0
    %1455 = vmatprep.subr.mxu0 0.0
    %1456 = vmatpush1.msra.mxu0 0.0
    %1457 = vmatprep.subr.mxu0 0.0
    %1458 = vmatpush1.msra.mxu0 0.0
    %1459 = vmatprep.subr.mxu0 0.0
    %1460 = vmatpush1.msra.mxu0 0.0
    %1461 = vmatprep.subr.mxu0 0.0
    %1462 = vmatpush1.msra.mxu0 0.0
    %1463 = vmatprep.subr.mxu0 0.0
    %1464 = vmatpush1.msra.mxu0 0.0
    %1465 = vmatprep.subr.mxu0 0.0
    %1466 = vmatpush1.msra.mxu0 0.0
    %1467 = vmatprep.subr.mxu0 0.0
    %1468 = vmatpush1.msra.mxu0 0.0
    %1469 = vmatprep.subr.mxu0 0.0
    %1470 = vmatpush1.msra.mxu0 0.0
    %1471 = vmatprep.subr.mxu0 0.0
    %1472 = vmatpush1.msra.mxu0 0.0
    %1473 = vmatprep.subr.mxu0 0.0
    %1474 = vmatpush1.msra.mxu0 0.0
    %1475 = vmatprep.subr.mxu0 0.0
    %1476 = vmatpush1.msra.mxu0 0.0
    %1477 = vmatprep.subr.mxu0 0.0
    %1478 = vmatpush1.msra.mxu0 0.0
    %1479 = vmatprep.subr.mxu0 0.0
    %1480 = vmatpush1.msra.mxu0 0.0
    %1481 = vmatprep.mubr.f32.mxu0 0.0
    %1482 = vmatmul.mubr.f32.gmra.mrb[0].mxu0 %v1412
    %v1483 = vpop.f32.mrb[0].mxu0
    %v1484 = vadd.f32 0.0, %v1483
    %v1485 = vpop.f32.mrb[0].mxu0
    %1486 = vmatprep.mubr.f32.mxu0 0.0
    %1487 = vmatmul.mubr.f32.gmra.mrb[0].mxu0 %v1415
    %v1488 = vpop.f32.mrb[0].mxu0
    %v1489 = vadd.f32 0.0, %v1488
    %v1490 = vpop.f32.mrb[0].mxu0
    %1491 = vdwg.mxu0
    %1494 = vrot.lane.b32.xlu0 %v1084, 8
    %v1495 = vpop.permute.xlu0 %1494
    %1496 = vrot.lane.b32.xlu0 %v1089, 8
    %v1497 = vpop.permute.xlu0 %1496
    %1502 = vrot.lane.b32.xlu0 %v1284, 16
    %v1503 = vpop.permute.xlu0 %1502
    %1504 = vrot.lane.b32.xlu0 %v1289, 16
    %v1505 = vpop.permute.xlu0 %1504
    %1510 = vrot.lane.b32.xlu0 %v1484, 24
    %v1511 = vpop.permute.xlu0 %1510
    %1512 = vrot.lane.b32.xlu0 %v1489, 24
    %v1513 = vpop.permute.xlu0 %1512
    %v1516 = vsel %vm699, %v884, %v1495
    %v1517 = vsel %vm699, %v889, %v1497
    %v1518 = vsel %vm101, %v1516, %v1503
    %v1519 = vsel %vm101, %v1517, %v1505
    %vm1520 = vcmask 195584
    %v1521 = vsel %vm1520, %v1518, %v1511
    %v1522 = vsel %vm1520, %v1519, %v1513
    %1527 = vrot.lane.b32.xlu0 %v603, 32
    %v1528 = vpop.permute.xlu0 %1527
    %1529 = vrot.lane.b32.xlu0 %v604, 32
    %v1530 = vpop.permute.xlu0 %1529
    %1531 = vrot.lane.b32.xlu0 %v605, 32
    %v1532 = vpop.permute.xlu0 %1531
    %1533 = vrot.lane.b32.xlu0 %v606, 32
    %v1534 = vpop.permute.xlu0 %1533
    %1540 = vrot.lane.b32.xlu0 %v611, 32
    %v1541 = vpop.permute.xlu0 %1540
    %v1544 = vsel %vm183, %v1521, 0
    %v1547 = vsel %vm183, %v1522, 0
    %1549 = vmatprep.subr.mxu0 0.0
    %1550 = vmatpush1.msra.mxu0 %v1528
    %1551 = vmatprep.subr.mxu0 0.0
    %1552 = vmatpush1.msra.mxu0 %v1530
    %1553 = vmatprep.subr.mxu0 0.0
    %1554 = vmatpush1.msra.mxu0 %v1532
    %1555 = vmatprep.subr.mxu0 0.0
    %1556 = vmatpush1.msra.mxu0 %v1534
    %1557 = vmatprep.subr.mxu0 0.0
    %1558 = vmatpush1.msra.mxu0 0.0
    %1559 = vmatprep.subr.mxu0 0.0
    %1560 = vmatpush1.msra.mxu0 0.0
    %1561 = vmatprep.subr.mxu0 0.0
    %1562 = vmatpush1.msra.mxu0 0.0
    %1563 = vmatprep.subr.mxu0 0.0
    %1564 = vmatpush1.msra.mxu0 0.0
    %1565 = vmatprep.subr.mxu0 0.0
    %1566 = vmatpush1.msra.mxu0 0.0
    %1567 = vmatprep.subr.mxu0 0.0
    %1568 = vmatpush1.msra.mxu0 0.0
    %1569 = vmatprep.subr.mxu0 0.0
    %1570 = vmatpush1.msra.mxu0 0.0
    %1571 = vmatprep.subr.mxu0 0.0
    %1572 = vmatpush1.msra.mxu0 0.0
    %1573 = vmatprep.subr.mxu0 0.0
    %1574 = vmatpush1.msra.mxu0 0.0
    %1575 = vmatprep.subr.mxu0 0.0
    %1576 = vmatpush1.msra.mxu0 0.0
    %1577 = vmatprep.subr.mxu0 0.0
    %1578 = vmatpush1.msra.mxu0 0.0
    %1579 = vmatprep.subr.mxu0 0.0
    %1580 = vmatpush1.msra.mxu0 0.0
    %1581 = vmatprep.subr.mxu0 0.0
    %1582 = vmatpush1.msra.mxu0 0.0
    %1583 = vmatprep.subr.mxu0 0.0
    %1584 = vmatpush1.msra.mxu0 0.0
    %1585 = vmatprep.subr.mxu0 0.0
    %1586 = vmatpush1.msra.mxu0 0.0
    %1587 = vmatprep.subr.mxu0 0.0
    %1588 = vmatpush1.msra.mxu0 0.0
    %1589 = vmatprep.subr.mxu0 0.0
    %1590 = vmatpush1.msra.mxu0 0.0
    %1591 = vmatprep.subr.mxu0 0.0
    %1592 = vmatpush1.msra.mxu0 0.0
    %1593 = vmatprep.subr.mxu0 0.0
    %1594 = vmatpush1.msra.mxu0 0.0
    %1595 = vmatprep.subr.mxu0 0.0
    %1596 = vmatpush1.msra.mxu0 0.0
    %1597 = vmatprep.subr.mxu0 0.0
    %1598 = vmatpush1.msra.mxu0 0.0
    %1599 = vmatprep.subr.mxu0 0.0
    %1600 = vmatpush1.msra.mxu0 0.0
    %1601 = vmatprep.subr.mxu0 0.0
    %1602 = vmatpush1.msra.mxu0 0.0
    %1603 = vmatprep.subr.mxu0 0.0
    %1604 = vmatpush1.msra.mxu0 0.0
    %1605 = vmatprep.subr.mxu0 0.0
    %1606 = vmatpush1.msra.mxu0 0.0
    %1607 = vmatprep.subr.mxu0 0.0
    %1608 = vmatpush1.msra.mxu0 0.0
    %1609 = vmatprep.subr.mxu0 0.0
    %1610 = vmatpush1.msra.mxu0 0.0
    %1611 = vmatprep.subr.mxu0 0.0
    %1612 = vmatpush1.msra.mxu0 0.0
    %1613 = vmatprep.mubr.f32.mxu0 0.0
    %1614 = vmatmul.mubr.f32.gmra.mrb[0].mxu0 %v1544
    %v1615 = vpop.f32.mrb[0].mxu0
    %v1616 = vadd.f32 %v1541, %v1615
    %v1617 = vpop.f32.mrb[0].mxu0
    %1618 = vmatprep.mubr.f32.mxu0 0.0
    %1619 = vmatmul.mubr.f32.gmra.mrb[0].mxu0 %v1547
    %v1620 = vpop.f32.mrb[0].mxu0
    %v1621 = vadd.f32 %v1541, %v1620
    %v1622 = vpop.f32.mrb[0].mxu0
    %1623 = vdwg.mxu0
    %v1624 = vadd.f32 %v601, %v1616
    %v1625 = vadd.f32 %v602, %v1621
    %v1626 = vsel %vm183, %v1624, 0.0
    %1627 = vadd.xlane.f32.xlu0 %v1626
    %v1628 = vpop.xlane.xlu0 %1627
    %v1629 = vsel %vm183, %v1625, 0.0
    %1630 = vadd.xlane.f32.xlu0 %v1629
    %v1631 = vpop.xlane.xlu0 %1630
    %v1632 = vmul.f32 %v1628, %v384
    %v1633 = vmul.f32 %v1631, %v384
    %v1634 = vmul.f32 %v1624, %v1624
    %v1635 = vmul.f32 %v1625, %v1625
    %v1636 = vsel %vm183, %v1634, 0.0
    %1637 = vadd.xlane.f32.xlu0 %v1636
    %v1638 = vpop.xlane.xlu0 %1637
    %v1639 = vsel %vm183, %v1635, 0.0
    %1640 = vadd.xlane.f32.xlu0 %v1639
    %v1641 = vpop.xlane.xlu0 %1640
    %v1642 = vmul.f32 %v1638, %v384
    %v1643 = vmul.f32 %v1641, %v384
    %v1644 = vmul.f32 %v1632, %v1632
    %v1645 = vmul.f32 %v1633, %v1633
    %v1646 = vsub.f32 %v1642, %v1644
    %v1647 = vsub.f32 %v1643, %v1645
    %v1648 = vsub.f32 %v1624, %v1632
    %v1649 = vsub.f32 %v1625, %v1633
    %v1650 = vadd.f32 %v1646, 1e-05
    %v1651 = vadd.f32 %v1647, 1e-05
    %v1652 = vrsqrt.pop %v1650
    %v1653 = vrsqrt.pop %v1651
    %v1654 = vmul.f32 %v1648, %v1652
    %v1655 = vmul.f32 %v1649, %v1653
    %1656 = vrot.lane.b32.xlu0 %v576, 64
    %v1657 = vpop.permute.xlu0 %1656
    %v1659 = vmul.f32 %v1654, %v1657
    %v1660 = vmul.f32 %v1655, %v1657
    %1661 = vrot.lane.b32.xlu0 %v576, 32
    %v1662 = vpop.permute.xlu0 %1661
    %v1664 = vadd.f32 %v1659, %v1662
    %v1665 = vadd.f32 %v1660, %v1662
    %v1666 = vld [vmem:[#allocation2 + $0xc0] sm:$0xff]
    %v1667 = vld [vmem:[#allocation2 + $0xc8] sm:$0xff]
    %v1668 = vld [vmem:[#allocation2 + $0xd0] sm:$0xff]
    %v1669 = vld [vmem:[#allocation2 + $0xd8] sm:$0xff]
    %v1670 = vld [vmem:[#allocation2 + $0x143] sm:$0x1]
    %v1671 = vlaneseq
    %v1672 = vshrl.u32 %v1671, 7
    %v1673 = vsub.s32 0, %v1672
    %v1674 = vrot.slane %v1670, %v1673
    %v1676 = vsel %vm183, %v1664, 0
    %v1679 = vsel %vm183, %v1665, 0
    %1681 = vmatprep.subr.mxu0 0.0
    %1682 = vmatpush1.msra.mxu0 %v1666
    %1683 = vmatprep.subr.mxu0 0.0
    %1684 = vmatpush1.msra.mxu0 %v1667
    %1685 = vmatprep.subr.mxu0 0.0
    %1686 = vmatpush1.msra.mxu0 %v1668
    %1687 = vmatprep.subr.mxu0 0.0
    %1688 = vmatpush1.msra.mxu0 %v1669
    %1689 = vmatprep.subr.mxu0 0.0
    %1690 = vmatpush1.msra.mxu0 0.0
    %1691 = vmatprep.subr.mxu0 0.0
    %1692 = vmatpush1.msra.mxu0 0.0
    %1693 = vmatprep.subr.mxu0 0.0
    %1694 = vmatpush1.msra.mxu0 0.0
    %1695 = vmatprep.subr.mxu0 0.0
    %1696 = vmatpush1.msra.mxu0 0.0
    %1697 = vmatprep.subr.mxu0 0.0
    %1698 = vmatpush1.msra.mxu0 0.0
    %1699 = vmatprep.subr.mxu0 0.0
    %1700 = vmatpush1.msra.mxu0 0.0
    %1701 = vmatprep.subr.mxu0 0.0
    %1702 = vmatpush1.msra.mxu0 0.0
    %1703 = vmatprep.subr.mxu0 0.0
    %1704 = vmatpush1.msra.mxu0 0.0
    %1705 = vmatprep.subr.mxu0 0.0
    %1706 = vmatpush1.msra.mxu0 0.0
    %1707 = vmatprep.subr.mxu0 0.0
    %1708 = vmatpush1.msra.mxu0 0.0
    %1709 = vmatprep.subr.mxu0 0.0
    %1710 = vmatpush1.msra.mxu0 0.0
    %1711 = vmatprep.subr.mxu0 0.0
    %1712 = vmatpush1.msra.mxu0 0.0
    %1713 = vmatprep.subr.mxu0 0.0
    %1714 = vmatpush1.msra.mxu0 0.0
    %1715 = vmatprep.subr.mxu0 0.0
    %1716 = vmatpush1.msra.mxu0 0.0
    %1717 = vmatprep.subr.mxu0 0.0
    %1718 = vmatpush1.msra.mxu0 0.0
    %1719 = vmatprep.subr.mxu0 0.0
    %1720 = vmatpush1.msra.mxu0 0.0
    %1721 = vmatprep.subr.mxu0 0.0
    %1722 = vmatpush1.msra.mxu0 0.0
    %1723 = vmatprep.subr.mxu0 0.0
    %1724 = vmatpush1.msra.mxu0 0.0
    %1725 = vmatprep.subr.mxu0 0.0
    %1726 = vmatpush1.msra.mxu0 0.0
    %1727 = vmatprep.subr.mxu0 0.0
    %1728 = vmatpush1.msra.mxu0 0.0
    %1729 = vmatprep.subr.mxu0 0.0
    %1730 = vmatpush1.msra.mxu0 0.0
    %1731 = vmatprep.subr.mxu0 0.0
    %1732 = vmatpush1.msra.mxu0 0.0
    %1733 = vmatprep.subr.mxu0 0.0
    %1734 = vmatpush1.msra.mxu0 0.0
    %1735 = vmatprep.subr.mxu0 0.0
    %1736 = vmatpush1.msra.mxu0 0.0
    %1737 = vmatprep.subr.mxu0 0.0
    %1738 = vmatpush1.msra.mxu0 0.0
    %1739 = vmatprep.subr.mxu0 0.0
    %1740 = vmatpush1.msra.mxu0 0.0
    %1741 = vmatprep.subr.mxu0 0.0
    %1742 = vmatpush1.msra.mxu0 0.0
    %1743 = vmatprep.subr.mxu0 0.0
    %1744 = vmatpush1.msra.mxu0 0.0
    %1745 = vmatprep.mubr.f32.mxu0 0.0
    %1746 = vmatmul.mubr.f32.gmra.mrb[0].mxu0 %v1676
    %v1747 = vpop.f32.mrb[0].mxu0
    %v1748 = vadd.f32 %v1674, %v1747
    %v1749 = vpop.f32.mrb[0].mxu0
    %1750 = vmatprep.mubr.f32.mxu0 0.0
    %1751 = vmatmul.mubr.f32.gmra.mrb[0].mxu0 %v1679
    %v1752 = vpop.f32.mrb[0].mxu0
    %v1753 = vadd.f32 %v1674, %v1752
    %v1754 = vpop.f32.mrb[0].mxu0
    %1755 = vdwg.mxu0
    %v1756 = vmax.f32 %v1748, 0.0
    %v1757 = vmax.f32 %v1753, 0.0
    %v1758 = vld [vmem:[#allocation2 + $0x148] sm:$0x1]
    %v1759 = vlaneseq
    %v1760 = vshrl.u32 %v1759, 7
    %v1761 = vsub.s32 0, %v1760
    %v1762 = vrot.slane %v1758, %v1761
    %1779 = vrot.lane.b32.xlu0 %v282, 96
    %v1780 = vpop.permute.xlu0 %1779
    %1781 = vrot.lane.b32.xlu0 %v283, 96
    %v1782 = vpop.permute.xlu0 %1781
    %1783 = vrot.lane.b32.xlu0 %v284, 96
    %v1784 = vpop.permute.xlu0 %1783
    %1785 = vrot.lane.b32.xlu0 %v285, 96
    %v1786 = vpop.permute.xlu0 %1785
    %1787 = vrot.lane.b32.xlu0 %v286, 96
    %v1788 = vpop.permute.xlu0 %1787
    %1789 = vrot.lane.b32.xlu0 %v287, 96
    %v1790 = vpop.permute.xlu0 %1789
    %1791 = vrot.lane.b32.xlu0 %v288, 96
    %v1792 = vpop.permute.xlu0 %1791
    %1793 = vrot.lane.b32.xlu0 %v289, 96
    %v1794 = vpop.permute.xlu0 %1793
    %1795 = vrot.lane.b32.xlu0 %v290, 96
    %v1796 = vpop.permute.xlu0 %1795
    %1797 = vrot.lane.b32.xlu0 %v291, 96
    %v1798 = vpop.permute.xlu0 %1797
    %1799 = vrot.lane.b32.xlu0 %v292, 96
    %v1800 = vpop.permute.xlu0 %1799
    %1801 = vrot.lane.b32.xlu0 %v293, 96
    %v1802 = vpop.permute.xlu0 %1801
    %1803 = vrot.lane.b32.xlu0 %v294, 96
    %v1804 = vpop.permute.xlu0 %1803
    %1805 = vrot.lane.b32.xlu0 %v295, 96
    %v1806 = vpop.permute.xlu0 %1805
    %1807 = vrot.lane.b32.xlu0 %v296, 96
    %v1808 = vpop.permute.xlu0 %1807
    %1809 = vrot.lane.b32.xlu0 %v297, 96
    %v1810 = vpop.permute.xlu0 %1809
    %1827 = vmatprep.subr.mxu0 0.0
    %1828 = vmatpush1.msra.mxu0 %v1780
    %1829 = vmatprep.subr.mxu0 0.0
    %1830 = vmatpush1.msra.mxu0 %v1782
    %1831 = vmatprep.subr.mxu0 0.0
    %1832 = vmatpush1.msra.mxu0 %v1784
    %1833 = vmatprep.subr.mxu0 0.0
    %1834 = vmatpush1.msra.mxu0 %v1786
    %1835 = vmatprep.subr.mxu0 0.0
    %1836 = vmatpush1.msra.mxu0 %v1788
    %1837 = vmatprep.subr.mxu0 0.0
    %1838 = vmatpush1.msra.mxu0 %v1790
    %1839 = vmatprep.subr.mxu0 0.0
    %1840 = vmatpush1.msra.mxu0 %v1792
    %1841 = vmatprep.subr.mxu0 0.0
    %1842 = vmatpush1.msra.mxu0 %v1794
    %1843 = vmatprep.subr.mxu0 0.0
    %1844 = vmatpush1.msra.mxu0 %v1796
    %1845 = vmatprep.subr.mxu0 0.0
    %1846 = vmatpush1.msra.mxu0 %v1798
    %1847 = vmatprep.subr.mxu0 0.0
    %1848 = vmatpush1.msra.mxu0 %v1800
    %1849 = vmatprep.subr.mxu0 0.0
    %1850 = vmatpush1.msra.mxu0 %v1802
    %1851 = vmatprep.subr.mxu0 0.0
    %1852 = vmatpush1.msra.mxu0 %v1804
    %1853 = vmatprep.subr.mxu0 0.0
    %1854 = vmatpush1.msra.mxu0 %v1806
    %1855 = vmatprep.subr.mxu0 0.0
    %1856 = vmatpush1.msra.mxu0 %v1808
    %1857 = vmatprep.subr.mxu0 0.0
    %1858 = vmatpush1.msra.mxu0 %v1810
    %1859 = vmatprep.subr.mxu0 0.0
    %1860 = vmatpush1.msra.mxu0 0.0
    %1861 = vmatprep.subr.mxu0 0.0
    %1862 = vmatpush1.msra.mxu0 0.0
    %1863 = vmatprep.subr.mxu0 0.0
    %1864 = vmatpush1.msra.mxu0 0.0
    %1865 = vmatprep.subr.mxu0 0.0
    %1866 = vmatpush1.msra.mxu0 0.0
    %1867 = vmatprep.subr.mxu0 0.0
    %1868 = vmatpush1.msra.mxu0 0.0
    %1869 = vmatprep.subr.mxu0 0.0
    %1870 = vmatpush1.msra.mxu0 0.0
    %1871 = vmatprep.subr.mxu0 0.0
    %1872 = vmatpush1.msra.mxu0 0.0
    %1873 = vmatprep.subr.mxu0 0.0
    %1874 = vmatpush1.msra.mxu0 0.0
    %1875 = vmatprep.subr.mxu0 0.0
    %1876 = vmatpush1.msra.mxu0 0.0
    %1877 = vmatprep.subr.mxu0 0.0
    %1878 = vmatpush1.msra.mxu0 0.0
    %1879 = vmatprep.subr.mxu0 0.0
    %1880 = vmatpush1.msra.mxu0 0.0
    %1881 = vmatprep.subr.mxu0 0.0
    %1882 = vmatpush1.msra.mxu0 0.0
    %1883 = vmatprep.subr.mxu0 0.0
    %1884 = vmatpush1.msra.mxu0 0.0
    %1885 = vmatprep.subr.mxu0 0.0
    %1886 = vmatpush1.msra.mxu0 0.0
    %1887 = vmatprep.subr.mxu0 0.0
    %1888 = vmatpush1.msra.mxu0 0.0
    %1889 = vmatprep.subr.mxu0 0.0
    %1890 = vmatpush1.msra.mxu0 0.0
    %1891 = vmatprep.mubr.f32.mxu0 0.0
    %1892 = vmatmul.mubr.f32.gmra.mrb[0].mxu0 %v1756
    %v1893 = vpop.f32.mrb[0].mxu0
    %v1894 = vadd.f32 %v1762, %v1893
    %v1895 = vpop.f32.mrb[0].mxu0
    %1896 = vmatprep.mubr.f32.mxu0 0.0
    %1897 = vmatmul.mubr.f32.gmra.mrb[0].mxu0 %v1757
    %v1898 = vpop.f32.mrb[0].mxu0
    %v1899 = vadd.f32 %v1762, %v1898
    %v1900 = vpop.f32.mrb[0].mxu0
    %1901 = vdwg.mxu0
    %v1902 = vadd.f32 %v1664, %v1894
    %v1903 = vadd.f32 %v1665, %v1899
    %v1904 = vsel %vm183, %v1902, 0.0
    %1905 = vadd.xlane.f32.xlu0 %v1904
    %v1906 = vpop.xlane.xlu0 %1905
    %v1907 = vsel %vm183, %v1903, 0.0
    %1908 = vadd.xlane.f32.xlu0 %v1907
    %v1909 = vpop.xlane.xlu0 %1908
    %v1910 = vmul.f32 %v1906, %v384
    %v1911 = vmul.f32 %v1909, %v384
    %v1912 = vmul.f32 %v1902, %v1902
    %v1913 = vmul.f32 %v1903, %v1903
    %v1914 = vsel %vm183, %v1912, 0.0
    %1915 = vadd.xlane.f32.xlu0 %v1914
    %v1916 = vpop.xlane.xlu0 %1915
    %v1917 = vsel %vm183, %v1913, 0.0
    %1918 = vadd.xlane.f32.xlu0 %v1917
    %v1919 = vpop.xlane.xlu0 %1918
    %v1920 = vmul.f32 %v1916, %v384
    %v1921 = vmul.f32 %v1919, %v384
    %v1922 = vmul.f32 %v1910, %v1910
    %v1923 = vmul.f32 %v1911, %v1911
    %v1924 = vsub.f32 %v1920, %v1922
    %v1925 = vsub.f32 %v1921, %v1923
    %v1926 = vsub.f32 %v1902, %v1910
    %v1927 = vsub.f32 %v1903, %v1911
    %v1928 = vadd.f32 %v1924, 1e-05
    %v1929 = vadd.f32 %v1925, 1e-05
    %v1930 = vrsqrt.pop %v1928
    %v1931 = vrsqrt.pop %v1929
    %v1932 = vmul.f32 %v1926, %v1930
    %v1933 = vmul.f32 %v1927, %v1931
    %1935 = vrot.lane.b32.xlu0 %v1762, 96
    %v1936 = vpop.permute.xlu0 %1935
    %v1938 = vmul.f32 %v1932, %v1936
    %v1939 = vmul.f32 %v1933, %v1936
    %1940 = vrot.lane.b32.xlu0 %v1762, 64
    %v1941 = vpop.permute.xlu0 %1940
    %v1943 = vadd.f32 %v1938, %v1941
    %v1944 = vadd.f32 %v1939, %v1941
    %v1945 = vld [vmem:[#allocation2 + $0xa0] sm:$0xff]
    %v1946 = vld [vmem:[#allocation2 + $0xa8] sm:$0xff]
    %v1947 = vld [vmem:[#allocation2 + $0xb0] sm:$0xff]
    %v1948 = vld [vmem:[#allocation2 + $0xb8] sm:$0xff]
    %v1949 = vld [vmem:[#allocation2 + $0x142] sm:$0x1]
    %v1950 = vlaneseq
    %v1951 = vshrl.u32 %v1950, 7
    %v1952 = vsub.s32 0, %v1951
    %v1953 = vrot.slane %v1949, %v1952
    %v1955 = vsel %vm183, %v1943, 0
    %v1958 = vsel %vm183, %v1944, 0
    %1960 = vmatprep.subr.mxu0 0.0
    %1961 = vmatpush1.msra.mxu0 %v1945
    %1962 = vmatprep.subr.mxu0 0.0
    %1963 = vmatpush1.msra.mxu0 %v1946
    %1964 = vmatprep.subr.mxu0 0.0
    %1965 = vmatpush1.msra.mxu0 %v1947
    %1966 = vmatprep.subr.mxu0 0.0
    %1967 = vmatpush1.msra.mxu0 %v1948
    %1968 = vmatprep.subr.mxu0 0.0
    %1969 = vmatpush1.msra.mxu0 0.0
    %1970 = vmatprep.subr.mxu0 0.0
    %1971 = vmatpush1.msra.mxu0 0.0
    %1972 = vmatprep.subr.mxu0 0.0
    %1973 = vmatpush1.msra.mxu0 0.0
    %1974 = vmatprep.subr.mxu0 0.0
    %1975 = vmatpush1.msra.mxu0 0.0
    %1976 = vmatprep.subr.mxu0 0.0
    %1977 = vmatpush1.msra.mxu0 0.0
    %1978 = vmatprep.subr.mxu0 0.0
    %1979 = vmatpush1.msra.mxu0 0.0
    %1980 = vmatprep.subr.mxu0 0.0
    %1981 = vmatpush1.msra.mxu0 0.0
    %1982 = vmatprep.subr.mxu0 0.0
    %1983 = vmatpush1.msra.mxu0 0.0
    %1984 = vmatprep.subr.mxu0 0.0
    %1985 = vmatpush1.msra.mxu0 0.0
    %1986 = vmatprep.subr.mxu0 0.0
    %1987 = vmatpush1.msra.mxu0 0.0
    %1988 = vmatprep.subr.mxu0 0.0
    %1989 = vmatpush1.msra.mxu0 0.0
    %1990 = vmatprep.subr.mxu0 0.0
    %1991 = vmatpush1.msra.mxu0 0.0
    %1992 = vmatprep.subr.mxu0 0.0
    %1993 = vmatpush1.msra.mxu0 0.0
    %1994 = vmatprep.subr.mxu0 0.0
    %1995 = vmatpush1.msra.mxu0 0.0
    %1996 = vmatprep.subr.mxu0 0.0
    %1997 = vmatpush1.msra.mxu0 0.0
    %1998 = vmatprep.subr.mxu0 0.0
    %1999 = vmatpush1.msra.mxu0 0.0
    %2000 = vmatprep.subr.mxu0 0.0
    %2001 = vmatpush1.msra.mxu0 0.0
    %2002 = vmatprep.subr.mxu0 0.0
    %2003 = vmatpush1.msra.mxu0 0.0
    %2004 = vmatprep.subr.mxu0 0.0
    %2005 = vmatpush1.msra.mxu0 0.0
    %2006 = vmatprep.subr.mxu0 0.0
    %2007 = vmatpush1.msra.mxu0 0.0
    %2008 = vmatprep.subr.mxu0 0.0
    %2009 = vmatpush1.msra.mxu0 0.0
    %2010 = vmatprep.subr.mxu0 0.0
    %2011 = vmatpush1.msra.mxu0 0.0
    %2012 = vmatprep.subr.mxu0 0.0
    %2013 = vmatpush1.msra.mxu0 0.0
    %2014 = vmatprep.subr.mxu0 0.0
    %2015 = vmatpush1.msra.mxu0 0.0
    %2016 = vmatprep.subr.mxu0 0.0
    %2017 = vmatpush1.msra.mxu0 0.0
    %2018 = vmatprep.subr.mxu0 0.0
    %2019 = vmatpush1.msra.mxu0 0.0
    %2020 = vmatprep.subr.mxu0 0.0
    %2021 = vmatpush1.msra.mxu0 0.0
    %2022 = vmatprep.subr.mxu0 0.0
    %2023 = vmatpush1.msra.mxu0 0.0
    %2024 = vmatprep.mubr.f32.mxu0 0.0
    %2025 = vmatmul.mubr.f32.gmra.mrb[0].mxu0 %v1955
    %v2026 = vpop.f32.mrb[0].mxu0
    %v2027 = vadd.f32 %v1953, %v2026
    %v2028 = vpop.f32.mrb[0].mxu0
    %2029 = vmatprep.mubr.f32.mxu0 0.0
    %2030 = vmatmul.mubr.f32.gmra.mrb[0].mxu0 %v1958
    %v2031 = vpop.f32.mrb[0].mxu0
    %v2032 = vadd.f32 %v1953, %v2031
    %v2033 = vpop.f32.mrb[0].mxu0
    %2034 = vdwg.mxu0
    %2037 = vrot.lane.b32.xlu0 %v2027, 96
    %v2038 = vpop.permute.xlu0 %2037
    %2039 = vrot.lane.b32.xlu0 %v2032, 96
    %v2040 = vpop.permute.xlu0 %2039
    %v2041 = vsel %vm699, %v2027, 0
    %v2043 = vsel %vm699, %v2032, 0
    %v2045 = vsel %vm699, %v2038, 0
    %v2047 = vsel %vm699, %v2040, 0
    %2049 = vmatprep.subr.mxu0 0.0
    %2050 = vmatpush1.xpose.msra.mxu0 %v2045
    %2051 = vmatprep.subr.mxu0 0.0
    %2052 = vmatpush1.xpose.msra.mxu0 %v2047
    %2053 = vmatprep.subr.mxu0 0.0
    %2054 = vmatpush1.xpose.msra.mxu0 0.0
    %2055 = vmatprep.subr.mxu0 0.0
    %2056 = vmatpush1.xpose.msra.mxu0 0.0
    %2057 = vmatprep.subr.mxu0 0.0
    %2058 = vmatpush1.xpose.msra.mxu0 0.0
    %2059 = vmatprep.subr.mxu0 0.0
    %2060 = vmatpush1.xpose.msra.mxu0 0.0
    %2061 = vmatprep.subr.mxu0 0.0
    %2062 = vmatpush1.xpose.msra.mxu0 0.0
    %2063 = vmatprep.subr.mxu0 0.0
    %2064 = vmatpush1.xpose.msra.mxu0 0.0
    %2065 = vmatprep.subr.mxu0 0.0
    %2066 = vmatpush1.xpose.msra.mxu0 0.0
    %2067 = vmatprep.subr.mxu0 0.0
    %2068 = vmatpush1.xpose.msra.mxu0 0.0
    %2069 = vmatprep.subr.mxu0 0.0
    %2070 = vmatpush1.xpose.msra.mxu0 0.0
    %2071 = vmatprep.subr.mxu0 0.0
    %2072 = vmatpush1.xpose.msra.mxu0 0.0
    %2073 = vmatprep.subr.mxu0 0.0
    %2074 = vmatpush1.xpose.msra.mxu0 0.0
    %2075 = vmatprep.subr.mxu0 0.0
    %2076 = vmatpush1.xpose.msra.mxu0 0.0
    %2077 = vmatprep.subr.mxu0 0.0
    %2078 = vmatpush1.xpose.msra.mxu0 0.0
    %2079 = vmatprep.subr.mxu0 0.0
    %2080 = vmatpush1.xpose.msra.mxu0 0.0
    %2081 = vmatprep.subr.mxu0 0.0
    %2082 = vmatpush1.xpose.msra.mxu0 0.0
    %2083 = vmatprep.subr.mxu0 0.0
    %2084 = vmatpush1.xpose.msra.mxu0 0.0
    %2085 = vmatprep.subr.mxu0 0.0
    %2086 = vmatpush1.xpose.msra.mxu0 0.0
    %2087 = vmatprep.subr.mxu0 0.0
    %2088 = vmatpush1.xpose.msra.mxu0 0.0
    %2089 = vmatprep.subr.mxu0 0.0
    %2090 = vmatpush1.xpose.msra.mxu0 0.0
    %2091 = vmatprep.subr.mxu0 0.0
    %2092 = vmatpush1.xpose.msra.mxu0 0.0
    %2093 = vmatprep.subr.mxu0 0.0
    %2094 = vmatpush1.xpose.msra.mxu0 0.0
    %2095 = vmatprep.subr.mxu0 0.0
    %2096 = vmatpush1.xpose.msra.mxu0 0.0
    %2097 = vmatprep.subr.mxu0 0.0
    %2098 = vmatpush1.xpose.msra.mxu0 0.0
    %2099 = vmatprep.subr.mxu0 0.0
    %2100 = vmatpush1.xpose.msra.mxu0 0.0
    %2101 = vmatprep.subr.mxu0 0.0
    %2102 = vmatpush1.xpose.msra.mxu0 0.0
    %2103 = vmatprep.subr.mxu0 0.0
    %2104 = vmatpush1.xpose.msra.mxu0 0.0
    %2105 = vmatprep.subr.mxu0 0.0
    %2106 = vmatpush1.xpose.msra.mxu0 0.0
    %2107 = vmatprep.subr.mxu0 0.0
    %2108 = vmatpush1.xpose.msra.mxu0 0.0
    %2109 = vmatprep.subr.mxu0 0.0
    %2110 = vmatpush1.xpose.msra.mxu0 0.0
    %2111 = vmatprep.subr.mxu0 0.0
    %2112 = vmatpush1.xpose.msra.mxu0 0.0
    %2113 = vmatprep.mubr.f32.mxu0 0.0
    %2114 = vmatmul.mubr.f32.gmra.mrb[0].mxu0 %v2041
    %v2115 = vpop.f32.mrb[0].mxu0
    %v2116 = vadd.f32 %v280, %v2115
    %v2117 = vpop.f32.mrb[0].mxu0
    %2118 = vmatprep.mubr.f32.mxu0 0.0
    %2119 = vmatmul.mubr.f32.gmra.mrb[0].mxu0 %v2043
    %v2120 = vpop.f32.mrb[0].mxu0
    %v2121 = vadd.f32 %v281, %v2120
    %v2122 = vpop.f32.mrb[0].mxu0
    %2123 = vdwg.mxu0
    %v2124 = vsel %vm101, %v2116, -inf
    %2125 = vmax.xlane.f32.xlu0 %v2124
    %v2126 = vpop.xlane.xlu0 %2125
    %v2127 = vsel %vm101, %v2121, -inf
    %2128 = vmax.xlane.f32.xlu0 %v2127
    %v2129 = vpop.xlane.xlu0 %2128
    %v2130 = vsub.f32 %v2116, %v2126
    %v2131 = vsub.f32 %v2121, %v2129
    %v2132 = vmul.f32 %v2130, 1.442695
    %v2133 = vpow.pop %v2132
    %v2134 = vmul.f32 %v2131, 1.442695
    %v2135 = vpow.pop %v2134
    %v2136 = vsel %vm101, %v2133, 0.0
    %2137 = vadd.xlane.f32.xlu0 %v2136
    %v2138 = vpop.xlane.xlu0 %2137
    %v2139 = vsel %vm101, %v2135, 0.0
    %2140 = vadd.xlane.f32.xlu0 %v2139
    %v2141 = vpop.xlane.xlu0 %2140
    %v2142 = vrcp.pop %v2138
    %v2143 = vrcp.pop %v2141
    %v2144 = vmul.f32 %v2133, %v2142
    %v2145 = vmul.f32 %v2135, %v2143
    %2146 = vrot.lane.b32.xlu0 %v2027, 64
    %v2147 = vpop.permute.xlu0 %2146
    %2148 = vrot.lane.b32.xlu0 %v2032, 64
    %v2149 = vpop.permute.xlu0 %2148
    %v2153 = vsel %vm101, %v2144, 0
    %v2156 = vsel %vm101, %v2145, 0
    %2158 = vmatprep.subr.mxu0 0.0
    %2159 = vmatpush1.msra.mxu0 %v2147
    %2160 = vmatprep.subr.mxu0 0.0
    %2161 = vmatpush1.msra.mxu0 %v2149
    %2162 = vmatprep.subr.mxu0 0.0
    %2163 = vmatpush1.msra.mxu0 0.0
    %2164 = vmatprep.subr.mxu0 0.0
    %2165 = vmatpush1.msra.mxu0 0.0
    %2166 = vmatprep.subr.mxu0 0.0
    %2167 = vmatpush1.msra.mxu0 0.0
    %2168 = vmatprep.subr.mxu0 0.0
    %2169 = vmatpush1.msra.mxu0 0.0
    %2170 = vmatprep.subr.mxu0 0.0
    %2171 = vmatpush1.msra.mxu0 0.0
    %2172 = vmatprep.subr.mxu0 0.0
    %2173 = vmatpush1.msra.mxu0 0.0
    %2174 = vmatprep.subr.mxu0 0.0
    %2175 = vmatpush1.msra.mxu0 0.0
    %2176 = vmatprep.subr.mxu0 0.0
    %2177 = vmatpush1.msra.mxu0 0.0
    %2178 = vmatprep.subr.mxu0 0.0
    %2179 = vmatpush1.msra.mxu0 0.0
    %2180 = vmatprep.subr.mxu0 0.0
    %2181 = vmatpush1.msra.mxu0 0.0
    %2182 = vmatprep.subr.mxu0 0.0
    %2183 = vmatpush1.msra.mxu0 0.0
    %2184 = vmatprep.subr.mxu0 0.0
    %2185 = vmatpush1.msra.mxu0 0.0
    %2186 = vmatprep.subr.mxu0 0.0
    %2187 = vmatpush1.msra.mxu0 0.0
    %2188 = vmatprep.subr.mxu0 0.0
    %2189 = vmatpush1.msra.mxu0 0.0
    %2190 = vmatprep.subr.mxu0 0.0
    %2191 = vmatpush1.msra.mxu0 0.0
    %2192 = vmatprep.subr.mxu0 0.0
    %2193 = vmatpush1.msra.mxu0 0.0
    %2194 = vmatprep.subr.mxu0 0.0
    %2195 = vmatpush1.msra.mxu0 0.0
    %2196 = vmatprep.subr.mxu0 0.0
    %2197 = vmatpush1.msra.mxu0 0.0
    %2198 = vmatprep.subr.mxu0 0.0
    %2199 = vmatpush1.msra.mxu0 0.0
    %2200 = vmatprep.subr.mxu0 0.0
    %2201 = vmatpush1.msra.mxu0 0.0
    %2202 = vmatprep.subr.mxu0 0.0
    %2203 = vmatpush1.msra.mxu0 0.0
    %2204 = vmatprep.subr.mxu0 0.0
    %2205 = vmatpush1.msra.mxu0 0.0
    %2206 = vmatprep.subr.mxu0 0.0
    %2207 = vmatpush1.msra.mxu0 0.0
    %2208 = vmatprep.subr.mxu0 0.0
    %2209 = vmatpush1.msra.mxu0 0.0
    %2210 = vmatprep.subr.mxu0 0.0
    %2211 = vmatpush1.msra.mxu0 0.0
    %2212 = vmatprep.subr.mxu0 0.0
    %2213 = vmatpush1.msra.mxu0 0.0
    %2214 = vmatprep.subr.mxu0 0.0
    %2215 = vmatpush1.msra.mxu0 0.0
    %2216 = vmatprep.subr.mxu0 0.0
    %2217 = vmatpush1.msra.mxu0 0.0
    %2218 = vmatprep.subr.mxu0 0.0
    %2219 = vmatpush1.msra.mxu0 0.0
    %2220 = vmatprep.subr.mxu0 0.0
    %2221 = vmatpush1.msra.mxu0 0.0
    %2222 = vmatprep.mubr.f32.mxu0 0.0
    %2223 = vmatmul.mubr.f32.gmra.mrb[0].mxu0 %v2153
    %v2224 = vpop.f32.mrb[0].mxu0
    %v2225 = vadd.f32 0.0, %v2224
    %v2226 = vpop.f32.mrb[0].mxu0
    %2227 = vmatprep.mubr.f32.mxu0 0.0
    %2228 = vmatmul.mubr.f32.gmra.mrb[0].mxu0 %v2156
    %v2229 = vpop.f32.mrb[0].mxu0
    %v2230 = vadd.f32 0.0, %v2229
    %v2231 = vpop.f32.mrb[0].mxu0
    %2232 = vdwg.mxu0
    %2233 = vrot.lane.b32.xlu0 %v2027, 120
    %v2234 = vpop.permute.xlu0 %2233
    %2235 = vrot.lane.b32.xlu0 %v2032, 120
    %v2236 = vpop.permute.xlu0 %2235
    %2237 = vrot.lane.b32.xlu0 %v2027, 88
    %v2238 = vpop.permute.xlu0 %2237
    %2239 = vrot.lane.b32.xlu0 %v2032, 88
    %v2240 = vpop.permute.xlu0 %2239
    %v2241 = vsel %vm699, %v2234, 0
    %v2243 = vsel %vm699, %v2236, 0
    %v2245 = vsel %vm699, %v2238, 0
    %v2247 = vsel %vm699, %v2240, 0
    %2249 = vmatprep.subr.mxu0 0.0
    %2250 = vmatpush1.xpose.msra.mxu0 %v2245
    %2251 = vmatprep.subr.mxu0 0.0
    %2252 = vmatpush1.xpose.msra.mxu0 %v2247
    %2253 = vmatprep.subr.mxu0 0.0
    %2254 = vmatpush1.xpose.msra.mxu0 0.0
    %2255 = vmatprep.subr.mxu0 0.0
    %2256 = vmatpush1.xpose.msra.mxu0 0.0
    %2257 = vmatprep.subr.mxu0 0.0
    %2258 = vmatpush1.xpose.msra.mxu0 0.0
    %2259 = vmatprep.subr.mxu0 0.0
    %2260 = vmatpush1.xpose.msra.mxu0 0.0
    %2261 = vmatprep.subr.mxu0 0.0
    %2262 = vmatpush1.xpose.msra.mxu0 0.0
    %2263 = vmatprep.subr.mxu0 0.0
    %2264 = vmatpush1.xpose.msra.mxu0 0.0
    %2265 = vmatprep.subr.mxu0 0.0
    %2266 = vmatpush1.xpose.msra.mxu0 0.0
    %2267 = vmatprep.subr.mxu0 0.0
    %2268 = vmatpush1.xpose.msra.mxu0 0.0
    %2269 = vmatprep.subr.mxu0 0.0
    %2270 = vmatpush1.xpose.msra.mxu0 0.0
    %2271 = vmatprep.subr.mxu0 0.0
    %2272 = vmatpush1.xpose.msra.mxu0 0.0
    %2273 = vmatprep.subr.mxu0 0.0
    %2274 = vmatpush1.xpose.msra.mxu0 0.0
    %2275 = vmatprep.subr.mxu0 0.0
    %2276 = vmatpush1.xpose.msra.mxu0 0.0
    %2277 = vmatprep.subr.mxu0 0.0
    %2278 = vmatpush1.xpose.msra.mxu0 0.0
    %2279 = vmatprep.subr.mxu0 0.0
    %2280 = vmatpush1.xpose.msra.mxu0 0.0
    %2281 = vmatprep.subr.mxu0 0.0
    %2282 = vmatpush1.xpose.msra.mxu0 0.0
    %2283 = vmatprep.subr.mxu0 0.0
    %2284 = vmatpush1.xpose.msra.mxu0 0.0
    %2285 = vmatprep.subr.mxu0 0.0
    %2286 = vmatpush1.xpose.msra.mxu0 0.0
    %2287 = vmatprep.subr.mxu0 0.0
    %2288 = vmatpush1.xpose.msra.mxu0 0.0
    %2289 = vmatprep.subr.mxu0 0.0
    %2290 = vmatpush1.xpose.msra.mxu0 0.0
    %2291 = vmatprep.subr.mxu0 0.0
    %2292 = vmatpush1.xpose.msra.mxu0 0.0
    %2293 = vmatprep.subr.mxu0 0.0
    %2294 = vmatpush1.xpose.msra.mxu0 0.0
    %2295 = vmatprep.subr.mxu0 0.0
    %2296 = vmatpush1.xpose.msra.mxu0 0.0
    %2297 = vmatprep.subr.mxu0 0.0
    %2298 = vmatpush1.xpose.msra.mxu0 0.0
    %2299 = vmatprep.subr.mxu0 0.0
    %2300 = vmatpush1.xpose.msra.mxu0 0.0
    %2301 = vmatprep.subr.mxu0 0.0
    %2302 = vmatpush1.xpose.msra.mxu0 0.0
    %2303 = vmatprep.subr.mxu0 0.0
    %2304 = vmatpush1.xpose.msra.mxu0 0.0
    %2305 = vmatprep.subr.mxu0 0.0
    %2306 = vmatpush1.xpose.msra.mxu0 0.0
    %2307 = vmatprep.subr.mxu0 0.0
    %2308 = vmatpush1.xpose.msra.mxu0 0.0
    %2309 = vmatprep.subr.mxu0 0.0
    %2310 = vmatpush1.xpose.msra.mxu0 0.0
    %2311 = vmatprep.subr.mxu0 0.0
    %2312 = vmatpush1.xpose.msra.mxu0 0.0
    %2313 = vmatprep.mubr.f32.mxu0 0.0
    %2314 = vmatmul.mubr.f32.gmra.mrb[0].mxu0 %v2241
    %v2315 = vpop.f32.mrb[0].mxu0
    %v2316 = vadd.f32 %v280, %v2315
    %v2317 = vpop.f32.mrb[0].mxu0
    %2318 = vmatprep.mubr.f32.mxu0 0.0
    %2319 = vmatmul.mubr.f32.gmra.mrb[0].mxu0 %v2243
    %v2320 = vpop.f32.mrb[0].mxu0
    %v2321 = vadd.f32 %v281, %v2320
    %v2322 = vpop.f32.mrb[0].mxu0
    %2323 = vdwg.mxu0
    %v2324 = vsel %vm101, %v2316, -inf
    %2325 = vmax.xlane.f32.xlu0 %v2324
    %v2326 = vpop.xlane.xlu0 %2325
    %v2327 = vsel %vm101, %v2321, -inf
    %2328 = vmax.xlane.f32.xlu0 %v2327
    %v2329 = vpop.xlane.xlu0 %2328
    %v2330 = vsub.f32 %v2316, %v2326
    %v2331 = vsub.f32 %v2321, %v2329
    %v2332 = vmul.f32 %v2330, 1.442695
    %v2333 = vpow.pop %v2332
    %v2334 = vmul.f32 %v2331, 1.442695
    %v2335 = vpow.pop %v2334
    %v2336 = vsel %vm101, %v2333, 0.0
    %2337 = vadd.xlane.f32.xlu0 %v2336
    %v2338 = vpop.xlane.xlu0 %2337
    %v2339 = vsel %vm101, %v2335, 0.0
    %2340 = vadd.xlane.f32.xlu0 %v2339
    %v2341 = vpop.xlane.xlu0 %2340
    %v2342 = vrcp.pop %v2338
    %v2343 = vrcp.pop %v2341
    %v2344 = vmul.f32 %v2333, %v2342
    %v2345 = vmul.f32 %v2335, %v2343
    %2346 = vrot.lane.b32.xlu0 %v2027, 56
    %v2347 = vpop.permute.xlu0 %2346
    %2348 = vrot.lane.b32.xlu0 %v2032, 56
    %v2349 = vpop.permute.xlu0 %2348
    %v2353 = vsel %vm101, %v2344, 0
    %v2356 = vsel %vm101, %v2345, 0
    %2358 = vmatprep.subr.mxu0 0.0
    %2359 = vmatpush1.msra.mxu0 %v2347
    %2360 = vmatprep.subr.mxu0 0.0
    %2361 = vmatpush1.msra.mxu0 %v2349
    %2362 = vmatprep.subr.mxu0 0.0
    %2363 = vmatpush1.msra.mxu0 0.0
    %2364 = vmatprep.subr.mxu0 0.0
    %2365 = vmatpush1.msra.mxu0 0.0
    %2366 = vmatprep.subr.mxu0 0.0
    %2367 = vmatpush1.msra.mxu0 0.0
    %2368 = vmatprep.subr.mxu0 0.0
    %2369 = vmatpush1.msra.mxu0 0.0
    %2370 = vmatprep.subr.mxu0 0.0
    %2371 = vmatpush1.msra.mxu0 0.0
    %2372 = vmatprep.subr.mxu0 0.0
    %2373 = vmatpush1.msra.mxu0 0.0
    %2374 = vmatprep.subr.mxu0 0.0
    %2375 = vmatpush1.msra.mxu0 0.0
    %2376 = vmatprep.subr.mxu0 0.0
    %2377 = vmatpush1.msra.mxu0 0.0
    %2378 = vmatprep.subr.mxu0 0.0
    %2379 = vmatpush1.msra.mxu0 0.0
    %2380 = vmatprep.subr.mxu0 0.0
    %2381 = vmatpush1.msra.mxu0 0.0
    %2382 = vmatprep.subr.mxu0 0.0
    %2383 = vmatpush1.msra.mxu0 0.0
    %2384 = vmatprep.subr.mxu0 0.0
    %2385 = vmatpush1.msra.mxu0 0.0
    %2386 = vmatprep.subr.mxu0 0.0
    %2387 = vmatpush1.msra.mxu0 0.0
    %2388 = vmatprep.subr.mxu0 0.0
    %2389 = vmatpush1.msra.mxu0 0.0
    %2390 = vmatprep.subr.mxu0 0.0
    %2391 = vmatpush1.msra.mxu0 0.0
    %2392 = vmatprep.subr.mxu0 0.0
    %2393 = vmatpush1.msra.mxu0 0.0
    %2394 = vmatprep.subr.mxu0 0.0
    %2395 = vmatpush1.msra.mxu0 0.0
    %2396 = vmatprep.subr.mxu0 0.0
    %2397 = vmatpush1.msra.mxu0 0.0
    %2398 = vmatprep.subr.mxu0 0.0
    %2399 = vmatpush1.msra.mxu0 0.0
    %2400 = vmatprep.subr.mxu0 0.0
    %2401 = vmatpush1.msra.mxu0 0.0
    %2402 = vmatprep.subr.mxu0 0.0
    %2403 = vmatpush1.msra.mxu0 0.0
    %2404 = vmatprep.subr.mxu0 0.0
    %2405 = vmatpush1.msra.mxu0 0.0
    %2406 = vmatprep.subr.mxu0 0.0
    %2407 = vmatpush1.msra.mxu0 0.0
    %2408 = vmatprep.subr.mxu0 0.0
    %2409 = vmatpush1.msra.mxu0 0.0
    %2410 = vmatprep.subr.mxu0 0.0
    %2411 = vmatpush1.msra.mxu0 0.0
    %2412 = vmatprep.subr.mxu0 0.0
    %2413 = vmatpush1.msra.mxu0 0.0
    %2414 = vmatprep.subr.mxu0 0.0
    %2415 = vmatpush1.msra.mxu0 0.0
    %2416 = vmatprep.subr.mxu0 0.0
    %2417 = vmatpush1.msra.mxu0 0.0
    %2418 = vmatprep.subr.mxu0 0.0
    %2419 = vmatpush1.msra.mxu0 0.0
    %2420 = vmatprep.subr.mxu0 0.0
    %2421 = vmatpush1.msra.mxu0 0.0
    %2422 = vmatprep.mubr.f32.mxu0 0.0
    %2423 = vmatmul.mubr.f32.gmra.mrb[0].mxu0 %v2353
    %v2424 = vpop.f32.mrb[0].mxu0
    %v2425 = vadd.f32 0.0, %v2424
    %v2426 = vpop.f32.mrb[0].mxu0
    %2427 = vmatprep.mubr.f32.mxu0 0.0
    %2428 = vmatmul.mubr.f32.gmra.mrb[0].mxu0 %v2356
    %v2429 = vpop.f32.mrb[0].mxu0
    %v2430 = vadd.f32 0.0, %v2429
    %v2431 = vpop.f32.mrb[0].mxu0
    %2432 = vdwg.mxu0
    %2433 = vrot.lane.b32.xlu0 %v2027, 112
    %v2434 = vpop.permute.xlu0 %2433
    %2435 = vrot.lane.b32.xlu0 %v2032, 112
    %v2436 = vpop.permute.xlu0 %2435
    %2437 = vrot.lane.b32.xlu0 %v2027, 80
    %v2438 = vpop.permute.xlu0 %2437
    %2439 = vrot.lane.b32.xlu0 %v2032, 80
    %v2440 = vpop.permute.xlu0 %2439
    %v2441 = vsel %vm699, %v2434, 0
    %v2443 = vsel %vm699, %v2436, 0
    %v2445 = vsel %vm699, %v2438, 0
    %v2447 = vsel %vm699, %v2440, 0
    %2449 = vmatprep.subr.mxu0 0.0
    %2450 = vmatpush1.xpose.msra.mxu0 %v2445
    %2451 = vmatprep.subr.mxu0 0.0
    %2452 = vmatpush1.xpose.msra.mxu0 %v2447
    %2453 = vmatprep.subr.mxu0 0.0
    %2454 = vmatpush1.xpose.msra.mxu0 0.0
    %2455 = vmatprep.subr.mxu0 0.0
    %2456 = vmatpush1.xpose.msra.mxu0 0.0
    %2457 = vmatprep.subr.mxu0 0.0
    %2458 = vmatpush1.xpose.msra.mxu0 0.0
    %2459 = vmatprep.subr.mxu0 0.0
    %2460 = vmatpush1.xpose.msra.mxu0 0.0
    %2461 = vmatprep.subr.mxu0 0.0
    %2462 = vmatpush1.xpose.msra.mxu0 0.0
    %2463 = vmatprep.subr.mxu0 0.0
    %2464 = vmatpush1.xpose.msra.mxu0 0.0
    %2465 = vmatprep.subr.mxu0 0.0
    %2466 = vmatpush1.xpose.msra.mxu0 0.0
    %2467 = vmatprep.subr.mxu0 0.0
    %2468 = vmatpush1.xpose.msra.mxu0 0.0
    %2469 = vmatprep.subr.mxu0 0.0
    %2470 = vmatpush1.xpose.msra.mxu0 0.0
    %2471 = vmatprep.subr.mxu0 0.0
    %2472 = vmatpush1.xpose.msra.mxu0 0.0
    %2473 = vmatprep.subr.mxu0 0.0
    %2474 = vmatpush1.xpose.msra.mxu0 0.0
    %2475 = vmatprep.subr.mxu0 0.0
    %2476 = vmatpush1.xpose.msra.mxu0 0.0
    %2477 = vmatprep.subr.mxu0 0.0
    %2478 = vmatpush1.xpose.msra.mxu0 0.0
    %2479 = vmatprep.subr.mxu0 0.0
    %2480 = vmatpush1.xpose.msra.mxu0 0.0
    %2481 = vmatprep.subr.mxu0 0.0
    %2482 = vmatpush1.xpose.msra.mxu0 0.0
    %2483 = vmatprep.subr.mxu0 0.0
    %2484 = vmatpush1.xpose.msra.mxu0 0.0
    %2485 = vmatprep.subr.mxu0 0.0
    %2486 = vmatpush1.xpose.msra.mxu0 0.0
    %2487 = vmatprep.subr.mxu0 0.0
    %2488 = vmatpush1.xpose.msra.mxu0 0.0
    %2489 = vmatprep.subr.mxu0 0.0
    %2490 = vmatpush1.xpose.msra.mxu0 0.0
    %2491 = vmatprep.subr.mxu0 0.0
    %2492 = vmatpush1.xpose.msra.mxu0 0.0
    %2493 = vmatprep.subr.mxu0 0.0
    %2494 = vmatpush1.xpose.msra.mxu0 0.0
    %2495 = vmatprep.subr.mxu0 0.0
    %2496 = vmatpush1.xpose.msra.mxu0 0.0
    %2497 = vmatprep.subr.mxu0 0.0
    %2498 = vmatpush1.xpose.msra.mxu0 0.0
    %2499 = vmatprep.subr.mxu0 0.0
    %2500 = vmatpush1.xpose.msra.mxu0 0.0
    %2501 = vmatprep.subr.mxu0 0.0
    %2502 = vmatpush1.xpose.msra.mxu0 0.0
    %2503 = vmatprep.subr.mxu0 0.0
    %2504 = vmatpush1.xpose.msra.mxu0 0.0
    %2505 = vmatprep.subr.mxu0 0.0
    %2506 = vmatpush1.xpose.msra.mxu0 0.0
    %2507 = vmatprep.subr.mxu0 0.0
    %2508 = vmatpush1.xpose.msra.mxu0 0.0
    %2509 = vmatprep.subr.mxu0 0.0
    %2510 = vmatpush1.xpose.msra.mxu0 0.0
    %2511 = vmatprep.subr.mxu0 0.0
    %2512 = vmatpush1.xpose.msra.mxu0 0.0
    %2513 = vmatprep.mubr.f32.mxu0 0.0
    %2514 = vmatmul.mubr.f32.gmra.mrb[0].mxu0 %v2441
    %v2515 = vpop.f32.mrb[0].mxu0
    %v2516 = vadd.f32 %v280, %v2515
    %v2517 = vpop.f32.mrb[0].mxu0
    %2518 = vmatprep.mubr.f32.mxu0 0.0
    %2519 = vmatmul.mubr.f32.gmra.mrb[0].mxu0 %v2443
    %v2520 = vpop.f32.mrb[0].mxu0
    %v2521 = vadd.f32 %v281, %v2520
    %v2522 = vpop.f32.mrb[0].mxu0
    %2523 = vdwg.mxu0
    %v2524 = vsel %vm101, %v2516, -inf
    %2525 = vmax.xlane.f32.xlu0 %v2524
    %v2526 = vpop.xlane.xlu0 %2525
    %v2527 = vsel %vm101, %v2521, -inf
    %2528 = vmax.xlane.f32.xlu0 %v2527
    %v2529 = vpop.xlane.xlu0 %2528
    %v2530 = vsub.f32 %v2516, %v2526
    %v2531 = vsub.f32 %v2521, %v2529
    %v2532 = vmul.f32 %v2530, 1.442695
    %v2533 = vpow.pop %v2532
    %v2534 = vmul.f32 %v2531, 1.442695
    %v2535 = vpow.pop %v2534
    %v2536 = vsel %vm101, %v2533, 0.0
    %2537 = vadd.xlane.f32.xlu0 %v2536
    %v2538 = vpop.xlane.xlu0 %2537
    %v2539 = vsel %vm101, %v2535, 0.0
    %2540 = vadd.xlane.f32.xlu0 %v2539
    %v2541 = vpop.xlane.xlu0 %2540
    %v2542 = vrcp.pop %v2538
    %v2543 = vrcp.pop %v2541
    %v2544 = vmul.f32 %v2533, %v2542
    %v2545 = vmul.f32 %v2535, %v2543
    %2546 = vrot.lane.b32.xlu0 %v2027, 48
    %v2547 = vpop.permute.xlu0 %2546
    %2548 = vrot.lane.b32.xlu0 %v2032, 48
    %v2549 = vpop.permute.xlu0 %2548
    %v2553 = vsel %vm101, %v2544, 0
    %v2556 = vsel %vm101, %v2545, 0
    %2558 = vmatprep.subr.mxu0 0.0
    %2559 = vmatpush1.msra.mxu0 %v2547
    %2560 = vmatprep.subr.mxu0 0.0
    %2561 = vmatpush1.msra.mxu0 %v2549
    %2562 = vmatprep.subr.mxu0 0.0
    %2563 = vmatpush1.msra.mxu0 0.0
    %2564 = vmatprep.subr.mxu0 0.0
    %2565 = vmatpush1.msra.mxu0 0.0
    %2566 = vmatprep.subr.mxu0 0.0
    %2567 = vmatpush1.msra.mxu0 0.0
    %2568 = vmatprep.subr.mxu0 0.0
    %2569 = vmatpush1.msra.mxu0 0.0
    %2570 = vmatprep.subr.mxu0 0.0
    %2571 = vmatpush1.msra.mxu0 0.0
    %2572 = vmatprep.subr.mxu0 0.0
    %2573 = vmatpush1.msra.mxu0 0.0
    %2574 = vmatprep.subr.mxu0 0.0
    %2575 = vmatpush1.msra.mxu0 0.0
    %2576 = vmatprep.subr.mxu0 0.0
    %2577 = vmatpush1.msra.mxu0 0.0
    %2578 = vmatprep.subr.mxu0 0.0
    %2579 = vmatpush1.msra.mxu0 0.0
    %2580 = vmatprep.subr.mxu0 0.0
    %2581 = vmatpush1.msra.mxu0 0.0
    %2582 = vmatprep.subr.mxu0 0.0
    %2583 = vmatpush1.msra.mxu0 0.0
    %2584 = vmatprep.subr.mxu0 0.0
    %2585 = vmatpush1.msra.mxu0 0.0
    %2586 = vmatprep.subr.mxu0 0.0
    %2587 = vmatpush1.msra.mxu0 0.0
    %2588 = vmatprep.subr.mxu0 0.0
    %2589 = vmatpush1.msra.mxu0 0.0
    %2590 = vmatprep.subr.mxu0 0.0
    %2591 = vmatpush1.msra.mxu0 0.0
    %2592 = vmatprep.subr.mxu0 0.0
    %2593 = vmatpush1.msra.mxu0 0.0
    %2594 = vmatprep.subr.mxu0 0.0
    %2595 = vmatpush1.msra.mxu0 0.0
    %2596 = vmatprep.subr.mxu0 0.0
    %2597 = vmatpush1.msra.mxu0 0.0
    %2598 = vmatprep.subr.mxu0 0.0
    %2599 = vmatpush1.msra.mxu0 0.0
    %2600 = vmatprep.subr.mxu0 0.0
    %2601 = vmatpush1.msra.mxu0 0.0
    %2602 = vmatprep.subr.mxu0 0.0
    %2603 = vmatpush1.msra.mxu0 0.0
    %2604 = vmatprep.subr.mxu0 0.0
    %2605 = vmatpush1.msra.mxu0 0.0
    %2606 = vmatprep.subr.mxu0 0.0
    %2607 = vmatpush1.msra.mxu0 0.0
    %2608 = vmatprep.subr.mxu0 0.0
    %2609 = vmatpush1.msra.mxu0 0.0
    %2610 = vmatprep.subr.mxu0 0.0
    %2611 = vmatpush1.msra.mxu0 0.0
    %2612 = vmatprep.subr.mxu0 0.0
    %2613 = vmatpush1.msra.mxu0 0.0
    %2614 = vmatprep.subr.mxu0 0.0
    %2615 = vmatpush1.msra.mxu0 0.0
    %2616 = vmatprep.subr.mxu0 0.0
    %2617 = vmatpush1.msra.mxu0 0.0
    %2618 = vmatprep.subr.mxu0 0.0
    %2619 = vmatpush1.msra.mxu0 0.0
    %2620 = vmatprep.subr.mxu0 0.0
    %2621 = vmatpush1.msra.mxu0 0.0
    %2622 = vmatprep.mubr.f32.mxu0 0.0
    %2623 = vmatmul.mubr.f32.gmra.mrb[0].mxu0 %v2553
    %v2624 = vpop.f32.mrb[0].mxu0
    %v2625 = vadd.f32 0.0, %v2624
    %v2626 = vpop.f32.mrb[0].mxu0
    %2627 = vmatprep.mubr.f32.mxu0 0.0
    %2628 = vmatmul.mubr.f32.gmra.mrb[0].mxu0 %v2556
    %v2629 = vpop.f32.mrb[0].mxu0
    %v2630 = vadd.f32 0.0, %v2629
    %v2631 = vpop.f32.mrb[0].mxu0
    %2632 = vdwg.mxu0
    %2633 = vrot.lane.b32.xlu0 %v2027, 104
    %v2634 = vpop.permute.xlu0 %2633
    %2635 = vrot.lane.b32.xlu0 %v2032, 104
    %v2636 = vpop.permute.xlu0 %2635
    %2637 = vrot.lane.b32.xlu0 %v2027, 72
    %v2638 = vpop.permute.xlu0 %2637
    %2639 = vrot.lane.b32.xlu0 %v2032, 72
    %v2640 = vpop.permute.xlu0 %2639
    %v2641 = vsel %vm699, %v2634, 0
    %v2643 = vsel %vm699, %v2636, 0
    %v2645 = vsel %vm699, %v2638, 0
    %v2647 = vsel %vm699, %v2640, 0
    %2649 = vmatprep.subr.mxu0 0.0
    %2650 = vmatpush1.xpose.msra.mxu0 %v2645
    %2651 = vmatprep.subr.mxu0 0.0
    %2652 = vmatpush1.xpose.msra.mxu0 %v2647
    %2653 = vmatprep.subr.mxu0 0.0
    %2654 = vmatpush1.xpose.msra.mxu0 0.0
    %2655 = vmatprep.subr.mxu0 0.0
    %2656 = vmatpush1.xpose.msra.mxu0 0.0
    %2657 = vmatprep.subr.mxu0 0.0
    %2658 = vmatpush1.xpose.msra.mxu0 0.0
    %2659 = vmatprep.subr.mxu0 0.0
    %2660 = vmatpush1.xpose.msra.mxu0 0.0
    %2661 = vmatprep.subr.mxu0 0.0
    %2662 = vmatpush1.xpose.msra.mxu0 0.0
    %2663 = vmatprep.subr.mxu0 0.0
    %2664 = vmatpush1.xpose.msra.mxu0 0.0
    %2665 = vmatprep.subr.mxu0 0.0
    %2666 = vmatpush1.xpose.msra.mxu0 0.0
    %2667 = vmatprep.subr.mxu0 0.0
    %2668 = vmatpush1.xpose.msra.mxu0 0.0
    %2669 = vmatprep.subr.mxu0 0.0
    %2670 = vmatpush1.xpose.msra.mxu0 0.0
    %2671 = vmatprep.subr.mxu0 0.0
    %2672 = vmatpush1.xpose.msra.mxu0 0.0
    %2673 = vmatprep.subr.mxu0 0.0
    %2674 = vmatpush1.xpose.msra.mxu0 0.0
    %2675 = vmatprep.subr.mxu0 0.0
    %2676 = vmatpush1.xpose.msra.mxu0 0.0
    %2677 = vmatprep.subr.mxu0 0.0
    %2678 = vmatpush1.xpose.msra.mxu0 0.0
    %2679 = vmatprep.subr.mxu0 0.0
    %2680 = vmatpush1.xpose.msra.mxu0 0.0
    %2681 = vmatprep.subr.mxu0 0.0
    %2682 = vmatpush1.xpose.msra.mxu0 0.0
    %2683 = vmatprep.subr.mxu0 0.0
    %2684 = vmatpush1.xpose.msra.mxu0 0.0
    %2685 = vmatprep.subr.mxu0 0.0
    %2686 = vmatpush1.xpose.msra.mxu0 0.0
    %2687 = vmatprep.subr.mxu0 0.0
    %2688 = vmatpush1.xpose.msra.mxu0 0.0
    %2689 = vmatprep.subr.mxu0 0.0
    %2690 = vmatpush1.xpose.msra.mxu0 0.0
    %2691 = vmatprep.subr.mxu0 0.0
    %2692 = vmatpush1.xpose.msra.mxu0 0.0
    %2693 = vmatprep.subr.mxu0 0.0
    %2694 = vmatpush1.xpose.msra.mxu0 0.0
    %2695 = vmatprep.subr.mxu0 0.0
    %2696 = vmatpush1.xpose.msra.mxu0 0.0
    %2697 = vmatprep.subr.mxu0 0.0
    %2698 = vmatpush1.xpose.msra.mxu0 0.0
    %2699 = vmatprep.subr.mxu0 0.0
    %2700 = vmatpush1.xpose.msra.mxu0 0.0
    %2701 = vmatprep.subr.mxu0 0.0
    %2702 = vmatpush1.xpose.msra.mxu0 0.0
    %2703 = vmatprep.subr.mxu0 0.0
    %2704 = vmatpush1.xpose.msra.mxu0 0.0
    %2705 = vmatprep.subr.mxu0 0.0
    %2706 = vmatpush1.xpose.msra.mxu0 0.0
    %2707 = vmatprep.subr.mxu0 0.0
    %2708 = vmatpush1.xpose.msra.mxu0 0.0
    %2709 = vmatprep.subr.mxu0 0.0
    %2710 = vmatpush1.xpose.msra.mxu0 0.0
    %2711 = vmatprep.subr.mxu0 0.0
    %2712 = vmatpush1.xpose.msra.mxu0 0.0
    %2713 = vmatprep.mubr.f32.mxu0 0.0
    %2714 = vmatmul.mubr.f32.gmra.mrb[0].mxu0 %v2641
    %v2715 = vpop.f32.mrb[0].mxu0
    %v2716 = vadd.f32 %v280, %v2715
    %v2717 = vpop.f32.mrb[0].mxu0
    %2718 = vmatprep.mubr.f32.mxu0 0.0
    %2719 = vmatmul.mubr.f32.gmra.mrb[0].mxu0 %v2643
    %v2720 = vpop.f32.mrb[0].mxu0
    %v2721 = vadd.f32 %v281, %v2720
    %v2722 = vpop.f32.mrb[0].mxu0
    %2723 = vdwg.mxu0
    %v2724 = vsel %vm101, %v2716, -inf
    %2725 = vmax.xlane.f32.xlu0 %v2724
    %v2726 = vpop.xlane.xlu0 %2725
    %v2727 = vsel %vm101, %v2721, -inf
    %2728 = vmax.xlane.f32.xlu0 %v2727
    %v2729 = vpop.xlane.xlu0 %2728
    %v2730 = vsub.f32 %v2716, %v2726
    %v2731 = vsub.f32 %v2721, %v2729
    %v2732 = vmul.f32 %v2730, 1.442695
    %v2733 = vpow.pop %v2732
    %v2734 = vmul.f32 %v2731, 1.442695
    %v2735 = vpow.pop %v2734
    %v2736 = vsel %vm101, %v2733, 0.0
    %2737 = vadd.xlane.f32.xlu0 %v2736
    %v2738 = vpop.xlane.xlu0 %2737
    %v2739 = vsel %vm101, %v2735, 0.0
    %2740 = vadd.xlane.f32.xlu0 %v2739
    %v2741 = vpop.xlane.xlu0 %2740
    %v2742 = vrcp.pop %v2738
    %v2743 = vrcp.pop %v2741
    %v2744 = vmul.f32 %v2733, %v2742
    %v2745 = vmul.f32 %v2735, %v2743
    %2746 = vrot.lane.b32.xlu0 %v2027, 40
    %v2747 = vpop.permute.xlu0 %2746
    %2748 = vrot.lane.b32.xlu0 %v2032, 40
    %v2749 = vpop.permute.xlu0 %2748
    %v2753 = vsel %vm101, %v2744, 0
    %v2756 = vsel %vm101, %v2745, 0
    %2758 = vmatprep.subr.mxu0 0.0
    %2759 = vmatpush1.msra.mxu0 %v2747
    %2760 = vmatprep.subr.mxu0 0.0
    %2761 = vmatpush1.msra.mxu0 %v2749
    %2762 = vmatprep.subr.mxu0 0.0
    %2763 = vmatpush1.msra.mxu0 0.0
    %2764 = vmatprep.subr.mxu0 0.0
    %2765 = vmatpush1.msra.mxu0 0.0
    %2766 = vmatprep.subr.mxu0 0.0
    %2767 = vmatpush1.msra.mxu0 0.0
    %2768 = vmatprep.subr.mxu0 0.0
    %2769 = vmatpush1.msra.mxu0 0.0
    %2770 = vmatprep.subr.mxu0 0.0
    %2771 = vmatpush1.msra.mxu0 0.0
    %2772 = vmatprep.subr.mxu0 0.0
    %2773 = vmatpush1.msra.mxu0 0.0
    %2774 = vmatprep.subr.mxu0 0.0
    %2775 = vmatpush1.msra.mxu0 0.0
    %2776 = vmatprep.subr.mxu0 0.0
    %2777 = vmatpush1.msra.mxu0 0.0
    %2778 = vmatprep.subr.mxu0 0.0
    %2779 = vmatpush1.msra.mxu0 0.0
    %2780 = vmatprep.subr.mxu0 0.0
    %2781 = vmatpush1.msra.mxu0 0.0
    %2782 = vmatprep.subr.mxu0 0.0
    %2783 = vmatpush1.msra.mxu0 0.0
    %2784 = vmatprep.subr.mxu0 0.0
    %2785 = vmatpush1.msra.mxu0 0.0
    %2786 = vmatprep.subr.mxu0 0.0
    %2787 = vmatpush1.msra.mxu0 0.0
    %2788 = vmatprep.subr.mxu0 0.0
    %2789 = vmatpush1.msra.mxu0 0.0
    %2790 = vmatprep.subr.mxu0 0.0
    %2791 = vmatpush1.msra.mxu0 0.0
    %2792 = vmatprep.subr.mxu0 0.0
    %2793 = vmatpush1.msra.mxu0 0.0
    %2794 = vmatprep.subr.mxu0 0.0
    %2795 = vmatpush1.msra.mxu0 0.0
    %2796 = vmatprep.subr.mxu0 0.0
    %2797 = vmatpush1.msra.mxu0 0.0
    %2798 = vmatprep.subr.mxu0 0.0
    %2799 = vmatpush1.msra.mxu0 0.0
    %2800 = vmatprep.subr.mxu0 0.0
    %2801 = vmatpush1.msra.mxu0 0.0
    %2802 = vmatprep.subr.mxu0 0.0
    %2803 = vmatpush1.msra.mxu0 0.0
    %2804 = vmatprep.subr.mxu0 0.0
    %2805 = vmatpush1.msra.mxu0 0.0
    %2806 = vmatprep.subr.mxu0 0.0
    %2807 = vmatpush1.msra.mxu0 0.0
    %2808 = vmatprep.subr.mxu0 0.0
    %2809 = vmatpush1.msra.mxu0 0.0
    %2810 = vmatprep.subr.mxu0 0.0
    %2811 = vmatpush1.msra.mxu0 0.0
    %2812 = vmatprep.subr.mxu0 0.0
    %2813 = vmatpush1.msra.mxu0 0.0
    %2814 = vmatprep.subr.mxu0 0.0
    %2815 = vmatpush1.msra.mxu0 0.0
    %2816 = vmatprep.subr.mxu0 0.0
    %2817 = vmatpush1.msra.mxu0 0.0
    %2818 = vmatprep.subr.mxu0 0.0
    %2819 = vmatpush1.msra.mxu0 0.0
    %2820 = vmatprep.subr.mxu0 0.0
    %2821 = vmatpush1.msra.mxu0 0.0
    %2822 = vmatprep.mubr.f32.mxu0 0.0
    %2823 = vmatmul.mubr.f32.gmra.mrb[0].mxu0 %v2753
    %v2824 = vpop.f32.mrb[0].mxu0
    %v2825 = vadd.f32 0.0, %v2824
    %v2826 = vpop.f32.mrb[0].mxu0
    %2827 = vmatprep.mubr.f32.mxu0 0.0
    %2828 = vmatmul.mubr.f32.gmra.mrb[0].mxu0 %v2756
    %v2829 = vpop.f32.mrb[0].mxu0
    %v2830 = vadd.f32 0.0, %v2829
    %v2831 = vpop.f32.mrb[0].mxu0
    %2832 = vdwg.mxu0
    %2835 = vrot.lane.b32.xlu0 %v2425, 8
    %v2836 = vpop.permute.xlu0 %2835
    %2837 = vrot.lane.b32.xlu0 %v2430, 8
    %v2838 = vpop.permute.xlu0 %2837
    %2843 = vrot.lane.b32.xlu0 %v2625, 16
    %v2844 = vpop.permute.xlu0 %2843
    %2845 = vrot.lane.b32.xlu0 %v2630, 16
    %v2846 = vpop.permute.xlu0 %2845
    %2851 = vrot.lane.b32.xlu0 %v2825, 24
    %v2852 = vpop.permute.xlu0 %2851
    %2853 = vrot.lane.b32.xlu0 %v2830, 24
    %v2854 = vpop.permute.xlu0 %2853
    %v2857 = vsel %vm699, %v2225, %v2836
    %v2858 = vsel %vm699, %v2230, %v2838
    %v2859 = vsel %vm101, %v2857, %v2844
    %v2860 = vsel %vm101, %v2858, %v2846
    %v2861 = vsel %vm1520, %v2859, %v2852
    %v2862 = vsel %vm1520, %v2860, %v2854
    %2867 = vrot.lane.b32.xlu0 %v1945, 32
    %v2868 = vpop.permute.xlu0 %2867
    %2869 = vrot.lane.b32.xlu0 %v1946, 32
    %v2870 = vpop.permute.xlu0 %2869
    %2871 = vrot.lane.b32.xlu0 %v1947, 32
    %v2872 = vpop.permute.xlu0 %2871
    %2873 = vrot.lane.b32.xlu0 %v1948, 32
    %v2874 = vpop.permute.xlu0 %2873
    %2880 = vrot.lane.b32.xlu0 %v1953, 32
    %v2881 = vpop.permute.xlu0 %2880
    %v2884 = vsel %vm183, %v2861, 0
    %v2887 = vsel %vm183, %v2862, 0
    %2889 = vmatprep.subr.mxu0 0.0
    %2890 = vmatpush1.msra.mxu0 %v2868
    %2891 = vmatprep.subr.mxu0 0.0
    %2892 = vmatpush1.msra.mxu0 %v2870
    %2893 = vmatprep.subr.mxu0 0.0
    %2894 = vmatpush1.msra.mxu0 %v2872
    %2895 = vmatprep.subr.mxu0 0.0
    %2896 = vmatpush1.msra.mxu0 %v2874
    %2897 = vmatprep.subr.mxu0 0.0
    %2898 = vmatpush1.msra.mxu0 0.0
    %2899 = vmatprep.subr.mxu0 0.0
    %2900 = vmatpush1.msra.mxu0 0.0
    %2901 = vmatprep.subr.mxu0 0.0
    %2902 = vmatpush1.msra.mxu0 0.0
    %2903 = vmatprep.subr.mxu0 0.0
    %2904 = vmatpush1.msra.mxu0 0.0
    %2905 = vmatprep.subr.mxu0 0.0
    %2906 = vmatpush1.msra.mxu0 0.0
    %2907 = vmatprep.subr.mxu0 0.0
    %2908 = vmatpush1.msra.mxu0 0.0
    %2909 = vmatprep.subr.mxu0 0.0
    %2910 = vmatpush1.msra.mxu0 0.0
    %2911 = vmatprep.subr.mxu0 0.0
    %2912 = vmatpush1.msra.mxu0 0.0
    %2913 = vmatprep.subr.mxu0 0.0
    %2914 = vmatpush1.msra.mxu0 0.0
    %2915 = vmatprep.subr.mxu0 0.0
    %2916 = vmatpush1.msra.mxu0 0.0
    %2917 = vmatprep.subr.mxu0 0.0
    %2918 = vmatpush1.msra.mxu0 0.0
    %2919 = vmatprep.subr.mxu0 0.0
    %2920 = vmatpush1.msra.mxu0 0.0
    %2921 = vmatprep.subr.mxu0 0.0
    %2922 = vmatpush1.msra.mxu0 0.0
    %2923 = vmatprep.subr.mxu0 0.0
    %2924 = vmatpush1.msra.mxu0 0.0
    %2925 = vmatprep.subr.mxu0 0.0
    %2926 = vmatpush1.msra.mxu0 0.0
    %2927 = vmatprep.subr.mxu0 0.0
    %2928 = vmatpush1.msra.mxu0 0.0
    %2929 = vmatprep.subr.mxu0 0.0
    %2930 = vmatpush1.msra.mxu0 0.0
    %2931 = vmatprep.subr.mxu0 0.0
    %2932 = vmatpush1.msra.mxu0 0.0
    %2933 = vmatprep.subr.mxu0 0.0
    %2934 = vmatpush1.msra.mxu0 0.0
    %2935 = vmatprep.subr.mxu0 0.0
    %2936 = vmatpush1.msra.mxu0 0.0
    %2937 = vmatprep.subr.mxu0 0.0
    %2938 = vmatpush1.msra.mxu0 0.0
    %2939 = vmatprep.subr.mxu0 0.0
    %2940 = vmatpush1.msra.mxu0 0.0
    %2941 = vmatprep.subr.mxu0 0.0
    %2942 = vmatpush1.msra.mxu0 0.0
    %2943 = vmatprep.subr.mxu0 0.0
    %2944 = vmatpush1.msra.mxu0 0.0
    %2945 = vmatprep.subr.mxu0 0.0
    %2946 = vmatpush1.msra.mxu0 0.0
    %2947 = vmatprep.subr.mxu0 0.0
    %2948 = vmatpush1.msra.mxu0 0.0
    %2949 = vmatprep.subr.mxu0 0.0
    %2950 = vmatpush1.msra.mxu0 0.0
    %2951 = vmatprep.subr.mxu0 0.0
    %2952 = vmatpush1.msra.mxu0 0.0
    %2953 = vmatprep.mubr.f32.mxu0 0.0
    %2954 = vmatmul.mubr.f32.gmra.mrb[0].mxu0 %v2884
    %v2955 = vpop.f32.mrb[0].mxu0
    %v2956 = vadd.f32 %v2881, %v2955
    %v2957 = vpop.f32.mrb[0].mxu0
    %2958 = vmatprep.mubr.f32.mxu0 0.0
    %2959 = vmatmul.mubr.f32.gmra.mrb[0].mxu0 %v2887
    %v2960 = vpop.f32.mrb[0].mxu0
    %v2961 = vadd.f32 %v2881, %v2960
    %v2962 = vpop.f32.mrb[0].mxu0
    %2963 = vdwg.mxu0
    %v2964 = vadd.f32 %v1943, %v2956
    %v2965 = vadd.f32 %v1944, %v2961
    %v2966 = vld [vmem:[#allocation2 + $0x149] sm:$0x1]
    %v2967 = vsel %vm183, %v2964, 0.0
    %2968 = vadd.xlane.f32.xlu0 %v2967
    %v2969 = vpop.xlane.xlu0 %2968
    %v2970 = vsel %vm183, %v2965, 0.0
    %2971 = vadd.xlane.f32.xlu0 %v2970
    %v2972 = vpop.xlane.xlu0 %2971
    %v2973 = vmul.f32 %v2969, %v384
    %v2974 = vmul.f32 %v2972, %v384
    %v2975 = vmul.f32 %v2964, %v2964
    %v2976 = vmul.f32 %v2965, %v2965
    %v2977 = vsel %vm183, %v2975, 0.0
    %2978 = vadd.xlane.f32.xlu0 %v2977
    %v2979 = vpop.xlane.xlu0 %2978
    %v2980 = vsel %vm183, %v2976, 0.0
    %2981 = vadd.xlane.f32.xlu0 %v2980
    %v2982 = vpop.xlane.xlu0 %2981
    %v2983 = vmul.f32 %v2979, %v384
    %v2984 = vmul.f32 %v2982, %v384
    %v2985 = vmul.f32 %v2973, %v2973
    %v2986 = vmul.f32 %v2974, %v2974
    %v2987 = vsub.f32 %v2983, %v2985
    %v2988 = vsub.f32 %v2984, %v2986
    %v2989 = vsub.f32 %v2964, %v2973
    %v2990 = vsub.f32 %v2965, %v2974
    %v2991 = vadd.f32 %v2987, 1e-05
    %v2992 = vadd.f32 %v2988, 1e-05
    %v2993 = vrsqrt.pop %v2991
    %v2994 = vrsqrt.pop %v2992
    %v2995 = vmul.f32 %v2989, %v2993
    %v2996 = vmul.f32 %v2990, %v2994
    %2997 = vrot.lane.b32.xlu0 %v1762, 32
    %v2998 = vpop.permute.xlu0 %2997
    %v3000 = vmul.f32 %v2995, %v2998
    %v3001 = vmul.f32 %v2996, %v2998
    %v3002 = vlaneseq
    %v3003 = vshrl.u32 %v3002, 7
    %v3004 = vsub.s32 0, %v3003
    %v3005 = vrot.slane %v2966, %v3004
    %v3006 = vadd.f32 %v3000, %v3005
    %v3007 = vadd.f32 %v3001, %v3005
    %v3008 = vld [vmem:[#allocation2 + $0xe0] sm:$0xff]
    %v3009 = vld [vmem:[#allocation2 + $0xe8] sm:$0xff]
    %v3010 = vld [vmem:[#allocation2 + $0xf0] sm:$0xff]
    %v3011 = vld [vmem:[#allocation2 + $0xf8] sm:$0xff]
    %v3012 = vld [vmem:[#allocation2 + $0x144] sm:$0x1]
    %v3013 = vlaneseq
    %v3014 = vshrl.u32 %v3013, 7
    %v3015 = vsub.s32 0, %v3014
    %v3016 = vrot.slane %v3012, %v3015
    %v3018 = vsel %vm183, %v3006, 0
    %v3021 = vsel %vm183, %v3007, 0
    %3023 = vmatprep.subr.mxu0 0.0
    %3024 = vmatpush1.msra.mxu0 %v3008
    %3025 = vmatprep.subr.mxu0 0.0
    %3026 = vmatpush1.msra.mxu0 %v3009
    %3027 = vmatprep.subr.mxu0 0.0
    %3028 = vmatpush1.msra.mxu0 %v3010
    %3029 = vmatprep.subr.mxu0 0.0
    %3030 = vmatpush1.msra.mxu0 %v3011
    %3031 = vmatprep.subr.mxu0 0.0
    %3032 = vmatpush1.msra.mxu0 0.0
    %3033 = vmatprep.subr.mxu0 0.0
    %3034 = vmatpush1.msra.mxu0 0.0
    %3035 = vmatprep.subr.mxu0 0.0
    %3036 = vmatpush1.msra.mxu0 0.0
    %3037 = vmatprep.subr.mxu0 0.0
    %3038 = vmatpush1.msra.mxu0 0.0
    %3039 = vmatprep.subr.mxu0 0.0
    %3040 = vmatpush1.msra.mxu0 0.0
    %3041 = vmatprep.subr.mxu0 0.0
    %3042 = vmatpush1.msra.mxu0 0.0
    %3043 = vmatprep.subr.mxu0 0.0
    %3044 = vmatpush1.msra.mxu0 0.0
    %3045 = vmatprep.subr.mxu0 0.0
    %3046 = vmatpush1.msra.mxu0 0.0
    %3047 = vmatprep.subr.mxu0 0.0
    %3048 = vmatpush1.msra.mxu0 0.0
    %3049 = vmatprep.subr.mxu0 0.0
    %3050 = vmatpush1.msra.mxu0 0.0
    %3051 = vmatprep.subr.mxu0 0.0
    %3052 = vmatpush1.msra.mxu0 0.0
    %3053 = vmatprep.subr.mxu0 0.0
    %3054 = vmatpush1.msra.mxu0 0.0
    %3055 = vmatprep.subr.mxu0 0.0
    %3056 = vmatpush1.msra.mxu0 0.0
    %3057 = vmatprep.subr.mxu0 0.0
    %3058 = vmatpush1.msra.mxu0 0.0
    %3059 = vmatprep.subr.mxu0 0.0
    %3060 = vmatpush1.msra.mxu0 0.0
    %3061 = vmatprep.subr.mxu0 0.0
    %3062 = vmatpush1.msra.mxu0 0.0
    %3063 = vmatprep.subr.mxu0 0.0
    %3064 = vmatpush1.msra.mxu0 0.0
    %3065 = vmatprep.subr.mxu0 0.0
    %3066 = vmatpush1.msra.mxu0 0.0
    %3067 = vmatprep.subr.mxu0 0.0
    %3068 = vmatpush1.msra.mxu0 0.0
    %3069 = vmatprep.subr.mxu0 0.0
    %3070 = vmatpush1.msra.mxu0 0.0
    %3071 = vmatprep.subr.mxu0 0.0
    %3072 = vmatpush1.msra.mxu0 0.0
    %3073 = vmatprep.subr.mxu0 0.0
    %3074 = vmatpush1.msra.mxu0 0.0
    %3075 = vmatprep.subr.mxu0 0.0
    %3076 = vmatpush1.msra.mxu0 0.0
    %3077 = vmatprep.subr.mxu0 0.0
    %3078 = vmatpush1.msra.mxu0 0.0
    %3079 = vmatprep.subr.mxu0 0.0
    %3080 = vmatpush1.msra.mxu0 0.0
    %3081 = vmatprep.subr.mxu0 0.0
    %3082 = vmatpush1.msra.mxu0 0.0
    %3083 = vmatprep.subr.mxu0 0.0
    %3084 = vmatpush1.msra.mxu0 0.0
    %3085 = vmatprep.subr.mxu0 0.0
    %3086 = vmatpush1.msra.mxu0 0.0
    %3087 = vmatprep.mubr.f32.mxu0 0.0
    %3088 = vmatmul.mubr.f32.gmra.mrb[0].mxu0 %v3018
    %v3089 = vpop.f32.mrb[0].mxu0
    %v3090 = vadd.f32 %v3016, %v3089
    %v3091 = vpop.f32.mrb[0].mxu0
    %3092 = vmatprep.mubr.f32.mxu0 0.0
    %3093 = vmatmul.mubr.f32.gmra.mrb[0].mxu0 %v3021
    %v3094 = vpop.f32.mrb[0].mxu0
    %v3095 = vadd.f32 %v3016, %v3094
    %v3096 = vpop.f32.mrb[0].mxu0
    %3097 = vdwg.mxu0
    %v3098 = vmax.f32 %v3090, 0.0
    %v3099 = vmax.f32 %v3095, 0.0
    %3100 = vrot.lane.b32.xlu0 %v282, 64
    %v3101 = vpop.permute.xlu0 %3100
    %3102 = vrot.lane.b32.xlu0 %v283, 64
    %v3103 = vpop.permute.xlu0 %3102
    %3104 = vrot.lane.b32.xlu0 %v284, 64
    %v3105 = vpop.permute.xlu0 %3104
    %3106 = vrot.lane.b32.xlu0 %v285, 64
    %v3107 = vpop.permute.xlu0 %3106
    %3108 = vrot.lane.b32.xlu0 %v286, 64
    %v3109 = vpop.permute.xlu0 %3108
    %3110 = vrot.lane.b32.xlu0 %v287, 64
    %v3111 = vpop.permute.xlu0 %3110
    %3112 = vrot.lane.b32.xlu0 %v288, 64
    %v3113 = vpop.permute.xlu0 %3112
    %3114 = vrot.lane.b32.xlu0 %v289, 64
    %v3115 = vpop.permute.xlu0 %3114
    %3116 = vrot.lane.b32.xlu0 %v290, 64
    %v3117 = vpop.permute.xlu0 %3116
    %3118 = vrot.lane.b32.xlu0 %v291, 64
    %v3119 = vpop.permute.xlu0 %3118
    %3120 = vrot.lane.b32.xlu0 %v292, 64
    %v3121 = vpop.permute.xlu0 %3120
    %3122 = vrot.lane.b32.xlu0 %v293, 64
    %v3123 = vpop.permute.xlu0 %3122
    %3124 = vrot.lane.b32.xlu0 %v294, 64
    %v3125 = vpop.permute.xlu0 %3124
    %3126 = vrot.lane.b32.xlu0 %v295, 64
    %v3127 = vpop.permute.xlu0 %3126
    %3128 = vrot.lane.b32.xlu0 %v296, 64
    %v3129 = vpop.permute.xlu0 %3128
    %3130 = vrot.lane.b32.xlu0 %v297, 64
    %v3131 = vpop.permute.xlu0 %3130
    %3149 = vrot.lane.b32.xlu0 %v3005, 96
    %v3150 = vpop.permute.xlu0 %3149
    %3152 = vmatprep.subr.mxu0 0.0
    %3153 = vmatpush1.msra.mxu0 %v3101
    %3154 = vmatprep.subr.mxu0 0.0
    %3155 = vmatpush1.msra.mxu0 %v3103
    %3156 = vmatprep.subr.mxu0 0.0
    %3157 = vmatpush1.msra.mxu0 %v3105
    %3158 = vmatprep.subr.mxu0 0.0
    %3159 = vmatpush1.msra.mxu0 %v3107
    %3160 = vmatprep.subr.mxu0 0.0
    %3161 = vmatpush1.msra.mxu0 %v3109
    %3162 = vmatprep.subr.mxu0 0.0
    %3163 = vmatpush1.msra.mxu0 %v3111
    %3164 = vmatprep.subr.mxu0 0.0
    %3165 = vmatpush1.msra.mxu0 %v3113
    %3166 = vmatprep.subr.mxu0 0.0
    %3167 = vmatpush1.msra.mxu0 %v3115
    %3168 = vmatprep.subr.mxu0 0.0
    %3169 = vmatpush1.msra.mxu0 %v3117
    %3170 = vmatprep.subr.mxu0 0.0
    %3171 = vmatpush1.msra.mxu0 %v3119
    %3172 = vmatprep.subr.mxu0 0.0
    %3173 = vmatpush1.msra.mxu0 %v3121
    %3174 = vmatprep.subr.mxu0 0.0
    %3175 = vmatpush1.msra.mxu0 %v3123
    %3176 = vmatprep.subr.mxu0 0.0
    %3177 = vmatpush1.msra.mxu0 %v3125
    %3178 = vmatprep.subr.mxu0 0.0
    %3179 = vmatpush1.msra.mxu0 %v3127
    %3180 = vmatprep.subr.mxu0 0.0
    %3181 = vmatpush1.msra.mxu0 %v3129
    %3182 = vmatprep.subr.mxu0 0.0
    %3183 = vmatpush1.msra.mxu0 %v3131
    %3184 = vmatprep.subr.mxu0 0.0
    %3185 = vmatpush1.msra.mxu0 0.0
    %3186 = vmatprep.subr.mxu0 0.0
    %3187 = vmatpush1.msra.mxu0 0.0
    %3188 = vmatprep.subr.mxu0 0.0
    %3189 = vmatpush1.msra.mxu0 0.0
    %3190 = vmatprep.subr.mxu0 0.0
    %3191 = vmatpush1.msra.mxu0 0.0
    %3192 = vmatprep.subr.mxu0 0.0
    %3193 = vmatpush1.msra.mxu0 0.0
    %3194 = vmatprep.subr.mxu0 0.0
    %3195 = vmatpush1.msra.mxu0 0.0
    %3196 = vmatprep.subr.mxu0 0.0
    %3197 = vmatpush1.msra.mxu0 0.0
    %3198 = vmatprep.subr.mxu0 0.0
    %3199 = vmatpush1.msra.mxu0 0.0
    %3200 = vmatprep.subr.mxu0 0.0
    %3201 = vmatpush1.msra.mxu0 0.0
    %3202 = vmatprep.subr.mxu0 0.0
    %3203 = vmatpush1.msra.mxu0 0.0
    %3204 = vmatprep.subr.mxu0 0.0
    %3205 = vmatpush1.msra.mxu0 0.0
    %3206 = vmatprep.subr.mxu0 0.0
    %3207 = vmatpush1.msra.mxu0 0.0
    %3208 = vmatprep.subr.mxu0 0.0
    %3209 = vmatpush1.msra.mxu0 0.0
    %3210 = vmatprep.subr.mxu0 0.0
    %3211 = vmatpush1.msra.mxu0 0.0
    %3212 = vmatprep.subr.mxu0 0.0
    %3213 = vmatpush1.msra.mxu0 0.0
    %3214 = vmatprep.subr.mxu0 0.0
    %3215 = vmatpush1.msra.mxu0 0.0
    %3216 = vmatprep.mubr.f32.mxu0 0.0
    %3217 = vmatmul.mubr.f32.gmra.mrb[0].mxu0 %v3098
    %v3218 = vpop.f32.mrb[0].mxu0
    %v3219 = vadd.f32 %v3150, %v3218
    %v3220 = vpop.f32.mrb[0].mxu0
    %3221 = vmatprep.mubr.f32.mxu0 0.0
    %3222 = vmatmul.mubr.f32.gmra.mrb[0].mxu0 %v3099
    %v3223 = vpop.f32.mrb[0].mxu0
    %v3224 = vadd.f32 %v3150, %v3223
    %v3225 = vpop.f32.mrb[0].mxu0
    %3226 = vdwg.mxu0
    %v3227 = vadd.f32 %v3006, %v3219
    %v3228 = vadd.f32 %v3007, %v3224
    %v3229 = vsel %vm183, %v3227, 0.0
    %3230 = vadd.xlane.f32.xlu0 %v3229
    %v3231 = vpop.xlane.xlu0 %3230
    %v3232 = vsel %vm183, %v3228, 0.0
    %3233 = vadd.xlane.f32.xlu0 %v3232
    %v3234 = vpop.xlane.xlu0 %3233
    %v3235 = vmul.f32 %v3231, %v384
    %v3236 = vmul.f32 %v3234, %v384
    %v3237 = vmul.f32 %v3227, %v3227
    %v3238 = vmul.f32 %v3228, %v3228
    %v3239 = vsel %vm183, %v3237, 0.0
    %3240 = vadd.xlane.f32.xlu0 %v3239
    %v3241 = vpop.xlane.xlu0 %3240
    %v3242 = vsel %vm183, %v3238, 0.0
    %3243 = vadd.xlane.f32.xlu0 %v3242
    %v3244 = vpop.xlane.xlu0 %3243
    %v3245 = vmul.f32 %v3241, %v384
    %v3246 = vmul.f32 %v3244, %v384
    %v3247 = vmul.f32 %v3235, %v3235
    %v3248 = vmul.f32 %v3236, %v3236
    %v3249 = vsub.f32 %v3245, %v3247
    %v3250 = vsub.f32 %v3246, %v3248
    %v3251 = vsub.f32 %v3227, %v3235
    %v3252 = vsub.f32 %v3228, %v3236
    %v3253 = vadd.f32 %v3249, 1e-05
    %v3254 = vadd.f32 %v3250, 1e-05
    %v3255 = vrsqrt.pop %v3253
    %v3256 = vrsqrt.pop %v3254
    %v3257 = vmul.f32 %v3251, %v3255
    %v3258 = vmul.f32 %v3252, %v3256
    %3259 = vrot.lane.b32.xlu0 %v3005, 64
    %v3260 = vpop.permute.xlu0 %3259
    %v3262 = vmul.f32 %v3257, %v3260
    %v3263 = vmul.f32 %v3258, %v3260
    %3264 = vrot.lane.b32.xlu0 %v3005, 32
    %v3265 = vpop.permute.xlu0 %3264
    %v3267 = vadd.f32 %v3262, %v3265
    %v3268 = vadd.f32 %v3263, %v3265
    %v3269 = vld [vmem:[#allocation2] sm:$0xff]
    %v3270 = vld [vmem:[#allocation2 + $0x8] sm:$0xff]
    %v3271 = vld [vmem:[#allocation2 + $0x10] sm:$0xff]
    %v3272 = vld [vmem:[#allocation2 + $0x18] sm:$0xff]
    %v3273 = vld [vmem:[#allocation2 + $0x14a] sm:$0x1]
    %v3274 = vlaneseq
    %v3275 = vshrl.u32 %v3274, 7
    %v3276 = vsub.s32 0, %v3275
    %v3277 = vrot.slane %v3273, %v3276
    %3282 = vrot.lane.b32.xlu0 %v3269, 32
    %v3283 = vpop.permute.xlu0 %3282
    %3284 = vrot.lane.b32.xlu0 %v3270, 32
    %v3285 = vpop.permute.xlu0 %3284
    %3286 = vrot.lane.b32.xlu0 %v3271, 32
    %v3287 = vpop.permute.xlu0 %3286
    %3288 = vrot.lane.b32.xlu0 %v3272, 32
    %v3289 = vpop.permute.xlu0 %3288
    %v3295 = vsel %vm183, %v3267, 0
    %v3298 = vsel %vm183, %v3268, 0
    %3300 = vmatprep.subr.mxu0 0.0
    %3301 = vmatpush1.msra.mxu0 %v3283
    %3302 = vmatprep.subr.mxu0 0.0
    %3303 = vmatpush1.msra.mxu0 %v3285
    %3304 = vmatprep.subr.mxu0 0.0
    %3305 = vmatpush1.msra.mxu0 %v3287
    %3306 = vmatprep.subr.mxu0 0.0
    %3307 = vmatpush1.msra.mxu0 %v3289
    %3308 = vmatprep.subr.mxu0 0.0
    %3309 = vmatpush1.msra.mxu0 0.0
    %3310 = vmatprep.subr.mxu0 0.0
    %3311 = vmatpush1.msra.mxu0 0.0
    %3312 = vmatprep.subr.mxu0 0.0
    %3313 = vmatpush1.msra.mxu0 0.0
    %3314 = vmatprep.subr.mxu0 0.0
    %3315 = vmatpush1.msra.mxu0 0.0
    %3316 = vmatprep.subr.mxu0 0.0
    %3317 = vmatpush1.msra.mxu0 0.0
    %3318 = vmatprep.subr.mxu0 0.0
    %3319 = vmatpush1.msra.mxu0 0.0
    %3320 = vmatprep.subr.mxu0 0.0
    %3321 = vmatpush1.msra.mxu0 0.0
    %3322 = vmatprep.subr.mxu0 0.0
    %3323 = vmatpush1.msra.mxu0 0.0
    %3324 = vmatprep.subr.mxu0 0.0
    %3325 = vmatpush1.msra.mxu0 0.0
    %3326 = vmatprep.subr.mxu0 0.0
    %3327 = vmatpush1.msra.mxu0 0.0
    %3328 = vmatprep.subr.mxu0 0.0
    %3329 = vmatpush1.msra.mxu0 0.0
    %3330 = vmatprep.subr.mxu0 0.0
    %3331 = vmatpush1.msra.mxu0 0.0
    %3332 = vmatprep.subr.mxu0 0.0
    %3333 = vmatpush1.msra.mxu0 0.0
    %3334 = vmatprep.subr.mxu0 0.0
    %3335 = vmatpush1.msra.mxu0 0.0
    %3336 = vmatprep.subr.mxu0 0.0
    %3337 = vmatpush1.msra.mxu0 0.0
    %3338 = vmatprep.subr.mxu0 0.0
    %3339 = vmatpush1.msra.mxu0 0.0
    %3340 = vmatprep.subr.mxu0 0.0
    %3341 = vmatpush1.msra.mxu0 0.0
    %3342 = vmatprep.subr.mxu0 0.0
    %3343 = vmatpush1.msra.mxu0 0.0
    %3344 = vmatprep.subr.mxu0 0.0
    %3345 = vmatpush1.msra.mxu0 0.0
    %3346 = vmatprep.subr.mxu0 0.0
    %3347 = vmatpush1.msra.mxu0 0.0
    %3348 = vmatprep.subr.mxu0 0.0
    %3349 = vmatpush1.msra.mxu0 0.0
    %3350 = vmatprep.subr.mxu0 0.0
    %3351 = vmatpush1.msra.mxu0 0.0
    %3352 = vmatprep.subr.mxu0 0.0
    %3353 = vmatpush1.msra.mxu0 0.0
    %3354 = vmatprep.subr.mxu0 0.0
    %3355 = vmatpush1.msra.mxu0 0.0
    %3356 = vmatprep.subr.mxu0 0.0
    %3357 = vmatpush1.msra.mxu0 0.0
    %3358 = vmatprep.subr.mxu0 0.0
    %3359 = vmatpush1.msra.mxu0 0.0
    %3360 = vmatprep.subr.mxu0 0.0
    %3361 = vmatpush1.msra.mxu0 0.0
    %3362 = vmatprep.subr.mxu0 0.0
    %3363 = vmatpush1.msra.mxu0 0.0
    %3364 = vmatprep.mubr.f32.mxu0 0.0
    %3365 = vmatmul.mubr.f32.gmra.mrb[0].mxu0 %v3295
    %v3366 = vpop.f32.mrb[0].mxu0
    %v3367 = vadd.f32 %v3277, %v3366
    %v3368 = vpop.f32.mrb[0].mxu0
    %3369 = vmatprep.mubr.f32.mxu0 0.0
    %3370 = vmatmul.mubr.f32.gmra.mrb[0].mxu0 %v3298
    %v3371 = vpop.f32.mrb[0].mxu0
    %v3372 = vadd.f32 %v3277, %v3371
    %v3373 = vpop.f32.mrb[0].mxu0
    %3374 = vdwg.mxu0
    %v3375 = vsel %vm101, %v3367, 0.0
    %3376 = vadd.xlane.f32.xlu0 %v3375
    %v3377 = vpop.xlane.xlu0 %3376
    %v3378 = vsel %vm101, %v3372, 0.0
    %3379 = vadd.xlane.f32.xlu0 %v3378
    %v3380 = vpop.xlane.xlu0 %3379
    %v3381 = vrcp.pop 16.0
    %v3382 = vmul.f32 %v3377, %v3381
    %v3383 = vmul.f32 %v3380, %v3381
    %v3384 = vmul.f32 %v3367, %v3367
    %v3385 = vmul.f32 %v3372, %v3372
    %v3386 = vsel %vm101, %v3384, 0.0
    %3387 = vadd.xlane.f32.xlu0 %v3386
    %v3388 = vpop.xlane.xlu0 %3387
    %v3389 = vsel %vm101, %v3385, 0.0
    %3390 = vadd.xlane.f32.xlu0 %v3389
    %v3391 = vpop.xlane.xlu0 %3390
    %v3392 = vmul.f32 %v3388, %v3381
    %v3393 = vmul.f32 %v3391, %v3381
    %v3394 = vmul.f32 %v3382, %v3382
    %v3395 = vmul.f32 %v3383, %v3383
    %v3396 = vsub.f32 %v3392, %v3394
    %v3397 = vsub.f32 %v3393, %v3395
    %v3398 = vsub.f32 %v3367, %v3382
    %v3399 = vsub.f32 %v3372, %v3383
    %v3400 = vadd.f32 %v3396, 1e-05
    %v3401 = vadd.f32 %v3397, 1e-05
    %v3402 = vrsqrt.pop %v3400
    %v3403 = vrsqrt.pop %v3401
    %v3404 = vmul.f32 %v3398, %v3402
    %v3405 = vmul.f32 %v3399, %v3403
    %3407 = vrot.lane.b32.xlu0 %v3277, 96
    %v3408 = vpop.permute.xlu0 %3407
    %v3410 = vmul.f32 %v3404, %v3408
    %v3411 = vmul.f32 %v3405, %v3408
    %3412 = vrot.lane.b32.xlu0 %v3277, 64
    %v3413 = vpop.permute.xlu0 %3412
    %v3415 = vadd.f32 %v3410, %v3413
    %v3416 = vadd.f32 %v3411, %v3413
    %v3417 = vmax.f32 %v3415, 0.0
    %v3418 = vmax.f32 %v3416, 0.0
    %v3419 = vld [vmem:[#allocation2 + $0x100] sm:$0xff]
    %v3420 = vld [vmem:[#allocation2 + $0x108] sm:$0xff]
    %v3421 = vld [vmem:[#allocation2 + $0x145] sm:$0x1]
    %v3422 = vlaneseq
    %v3423 = vshrl.u32 %v3422, 7
    %v3424 = vsub.s32 0, %v3423
    %v3425 = vrot.slane %v3421, %v3424
    %v3427 = vsel %vm101, %v3417, 0
    %v3430 = vsel %vm101, %v3418, 0
    %3432 = vmatprep.subr.mxu0 0.0
    %3433 = vmatpush1.msra.mxu0 %v3419
    %3434 = vmatprep.subr.mxu0 0.0
    %3435 = vmatpush1.msra.mxu0 %v3420
    %3436 = vmatprep.subr.mxu0 0.0
    %3437 = vmatpush1.msra.mxu0 0.0
    %3438 = vmatprep.subr.mxu0 0.0
    %3439 = vmatpush1.msra.mxu0 0.0
    %3440 = vmatprep.subr.mxu0 0.0
    %3441 = vmatpush1.msra.mxu0 0.0
    %3442 = vmatprep.subr.mxu0 0.0
    %3443 = vmatpush1.msra.mxu0 0.0
    %3444 = vmatprep.subr.mxu0 0.0
    %3445 = vmatpush1.msra.mxu0 0.0
    %3446 = vmatprep.subr.mxu0 0.0
    %3447 = vmatpush1.msra.mxu0 0.0
    %3448 = vmatprep.subr.mxu0 0.0
    %3449 = vmatpush1.msra.mxu0 0.0
    %3450 = vmatprep.subr.mxu0 0.0
    %3451 = vmatpush1.msra.mxu0 0.0
    %3452 = vmatprep.subr.mxu0 0.0
    %3453 = vmatpush1.msra.mxu0 0.0
    %3454 = vmatprep.subr.mxu0 0.0
    %3455 = vmatpush1.msra.mxu0 0.0
    %3456 = vmatprep.subr.mxu0 0.0
    %3457 = vmatpush1.msra.mxu0 0.0
    %3458 = vmatprep.subr.mxu0 0.0
    %3459 = vmatpush1.msra.mxu0 0.0
    %3460 = vmatprep.subr.mxu0 0.0
    %3461 = vmatpush1.msra.mxu0 0.0
    %3462 = vmatprep.subr.mxu0 0.0
    %3463 = vmatpush1.msra.mxu0 0.0
    %3464 = vmatprep.subr.mxu0 0.0
    %3465 = vmatpush1.msra.mxu0 0.0
    %3466 = vmatprep.subr.mxu0 0.0
    %3467 = vmatpush1.msra.mxu0 0.0
    %3468 = vmatprep.subr.mxu0 0.0
    %3469 = vmatpush1.msra.mxu0 0.0
    %3470 = vmatprep.subr.mxu0 0.0
    %3471 = vmatpush1.msra.mxu0 0.0
    %3472 = vmatprep.subr.mxu0 0.0
    %3473 = vmatpush1.msra.mxu0 0.0
    %3474 = vmatprep.subr.mxu0 0.0
    %3475 = vmatpush1.msra.mxu0 0.0
    %3476 = vmatprep.subr.mxu0 0.0
    %3477 = vmatpush1.msra.mxu0 0.0
    %3478 = vmatprep.subr.mxu0 0.0
    %3479 = vmatpush1.msra.mxu0 0.0
    %3480 = vmatprep.subr.mxu0 0.0
    %3481 = vmatpush1.msra.mxu0 0.0
    %3482 = vmatprep.subr.mxu0 0.0
    %3483 = vmatpush1.msra.mxu0 0.0
    %3484 = vmatprep.subr.mxu0 0.0
    %3485 = vmatpush1.msra.mxu0 0.0
    %3486 = vmatprep.subr.mxu0 0.0
    %3487 = vmatpush1.msra.mxu0 0.0
    %3488 = vmatprep.subr.mxu0 0.0
    %3489 = vmatpush1.msra.mxu0 0.0
    %3490 = vmatprep.subr.mxu0 0.0
    %3491 = vmatpush1.msra.mxu0 0.0
    %3492 = vmatprep.subr.mxu0 0.0
    %3493 = vmatpush1.msra.mxu0 0.0
    %3494 = vmatprep.subr.mxu0 0.0
    %3495 = vmatpush1.msra.mxu0 0.0
    %3496 = vmatprep.mubr.f32.mxu0 0.0
    %3497 = vmatmul.mubr.f32.gmra.mrb[0].mxu0 %v3427
    %v3498 = vpop.f32.mrb[0].mxu0
    %v3499 = vadd.f32 %v3425, %v3498
    %v3500 = vpop.f32.mrb[0].mxu0
    %3501 = vmatprep.mubr.f32.mxu0 0.0
    %3502 = vmatmul.mubr.f32.gmra.mrb[0].mxu0 %v3430
    %v3503 = vpop.f32.mrb[0].mxu0
    %v3504 = vadd.f32 %v3425, %v3503
    %v3505 = vpop.f32.mrb[0].mxu0
    %3506 = vdwg.mxu0
    %3507 = vst [vmem:[#allocation5] sm:$0xff] %v3499
    %3508 = vst [vmem:[#allocation5 + $0x8] sm:$0xff] %v3504
    // Predicated region
    $region18: #{tpu_custom_call.1} parent=1 // pred_check
      _
    $region19: #{tpu_custom_call.1} parent=1 // pred_check_branch
      %3510 = sbr.rel (0) target = $region21
    $region20: #{tpu_custom_call.1} parent=1 // pred_region
      %s3512 = ssub.s32 256, 256
      %3513 = vsyncadd [#allocation4], %s3512
      %s3514 = sshll.u32 [#allocation5], 4
      %s3515 = int_to_ptr.vmem [resolvable:$true] %s3514
      %3520 = dma.vmem_to_hbm [thread:$0]  %s3515, 256, %s3, [#allocation4], 128, 128, 8
    $region21: #{tpu_custom_call.1} parent=1 // pred_fallthru
      _
    // Predicated region
    $region22: #{tpu_custom_call.1} parent=1 // pred_check
      _
    $region23: #{tpu_custom_call.1} parent=1 // pred_check_branch
      %3522 = sbr.rel (0) target = $region25
    $region24: #{tpu_custom_call.1} parent=1 // pred_region
      %3523 = dma.done [#allocation4], 256
    $region25: #{tpu_custom_call.1} parent=1 // pred_fallthru
      _
    %3524 = vsyncpa [#allocation3], 1
    %3525 = vsyncpa [#allocation4], 1

</llo_original>
